<compile_context>
chip_gen: v6e
topology: v6e:2x2x1
jax: 0.10.0
libtpu: 0.0.40
codegen_flags: <defaults>
</compile_context>

<pallas_src>
import numpy as np

import jax
import jax.numpy as jnp
from jax import lax
from jax.experimental import pallas as pl
from jax.experimental.pallas import tpu as pltpu


# ----------------------------- Pallas kernel -------------------------------

def _make_fused_generator_kernel(num_conv_layers):
    """Fused forward: linear+relu, then num_conv_layers x (matmul+bias+act).

    refs layout: (z, lin_w_t, lin_b, m_0, b_0, ..., m_{L-1}, b_{L-1}, out)
      z:        (tile_n, z_dim)
      lin_w_t:  (z_dim, C0*H0*W0)        lin_b: (1, C0*H0*W0)
      m_l:      (Cin*H*W, Cout*OH*OW)    b_l:   (1, Cout*OH*OW)
      out:      (tile_n, C_last*OH_last*OW_last)   (NCHW-flattened)
    """
    def kernel(*refs):
        z_ref = refs[0]
        o_ref = refs[-1]
        p = refs[1:-1]

        x = jnp.dot(z_ref[...], p[0][...],
                    precision=lax.Precision.HIGHEST,
                    preferred_element_type=jnp.float32) + p[1][...]
        x = jnp.maximum(x, 0.0)

        for layer in range(num_conv_layers):
            m_ref = p[2 + 2 * layer]
            b_ref = p[3 + 2 * layer]
            x = jnp.dot(x, m_ref[...],
                        precision=lax.Precision.HIGHEST,
                        preferred_element_type=jnp.float32) + b_ref[...]
            if layer != num_conv_layers - 1:
                x = jnp.maximum(x, 0.0)        # VPU
            else:
                x = jnp.tanh(x)                # EUP (free bundle slot)

        o_ref[...] = x.astype(o_ref.dtype)

    return kernel


# ------------------------------ model glue ---------------------------------

def build_conv_configs(kernel_size, network_levels, scale_factor=2):
    """Reproduces G.build_model padding / output_padding / stride math."""
    cfgs = []
    for layer_num in range(network_levels):
        dilation = 1
        op0 = 1 if (dilation > 1 or scale_factor == 1) else 0
        padding = tuple(((k - 1) * dilation + op0 - 1) // 2 - (scale_factor - 1) // 2
                        for k in kernel_size)
        output_padding = (0, 1) if layer_num == network_levels - 1 else (0, 0)
        cfgs.append((padding, output_padding, scale_factor))
    return cfgs


def _convtranspose2d_as_matrix(w_pt, in_hw, stride, padding, output_padding):
    """Dense matrix of ConvTranspose2d (built ONCE at init, outside forward).

    w_pt: PyTorch weight (Cin, Cout, kH, kW).
    Returns M of shape (Cin*H*W, Cout*OH*OW) s.t. y_flat = x_flat @ M with both
    sides NCHW-row-major flattened, plus (OH, OW).
    """
    cin, cout, kh_sz, kw_sz = w_pt.shape
    h, wdim = in_hw
    ph, pw = padding
    oph, opw = output_padding
    oh = (h - 1) * stride - 2 * ph + kh_sz + oph
    ow = (wdim - 1) * stride - 2 * pw + kw_sz + opw

    w_np = np.asarray(w_pt)
    m = np.zeros((cin * h * wdim, cout * oh * ow), np.float32)
    for ci in range(cin):
        for ih in range(h):
            for iw in range(wdim):
                row = (ci * h + ih) * wdim + iw
                for kh in range(kh_sz):
                    o_h = ih * stride - ph + kh
                    if o_h < 0 or o_h >= oh:
                        continue
                    for kw in range(kw_sz):
                        o_w = iw * stride - pw + kw
                        if o_w < 0 or o_w >= ow:
                            continue
                        for co in range(cout):
                            col = (co * oh + o_h) * ow + o_w
                            m[row, col] += w_np[ci, co, kh, kw]
    return jnp.asarray(m), (oh, ow)


def init_generator_params(key, *, z_dim, channel_list, network_levels,
                          lower_resolution, kernel_size):
    """Raw (PyTorch-layout) parameters."""
    h0, w0 = lower_resolution
    c0 = channel_list[0]
    input_size = h0 * w0 * c0
    keys = jax.random.split(key, 2 + 2 * network_levels)
    params = {}
    lin_std = (2.0 / z_dim) ** 0.5                        # kaiming_normal-like
    lin_w = lin_std * jax.random.normal(keys[0], (input_size, z_dim), jnp.float32)
    params["lin_w_t"] = lin_w.T                           # (z_dim, input_size)
    params["lin_b"] = 0.01 * jax.random.normal(keys[1], (1, input_size), jnp.float32)
    conv_ws, conv_bs = [], []
    for layer in range(network_levels):
        cin = channel_list[0] if layer == 0 else channel_list[layer]
        cout = channel_list[layer + 1]
        kh_sz, kw_sz = kernel_size
        std = (2.0 / (cin * kh_sz * kw_sz)) ** 0.5
        conv_ws.append(std * jax.random.normal(keys[2 + 2 * layer],
                                               (cin, cout, kh_sz, kw_sz), jnp.float32))
        conv_bs.append(0.01 * jax.random.normal(keys[3 + 2 * layer], (cout,), jnp.float32))
    params["conv_w"] = conv_ws
    params["conv_b"] = conv_bs
    return params


def preprocess_params(params, *, channel_list, network_levels,
                      lower_resolution, kernel_size):
    """Hoisted weight preprocessing: dense ConvTranspose matrices + flat biases."""
    cfgs = build_conv_configs(kernel_size, network_levels)
    h, w = lower_resolution
    mats, bvecs = [], []
    for layer in range(network_levels):
        padding, output_padding, stride = cfgs[layer]
        m, (h, w) = _convtranspose2d_as_matrix(params["conv_w"][layer], (h, w),
                                               stride, padding, output_padding)
        mats.append(m)
        cout = channel_list[layer + 1]
        bvecs.append(jnp.repeat(params["conv_b"][layer], h * w).reshape(1, cout * h * w))
    return {
        "lin_w_t": params["lin_w_t"],
        "lin_b": params["lin_b"],
        "conv_mats": mats,
        "conv_bvecs": bvecs,
        "out_chw": (channel_list[-1], h, w),
    }


def _pick_batch_tile(n):
    """Largest sublane-aligned row tile that divides n; small batches untiled."""
    if n <= 512:
        return n
    for t in (512, 256, 128, 64, 32, 16, 8):
        if n % t == 0:
            return t
    return n


def generator_forward(prep, z):
    """Single fused pallas_call for the whole generator forward."""
    n = z.shape[0]
    zf = z.reshape(n, -1)                                  # z.view(N, -1)
    z_dim = zf.shape[1]
    num_layers = len(prep["conv_mats"])
    cout, oh, ow = prep["out_chw"]
    out_dim = cout * oh * ow

    weights = [prep["lin_w_t"], prep["lin_b"]]
    for m, b in zip(prep["conv_mats"], prep["conv_bvecs"]):
        weights += [m, b]
    operands = [zf] + weights

    tile_n = _pick_batch_tile(n)
    grid = (n // tile_n,)

    in_specs = [pl.BlockSpec((tile_n, z_dim), lambda i: (i, 0))]
    # Weights: constant block index -> stay resident in VMEM across grid steps.
    in_specs += [pl.BlockSpec(w.shape, lambda i: (0, 0)) for w in weights]
    out_specs = pl.BlockSpec((tile_n, out_dim), lambda i: (i, 0))

    # Tiny-cost hint so XLA doesn't schedule around this call conservatively.
    flops = 0
    prev = z_dim
    for d in [prep["lin_w_t"].shape[1]] + [m.shape[1] for m in prep["conv_mats"]]:
        flops += 2 * n * prev * d
        prev = d
    bytes_accessed = sum(int(op.size) * 4 for op in operands) + n * out_dim * 4
    ce = pl.CostEstimate(flops=flops, transcendentals=n * out_dim,
                         bytes_accessed=bytes_accessed)

    out_flat = pl.pallas_call(
        _make_fused_generator_kernel(num_layers),
        out_shape=jax.ShapeDtypeStruct((n, out_dim), jnp.float32),
        grid=grid,
        in_specs=in_specs,
        out_specs=out_specs,
        compiler_params=pltpu.CompilerParams(
            dimension_semantics=("parallel",)),
        cost_estimate=ce,
    )(*operands)

    # out_flat is already NCHW-flattened (C-major, then H, then W):
    # this reshape is metadata-only, no transpose / extra HBM pass.
    return out_flat.reshape(n, cout, oh, ow)


# ------------------------------ reference -----------------------------------

def reference_forward(params, z, *, channel_list, network_levels,
                      lower_resolution, kernel_size):
    """Pure-JAX reference (XLA conv with lhs_dilation == ConvTranspose2d)."""
    n = z.shape[0]
    zf = z.reshape(n, -1)
    x = jnp.maximum(jnp.dot(zf, params["lin_w_t"],
                            precision=lax.Precision.HIGHEST) + params["lin_b"], 0.0)
    h0, w0 = lower_resolution
    c0 = channel_list[0]
    x = x.reshape(n, c0, h0, w0).transpose(0, 2, 3, 1)     # NCHW -> NHWC
    cfgs = build_conv_configs(kernel_size, network_levels)
    for layer in range(network_levels):
        (ph, pw), (oph, opw), stride = cfgs[layer]
        w_pt = params["conv_w"][layer]
        kh_sz, kw_sz = kernel_size
        w_conv = jnp.transpose(jnp.flip(w_pt, axis=(2, 3)), (2, 3, 0, 1))  # HWIO
        y = lax.conv_general_dilated(
            x, w_conv, window_strides=(1, 1),
            padding=((kh_sz - 1 - ph, kh_sz - 1 - ph + oph),
                     (kw_sz - 1 - pw, kw_sz - 1 - pw + opw)),
            lhs_dilation=(stride, stride), rhs_dilation=(1, 1),
            dimension_numbers=("NHWC", "HWIO", "NHWC"),
            precision=lax.Precision.HIGHEST)
        y = y + params["conv_b"][layer].reshape(1, 1, 1, -1)
        x = jnp.maximum(y, 0.0) if layer != network_levels - 1 else jnp.tanh(y)
    return x.transpose(0, 3, 1, 2)


# --------------------------------- main -------------------------------------

if __name__ == "__main__":
    cfg = dict(channel_list=[8, 4, 2], network_levels=2,
               lower_resolution=(4, 4), kernel_size=(4, 4))
    z_dim = 16
    batch = 2

    key = jax.random.PRNGKey(0)
    k_param, k_z = jax.random.split(key)
    params = init_generator_params(k_param, z_dim=z_dim, **cfg)
    prep = preprocess_params(params, **cfg)                # hoisted, one-time
    z = jax.random.normal(k_z, (batch, z_dim, 1, 1), jnp.float32)

    out = generator_forward(prep, z)
    out = jax.block_until_ready(out)

    # Expected PyTorch output shape: (N, channel_list[-1], 16, 17)
    assert out.shape == (batch, cfg["channel_list"][-1], 16, 17), out.shape

    ref = reference_forward(params, z, **cfg)
    assert jnp.allclose(out, ref, atol=2e-3, rtol=2e-3), float(jnp.max(jnp.abs(out - ref)))

    print("KERNEL_OK")
</pallas_src>

<mosaic_0001>
module attributes {stable_mosaic.version = 11 : i64} {
  func.func @kernel(%arg0: i32, %arg1: memref<2x16xf32, #tpu.memory_space<vmem>>, %arg2: memref<16x128xf32, #tpu.memory_space<vmem>>, %arg3: memref<1x128xf32, #tpu.memory_space<vmem>>, %arg4: memref<128x256xf32, #tpu.memory_space<vmem>>, %arg5: memref<1x256xf32, #tpu.memory_space<vmem>>, %arg6: memref<256x544xf32, #tpu.memory_space<vmem>>, %arg7: memref<1x544xf32, #tpu.memory_space<vmem>>, %arg8: memref<2x544xf32, #tpu.memory_space<vmem>>) attributes {dimension_semantics = [#tpu.dimension_semantics<parallel>], iteration_bounds = array<i64: 1>, scalar_prefetch = 0 : i64, scratch_operands = 0 : i64, tpu.core_type = #tpu.core_type<tc>, window_params = [{transform_indices = @transform_0, window_bounds = array<i64: 2, 16>}, {pipeline_mode = #tpu.pipeline_mode<synchronous>, transform_indices = @transform_1, window_bounds = array<i64: 16, 128>}, {pipeline_mode = #tpu.pipeline_mode<synchronous>, transform_indices = @transform_2, window_bounds = array<i64: 1, 128>}, {pipeline_mode = #tpu.pipeline_mode<synchronous>, transform_indices = @transform_3, window_bounds = array<i64: 128, 256>}, {pipeline_mode = #tpu.pipeline_mode<synchronous>, transform_indices = @transform_4, window_bounds = array<i64: 1, 256>}, {pipeline_mode = #tpu.pipeline_mode<synchronous>, transform_indices = @transform_5, window_bounds = array<i64: 256, 544>}, {pipeline_mode = #tpu.pipeline_mode<synchronous>, transform_indices = @transform_6, window_bounds = array<i64: 1, 544>}, {transform_indices = @transform_7, window_bounds = array<i64: 2, 544>}]} {
    %c0 = arith.constant 0 : index
    %c0_0 = arith.constant 0 : index
    %0 = vector.load %arg1[%c0, %c0_0] : memref<2x16xf32, #tpu.memory_space<vmem>>, vector<2x16xf32>
    %c0_1 = arith.constant 0 : index
    %c0_2 = arith.constant 0 : index
    %1 = vector.load %arg2[%c0_1, %c0_2] : memref<16x128xf32, #tpu.memory_space<vmem>>, vector<16x128xf32>
    %cst = arith.constant dense<0.000000e+00> : vector<2x128xf32>
    %2 = tpu.matmul %0, %1, %cst {dimension_numbers = #tpu.dot_dimension_numbers<[1], [0], [0], [1], [0, 0, 1, 1], [], []>, precision = #tpu.contract_precision<fp32>} : vector<2x16xf32>, vector<16x128xf32>, vector<2x128xf32> -> vector<2x128xf32>
    %c0_3 = arith.constant 0 : index
    %c0_4 = arith.constant 0 : index
    %3 = vector.load %arg3[%c0_3, %c0_4] : memref<1x128xf32, #tpu.memory_space<vmem>>, vector<1x128xf32>
    %4 = vector.broadcast %3 : vector<1x128xf32> to vector<2x128xf32>
    %5 = arith.addf %2, %4 : vector<2x128xf32>
    %cst_5 = arith.constant 0.000000e+00 : f32
    %6 = vector.broadcast %cst_5 : f32 to vector<2x128xf32>
    %7 = arith.maximumf %5, %6 : vector<2x128xf32>
    %c0_6 = arith.constant 0 : index
    %c0_7 = arith.constant 0 : index
    %8 = vector.load %arg4[%c0_6, %c0_7] : memref<128x256xf32, #tpu.memory_space<vmem>>, vector<128x256xf32>
    %cst_8 = arith.constant dense<0.000000e+00> : vector<2x256xf32>
    %9 = tpu.matmul %7, %8, %cst_8 {dimension_numbers = #tpu.dot_dimension_numbers<[1], [0], [0], [1], [0, 0, 1, 1], [], []>, precision = #tpu.contract_precision<fp32>} : vector<2x128xf32>, vector<128x256xf32>, vector<2x256xf32> -> vector<2x256xf32>
    %c0_9 = arith.constant 0 : index
    %c0_10 = arith.constant 0 : index
    %10 = vector.load %arg5[%c0_9, %c0_10] : memref<1x256xf32, #tpu.memory_space<vmem>>, vector<1x256xf32>
    %11 = vector.broadcast %10 : vector<1x256xf32> to vector<2x256xf32>
    %12 = arith.addf %9, %11 : vector<2x256xf32>
    %cst_11 = arith.constant 0.000000e+00 : f32
    %13 = vector.broadcast %cst_11 : f32 to vector<2x256xf32>
    %14 = arith.maximumf %12, %13 : vector<2x256xf32>
    %c0_12 = arith.constant 0 : index
    %c0_13 = arith.constant 0 : index
    %15 = vector.load %arg6[%c0_12, %c0_13] : memref<256x544xf32, #tpu.memory_space<vmem>>, vector<256x544xf32>
    %cst_14 = arith.constant dense<0.000000e+00> : vector<2x544xf32>
    %16 = tpu.matmul %14, %15, %cst_14 {dimension_numbers = #tpu.dot_dimension_numbers<[1], [0], [0], [1], [0, 0, 1, 1], [], []>, precision = #tpu.contract_precision<fp32>} : vector<2x256xf32>, vector<256x544xf32>, vector<2x544xf32> -> vector<2x544xf32>
    %c0_15 = arith.constant 0 : index
    %c0_16 = arith.constant 0 : index
    %17 = vector.load %arg7[%c0_15, %c0_16] : memref<1x544xf32, #tpu.memory_space<vmem>>, vector<1x544xf32>
    %18 = vector.broadcast %17 : vector<1x544xf32> to vector<2x544xf32>
    %19 = arith.addf %16, %18 : vector<2x544xf32>
    %20 = math.tanh %19 : vector<2x544xf32>
    %c0_17 = arith.constant 0 : index
    %c0_18 = arith.constant 0 : index
    %21 = vector.load %arg8[%c0_17, %c0_18] : memref<2x544xf32, #tpu.memory_space<vmem>>, vector<2x544xf32>
    tpu.vector_store %arg8[%c0_17, %c0_18], %20 {strides = array<i32>} : memref<2x544xf32, #tpu.memory_space<vmem>>, vector<2x544xf32>,
    return
  }
  func.func @transform_0(%arg0: i32) -> (i32, i32) {
    %c0_i32 = arith.constant 0 : i32
    %c0_i32_0 = arith.constant 0 : i32
    return %arg0, %c0_i32 : i32, i32
  }
  func.func @transform_1(%arg0: i32) -> (i32, i32) {
    %c0_i32 = arith.constant 0 : i32
    %c0_i32_0 = arith.constant 0 : i32
    %c0_i32_1 = arith.constant 0 : i32
    return %c0_i32, %c0_i32_0 : i32, i32
  }
  func.func @transform_2(%arg0: i32) -> (i32, i32) {
    %c0_i32 = arith.constant 0 : i32
    %c0_i32_0 = arith.constant 0 : i32
    %c0_i32_1 = arith.constant 0 : i32
    return %c0_i32, %c0_i32_0 : i32, i32
  }
  func.func @transform_3(%arg0: i32) -> (i32, i32) {
    %c0_i32 = arith.constant 0 : i32
    %c0_i32_0 = arith.constant 0 : i32
    %c0_i32_1 = arith.constant 0 : i32
    return %c0_i32, %c0_i32_0 : i32, i32
  }
  func.func @transform_4(%arg0: i32) -> (i32, i32) {
    %c0_i32 = arith.constant 0 : i32
    %c0_i32_0 = arith.constant 0 : i32
    %c0_i32_1 = arith.constant 0 : i32
    return %c0_i32, %c0_i32_0 : i32, i32
  }
  func.func @transform_5(%arg0: i32) -> (i32, i32) {
    %c0_i32 = arith.constant 0 : i32
    %c0_i32_0 = arith.constant 0 : i32
    %c0_i32_1 = arith.constant 0 : i32
    return %c0_i32, %c0_i32_0 : i32, i32
  }
  func.func @transform_6(%arg0: i32) -> (i32, i32) {
    %c0_i32 = arith.constant 0 : i32
    %c0_i32_0 = arith.constant 0 : i32
    %c0_i32_1 = arith.constant 0 : i32
    return %c0_i32, %c0_i32_0 : i32, i32
  }
  func.func @transform_7(%arg0: i32) -> (i32, i32) {
    %c0_i32 = arith.constant 0 : i32
    %c0_i32_0 = arith.constant 0 : i32
    return %arg0, %c0_i32 : i32, i32
  }
}

</mosaic_0001>

<llo_original>
// kernel: tpu_custom_call.1
$region0: #{tpu_custom_call.1}
  #allocation0 [shape = 'u32[]', space=smem, size = 0x4, offset = 0x4, fixed_abs, tag = 'smem constant byte address 0x4 - core index']
  #allocation1 [shape = 'u32[144,128]{1,0:T(1,128)}', space=vmem, size = 0x12000, scoped, tag = 'internal scratch']
  %s0 = inlined_call_operand.vmem [shape: f32[2,16], index: 0, kind: input, shape index: {}]
  %s1 = inlined_call_operand.vmem [shape: f32[16,128], index: 1, kind: input, shape index: {}]
  %s2 = inlined_call_operand.vmem [shape: f32[1,128], index: 2, kind: input, shape index: {}]
  %s3 = inlined_call_operand.vmem [shape: f32[128,256], index: 3, kind: input, shape index: {}]
  %s4 = inlined_call_operand.vmem [shape: f32[1,256], index: 4, kind: input, shape index: {}]
  %s5 = inlined_call_operand.vmem [shape: f32[256,544], index: 5, kind: input, shape index: {}]
  %s6 = inlined_call_operand.vmem [shape: f32[1,544], index: 6, kind: input, shape index: {}]
  %s7 = inlined_call_operand.hbm [shape: f32[2,544], index: 7, kind: output, shape index: {}]
  %s8 = sld [smem:[#allocation0]]
  $region38: #{tpu_custom_call.1} parent=0
    _
  %s10 = ssub.s32 1, %s8
  %s11 = scalar_select 0, %s10, %s8
  $region1: #{tpu_custom_call.1} parent=0
    #allocation2 [shape = 'u8[5120]{0}', space=vmem, size = 0x1400, scoped, tag = 'output window, operand 0, single buffered']
    #allocation3 [shape = 's32[1]{0}', space=sflag, size = 0x4, scoped, tag = 'scoped memory for tpu_custom_call.1']
    %12 = vsyncpa [#allocation3], 0
    // Predicated region
    $region2: #{tpu_custom_call.1} parent=1 // pred_check
      _
    $region3: #{tpu_custom_call.1} parent=1 // pred_check_branch
      %14 = sbr.rel (0) target = $region5
    $region4: #{tpu_custom_call.1} parent=1 // pred_region
      _
    $region5: #{tpu_custom_call.1} parent=1 // pred_fallthru
      _
    // Predicated region
    $region6: #{tpu_custom_call.1} parent=1 // pred_check
      _
    $region7: #{tpu_custom_call.1} parent=1 // pred_check_branch
      %16 = sbr.rel (0) target = $region9
    $region8: #{tpu_custom_call.1} parent=1 // pred_region
      _
    $region9: #{tpu_custom_call.1} parent=1 // pred_fallthru
      _
    // Predicated region
    $region10: #{tpu_custom_call.1} parent=1 // pred_check
      _
    $region11: #{tpu_custom_call.1} parent=1 // pred_check_branch
      %18 = sbr.rel (0) target = $region13
    $region12: #{tpu_custom_call.1} parent=1 // pred_region
      _
    $region13: #{tpu_custom_call.1} parent=1 // pred_fallthru
      _
    // Predicated region
    $region14: #{tpu_custom_call.1} parent=1 // pred_check
      _
    $region15: #{tpu_custom_call.1} parent=1 // pred_check_branch
      %20 = sbr.rel (0) target = $region17
    $region16: #{tpu_custom_call.1} parent=1 // pred_region
      _
    $region17: #{tpu_custom_call.1} parent=1 // pred_fallthru
      _
    // Predicated region
    $region18: #{tpu_custom_call.1} parent=1 // pred_check
      _
    $region19: #{tpu_custom_call.1} parent=1 // pred_check_branch
      %22 = sbr.rel (0) target = $region21
    $region20: #{tpu_custom_call.1} parent=1 // pred_region
      _
    $region21: #{tpu_custom_call.1} parent=1 // pred_fallthru
      _
    // Predicated region
    $region22: #{tpu_custom_call.1} parent=1 // pred_check
      _
    $region23: #{tpu_custom_call.1} parent=1 // pred_check_branch
      %24 = sbr.rel (0) target = $region25
    $region24: #{tpu_custom_call.1} parent=1 // pred_region
      _
    $region25: #{tpu_custom_call.1} parent=1 // pred_fallthru
      _
    // Predicated region
    $region26: #{tpu_custom_call.1} parent=1 // pred_check
      _
    $region27: #{tpu_custom_call.1} parent=1 // pred_check_branch
      %26 = sbr.rel (0) target = $region29
    $region28: #{tpu_custom_call.1} parent=1 // pred_region
      _
    $region29: #{tpu_custom_call.1} parent=1 // pred_fallthru
      _
    %v27 = vld [vmem:[%s0] sm:$0x3]
    %v28 = vld [vmem:[%s1] sm:$0xff]
    %v29 = vld [vmem:[%s1 + $0x8] sm:$0xff]
    %v30 = vld [vmem:[%s2] sm:$0x1]
    %v32 = vlaneseq
    %v33 = vshrl.u32 %v32, 7
    %v34 = vsub.s32 0, %v33
    %v35 = vrot.slane %v30, %v34
    %vm37 = vcmask 130048
    %v39 = vsel %vm37, %v27, 0
    %41 = vmatprep.subr.mxu0 0.0
    %42 = vmatpush1.msra.mxu0 0.0
    %43 = vmatprep.subr.mxu0 0.0
    %44 = vmatpush1.msra.mxu0 0.0
    %45 = vmatprep.subr.mxu0 0.0
    %46 = vmatpush1.msra.mxu0 0.0
    %47 = vmatprep.subr.mxu0 0.0
    %48 = vmatpush1.msra.mxu0 0.0
    %49 = vmatprep.subr.mxu0 0.0
    %50 = vmatpush1.msra.mxu0 0.0
    %51 = vmatprep.subr.mxu0 0.0
    %52 = vmatpush1.msra.mxu0 0.0
    %53 = vmatprep.subr.mxu0 0.0
    %54 = vmatpush1.msra.mxu0 0.0
    %55 = vmatprep.subr.mxu0 0.0
    %56 = vmatpush1.msra.mxu0 0.0
    %57 = vmatprep.subr.mxu0 0.0
    %58 = vmatpush1.msra.mxu0 0.0
    %59 = vmatprep.subr.mxu0 0.0
    %60 = vmatpush1.msra.mxu0 0.0
    %61 = vmatprep.subr.mxu0 0.0
    %62 = vmatpush1.msra.mxu0 0.0
    %63 = vmatprep.subr.mxu0 0.0
    %64 = vmatpush1.msra.mxu0 0.0
    %65 = vmatprep.subr.mxu0 0.0
    %66 = vmatpush1.msra.mxu0 0.0
    %67 = vmatprep.subr.mxu0 0.0
    %68 = vmatpush1.msra.mxu0 0.0
    %69 = vmatprep.subr.mxu0 0.0
    %v70 = vand.u32 %v29, 4294901760
    %71 = vmatpush1.msra.mxu0 %v70
    %72 = vmatprep.subr.mxu0 0.0
    %v73 = vand.u32 %v28, 4294901760
    %74 = vmatpush1.msra.mxu0 %v73
    %75 = vmatprep.subr.mxu0 0.0
    %76 = vmatpush2.msra.mxu0 0.0
    %77 = vmatprep.subr.mxu0 0.0
    %78 = vmatpush2.msra.mxu0 0.0
    %79 = vmatprep.subr.mxu0 0.0
    %80 = vmatpush2.msra.mxu0 0.0
    %81 = vmatprep.subr.mxu0 0.0
    %82 = vmatpush2.msra.mxu0 0.0
    %83 = vmatprep.subr.mxu0 0.0
    %84 = vmatpush2.msra.mxu0 0.0
    %85 = vmatprep.subr.mxu0 0.0
    %86 = vmatpush2.msra.mxu0 0.0
    %87 = vmatprep.subr.mxu0 0.0
    %88 = vmatpush2.msra.mxu0 0.0
    %89 = vmatprep.subr.mxu0 0.0
    %90 = vmatpush2.msra.mxu0 0.0
    %91 = vmatprep.subr.mxu0 0.0
    %92 = vmatpush2.msra.mxu0 0.0
    %93 = vmatprep.subr.mxu0 0.0
    %94 = vmatpush2.msra.mxu0 0.0
    %95 = vmatprep.subr.mxu0 0.0
    %96 = vmatpush2.msra.mxu0 0.0
    %97 = vmatprep.subr.mxu0 0.0
    %98 = vmatpush2.msra.mxu0 0.0
    %99 = vmatprep.subr.mxu0 0.0
    %100 = vmatpush2.msra.mxu0 0.0
    %101 = vmatprep.subr.mxu0 0.0
    %102 = vmatpush2.msra.mxu0 0.0
    %103 = vmatprep.subr.mxu0 0.0
    %104 = vmatpush2.msra.mxu0 0.0
    %105 = vmatprep.subr.mxu0 0.0
    %106 = vmatpush2.msra.mxu0 0.0
    %107 = vmatprep.mubr.f32.mxu0 0.0
    %v108 = vand.u32 %v39, 4294901760
    %v109 = vsub.f32 %v39, %v108
    %v110 = vand.u32 %v109, 4294901760
    %v111 = vsub.f32 %v109, %v110
    %v112 = vand.u32 %v111, 4294901760
    %113 = vmatmul.mubr.f32.gmra.mxu0 %v112
    %v114 = vpop.f32.mrf.mxu0
    %v115 = vadd.f32 %v35, %v114
    %v116 = vpop.f32.mrf.mxu0
    %117 = vdwg.mxu0
    %118 = vmatprep.subr.mxu0 0.0
    %119 = vmatpush1.msra.mxu0 0.0
    %120 = vmatprep.subr.mxu0 0.0
    %121 = vmatpush1.msra.mxu0 0.0
    %122 = vmatprep.subr.mxu0 0.0
    %123 = vmatpush1.msra.mxu0 0.0
    %124 = vmatprep.subr.mxu0 0.0
    %125 = vmatpush1.msra.mxu0 0.0
    %126 = vmatprep.subr.mxu0 0.0
    %127 = vmatpush1.msra.mxu0 0.0
    %128 = vmatprep.subr.mxu0 0.0
    %129 = vmatpush1.msra.mxu0 0.0
    %130 = vmatprep.subr.mxu0 0.0
    %131 = vmatpush1.msra.mxu0 0.0
    %132 = vmatprep.subr.mxu0 0.0
    %133 = vmatpush1.msra.mxu0 0.0
    %134 = vmatprep.subr.mxu0 0.0
    %135 = vmatpush1.msra.mxu0 0.0
    %136 = vmatprep.subr.mxu0 0.0
    %137 = vmatpush1.msra.mxu0 0.0
    %138 = vmatprep.subr.mxu0 0.0
    %139 = vmatpush1.msra.mxu0 0.0
    %140 = vmatprep.subr.mxu0 0.0
    %141 = vmatpush1.msra.mxu0 0.0
    %142 = vmatprep.subr.mxu0 0.0
    %143 = vmatpush1.msra.mxu0 0.0
    %144 = vmatprep.subr.mxu0 0.0
    %145 = vmatpush1.msra.mxu0 0.0
    %146 = vmatprep.subr.mxu0 0.0
    %v147 = vand.u32 %v29, 4294901760
    %v148 = vsub.f32 %v29, %v147
    %v149 = vand.u32 %v148, 4294901760
    %v150 = vsub.f32 %v148, %v149
    %v151 = vand.u32 %v150, 4294901760
    %152 = vmatpush1.msra.mxu0 %v151
    %153 = vmatprep.subr.mxu0 0.0
    %v154 = vand.u32 %v28, 4294901760
    %v155 = vsub.f32 %v28, %v154
    %v156 = vand.u32 %v155, 4294901760
    %v157 = vsub.f32 %v155, %v156
    %v158 = vand.u32 %v157, 4294901760
    %159 = vmatpush1.msra.mxu0 %v158
    %160 = vmatprep.subr.mxu0 0.0
    %161 = vmatpush2.msra.mxu0 0.0
    %162 = vmatprep.subr.mxu0 0.0
    %163 = vmatpush2.msra.mxu0 0.0
    %164 = vmatprep.subr.mxu0 0.0
    %165 = vmatpush2.msra.mxu0 0.0
    %166 = vmatprep.subr.mxu0 0.0
    %167 = vmatpush2.msra.mxu0 0.0
    %168 = vmatprep.subr.mxu0 0.0
    %169 = vmatpush2.msra.mxu0 0.0
    %170 = vmatprep.subr.mxu0 0.0
    %171 = vmatpush2.msra.mxu0 0.0
    %172 = vmatprep.subr.mxu0 0.0
    %173 = vmatpush2.msra.mxu0 0.0
    %174 = vmatprep.subr.mxu0 0.0
    %175 = vmatpush2.msra.mxu0 0.0
    %176 = vmatprep.subr.mxu0 0.0
    %177 = vmatpush2.msra.mxu0 0.0
    %178 = vmatprep.subr.mxu0 0.0
    %179 = vmatpush2.msra.mxu0 0.0
    %180 = vmatprep.subr.mxu0 0.0
    %181 = vmatpush2.msra.mxu0 0.0
    %182 = vmatprep.subr.mxu0 0.0
    %183 = vmatpush2.msra.mxu0 0.0
    %184 = vmatprep.subr.mxu0 0.0
    %185 = vmatpush2.msra.mxu0 0.0
    %186 = vmatprep.subr.mxu0 0.0
    %187 = vmatpush2.msra.mxu0 0.0
    %188 = vmatprep.subr.mxu0 0.0
    %189 = vmatpush2.msra.mxu0 0.0
    %190 = vmatprep.subr.mxu0 0.0
    %191 = vmatpush2.msra.mxu0 0.0
    %192 = vmatprep.mubr.f32.mxu0 0.0
    %v193 = vand.u32 %v39, 4294901760
    %194 = vmatmul.mubr.f32.gmra.mxu0 %v193
    %v195 = vpop.f32.mrf.mxu0
    %v196 = vadd.f32 %v115, %v195
    %v197 = vpop.f32.mrf.mxu0
    %198 = vdwg.mxu0
    %199 = vmatprep.subr.mxu0 0.0
    %200 = vmatpush1.msra.mxu0 0.0
    %201 = vmatprep.subr.mxu0 0.0
    %202 = vmatpush1.msra.mxu0 0.0
    %203 = vmatprep.subr.mxu0 0.0
    %204 = vmatpush1.msra.mxu0 0.0
    %205 = vmatprep.subr.mxu0 0.0
    %206 = vmatpush1.msra.mxu0 0.0
    %207 = vmatprep.subr.mxu0 0.0
    %208 = vmatpush1.msra.mxu0 0.0
    %209 = vmatprep.subr.mxu0 0.0
    %210 = vmatpush1.msra.mxu0 0.0
    %211 = vmatprep.subr.mxu0 0.0
    %212 = vmatpush1.msra.mxu0 0.0
    %213 = vmatprep.subr.mxu0 0.0
    %214 = vmatpush1.msra.mxu0 0.0
    %215 = vmatprep.subr.mxu0 0.0
    %216 = vmatpush1.msra.mxu0 0.0
    %217 = vmatprep.subr.mxu0 0.0
    %218 = vmatpush1.msra.mxu0 0.0
    %219 = vmatprep.subr.mxu0 0.0
    %220 = vmatpush1.msra.mxu0 0.0
    %221 = vmatprep.subr.mxu0 0.0
    %222 = vmatpush1.msra.mxu0 0.0
    %223 = vmatprep.subr.mxu0 0.0
    %224 = vmatpush1.msra.mxu0 0.0
    %225 = vmatprep.subr.mxu0 0.0
    %226 = vmatpush1.msra.mxu0 0.0
    %227 = vmatprep.subr.mxu0 0.0
    %v228 = vand.u32 %v29, 4294901760
    %v229 = vsub.f32 %v29, %v228
    %230 = vmatpush1.msra.mxu0 %v229
    %231 = vmatprep.subr.mxu0 0.0
    %v232 = vand.u32 %v28, 4294901760
    %v233 = vsub.f32 %v28, %v232
    %234 = vmatpush1.msra.mxu0 %v233
    %235 = vmatprep.subr.mxu0 0.0
    %236 = vmatpush2.msra.mxu0 0.0
    %237 = vmatprep.subr.mxu0 0.0
    %238 = vmatpush2.msra.mxu0 0.0
    %239 = vmatprep.subr.mxu0 0.0
    %240 = vmatpush2.msra.mxu0 0.0
    %241 = vmatprep.subr.mxu0 0.0
    %242 = vmatpush2.msra.mxu0 0.0
    %243 = vmatprep.subr.mxu0 0.0
    %244 = vmatpush2.msra.mxu0 0.0
    %245 = vmatprep.subr.mxu0 0.0
    %246 = vmatpush2.msra.mxu0 0.0
    %247 = vmatprep.subr.mxu0 0.0
    %248 = vmatpush2.msra.mxu0 0.0
    %249 = vmatprep.subr.mxu0 0.0
    %250 = vmatpush2.msra.mxu0 0.0
    %251 = vmatprep.subr.mxu0 0.0
    %252 = vmatpush2.msra.mxu0 0.0
    %253 = vmatprep.subr.mxu0 0.0
    %254 = vmatpush2.msra.mxu0 0.0
    %255 = vmatprep.subr.mxu0 0.0
    %256 = vmatpush2.msra.mxu0 0.0
    %257 = vmatprep.subr.mxu0 0.0
    %258 = vmatpush2.msra.mxu0 0.0
    %259 = vmatprep.subr.mxu0 0.0
    %260 = vmatpush2.msra.mxu0 0.0
    %261 = vmatprep.subr.mxu0 0.0
    %262 = vmatpush2.msra.mxu0 0.0
    %263 = vmatprep.subr.mxu0 0.0
    %264 = vmatpush2.msra.mxu0 0.0
    %265 = vmatprep.subr.mxu0 0.0
    %266 = vmatpush2.msra.mxu0 0.0
    %267 = vmatprep.mubr.f32.mxu0 0.0
    %v268 = vand.u32 %v39, 4294901760
    %v269 = vsub.f32 %v39, %v268
    %270 = vmatmul.mubr.f32.gmra.mxu0 %v269
    %v271 = vpop.f32.mrf.mxu0
    %v272 = vadd.f32 %v196, %v271
    %v273 = vpop.f32.mrf.mxu0
    %274 = vdwg.mxu0
    %275 = vmatprep.subr.mxu0 0.0
    %276 = vmatpush1.msra.mxu0 0.0
    %277 = vmatprep.subr.mxu0 0.0
    %278 = vmatpush1.msra.mxu0 0.0
    %279 = vmatprep.subr.mxu0 0.0
    %280 = vmatpush1.msra.mxu0 0.0
    %281 = vmatprep.subr.mxu0 0.0
    %282 = vmatpush1.msra.mxu0 0.0
    %283 = vmatprep.subr.mxu0 0.0
    %284 = vmatpush1.msra.mxu0 0.0
    %285 = vmatprep.subr.mxu0 0.0
    %286 = vmatpush1.msra.mxu0 0.0
    %287 = vmatprep.subr.mxu0 0.0
    %288 = vmatpush1.msra.mxu0 0.0
    %289 = vmatprep.subr.mxu0 0.0
    %290 = vmatpush1.msra.mxu0 0.0
    %291 = vmatprep.subr.mxu0 0.0
    %292 = vmatpush1.msra.mxu0 0.0
    %293 = vmatprep.subr.mxu0 0.0
    %294 = vmatpush1.msra.mxu0 0.0
    %295 = vmatprep.subr.mxu0 0.0
    %296 = vmatpush1.msra.mxu0 0.0
    %297 = vmatprep.subr.mxu0 0.0
    %298 = vmatpush1.msra.mxu0 0.0
    %299 = vmatprep.subr.mxu0 0.0
    %300 = vmatpush1.msra.mxu0 0.0
    %301 = vmatprep.subr.mxu0 0.0
    %302 = vmatpush1.msra.mxu0 0.0
    %303 = vmatprep.subr.mxu0 0.0
    %v304 = vand.u32 %v29, 4294901760
    %305 = vmatpush1.msra.mxu0 %v304
    %306 = vmatprep.subr.mxu0 0.0
    %v307 = vand.u32 %v28, 4294901760
    %308 = vmatpush1.msra.mxu0 %v307
    %309 = vmatprep.subr.mxu0 0.0
    %310 = vmatpush2.msra.mxu0 0.0
    %311 = vmatprep.subr.mxu0 0.0
    %312 = vmatpush2.msra.mxu0 0.0
    %313 = vmatprep.subr.mxu0 0.0
    %314 = vmatpush2.msra.mxu0 0.0
    %315 = vmatprep.subr.mxu0 0.0
    %316 = vmatpush2.msra.mxu0 0.0
    %317 = vmatprep.subr.mxu0 0.0
    %318 = vmatpush2.msra.mxu0 0.0
    %319 = vmatprep.subr.mxu0 0.0
    %320 = vmatpush2.msra.mxu0 0.0
    %321 = vmatprep.subr.mxu0 0.0
    %322 = vmatpush2.msra.mxu0 0.0
    %323 = vmatprep.subr.mxu0 0.0
    %324 = vmatpush2.msra.mxu0 0.0
    %325 = vmatprep.subr.mxu0 0.0
    %326 = vmatpush2.msra.mxu0 0.0
    %327 = vmatprep.subr.mxu0 0.0
    %328 = vmatpush2.msra.mxu0 0.0
    %329 = vmatprep.subr.mxu0 0.0
    %330 = vmatpush2.msra.mxu0 0.0
    %331 = vmatprep.subr.mxu0 0.0
    %332 = vmatpush2.msra.mxu0 0.0
    %333 = vmatprep.subr.mxu0 0.0
    %334 = vmatpush2.msra.mxu0 0.0
    %335 = vmatprep.subr.mxu0 0.0
    %336 = vmatpush2.msra.mxu0 0.0
    %337 = vmatprep.subr.mxu0 0.0
    %338 = vmatpush2.msra.mxu0 0.0
    %339 = vmatprep.subr.mxu0 0.0
    %340 = vmatpush2.msra.mxu0 0.0
    %341 = vmatprep.mubr.f32.mxu0 0.0
    %v342 = vand.u32 %v39, 4294901760
    %v343 = vsub.f32 %v39, %v342
    %v344 = vand.u32 %v343, 4294901760
    %345 = vmatmul.mubr.f32.gmra.mxu0 %v344
    %v346 = vpop.f32.mrf.mxu0
    %v347 = vadd.f32 %v272, %v346
    %v348 = vpop.f32.mrf.mxu0
    %349 = vdwg.mxu0
    %350 = vmatprep.subr.mxu0 0.0
    %351 = vmatpush1.msra.mxu0 0.0
    %352 = vmatprep.subr.mxu0 0.0
    %353 = vmatpush1.msra.mxu0 0.0
    %354 = vmatprep.subr.mxu0 0.0
    %355 = vmatpush1.msra.mxu0 0.0
    %356 = vmatprep.subr.mxu0 0.0
    %357 = vmatpush1.msra.mxu0 0.0
    %358 = vmatprep.subr.mxu0 0.0
    %359 = vmatpush1.msra.mxu0 0.0
    %360 = vmatprep.subr.mxu0 0.0
    %361 = vmatpush1.msra.mxu0 0.0
    %362 = vmatprep.subr.mxu0 0.0
    %363 = vmatpush1.msra.mxu0 0.0
    %364 = vmatprep.subr.mxu0 0.0
    %365 = vmatpush1.msra.mxu0 0.0
    %366 = vmatprep.subr.mxu0 0.0
    %367 = vmatpush1.msra.mxu0 0.0
    %368 = vmatprep.subr.mxu0 0.0
    %369 = vmatpush1.msra.mxu0 0.0
    %370 = vmatprep.subr.mxu0 0.0
    %371 = vmatpush1.msra.mxu0 0.0
    %372 = vmatprep.subr.mxu0 0.0
    %373 = vmatpush1.msra.mxu0 0.0
    %374 = vmatprep.subr.mxu0 0.0
    %375 = vmatpush1.msra.mxu0 0.0
    %376 = vmatprep.subr.mxu0 0.0
    %377 = vmatpush1.msra.mxu0 0.0
    %378 = vmatprep.subr.mxu0 0.0
    %v379 = vand.u32 %v29, 4294901760
    %v380 = vsub.f32 %v29, %v379
    %v381 = vand.u32 %v380, 4294901760
    %382 = vmatpush1.msra.mxu0 %v381
    %383 = vmatprep.subr.mxu0 0.0
    %v384 = vand.u32 %v28, 4294901760
    %v385 = vsub.f32 %v28, %v384
    %v386 = vand.u32 %v385, 4294901760
    %387 = vmatpush1.msra.mxu0 %v386
    %388 = vmatprep.subr.mxu0 0.0
    %389 = vmatpush2.msra.mxu0 0.0
    %390 = vmatprep.subr.mxu0 0.0
    %391 = vmatpush2.msra.mxu0 0.0
    %392 = vmatprep.subr.mxu0 0.0
    %393 = vmatpush2.msra.mxu0 0.0
    %394 = vmatprep.subr.mxu0 0.0
    %395 = vmatpush2.msra.mxu0 0.0
    %396 = vmatprep.subr.mxu0 0.0
    %397 = vmatpush2.msra.mxu0 0.0
    %398 = vmatprep.subr.mxu0 0.0
    %399 = vmatpush2.msra.mxu0 0.0
    %400 = vmatprep.subr.mxu0 0.0
    %401 = vmatpush2.msra.mxu0 0.0
    %402 = vmatprep.subr.mxu0 0.0
    %403 = vmatpush2.msra.mxu0 0.0
    %404 = vmatprep.subr.mxu0 0.0
    %405 = vmatpush2.msra.mxu0 0.0
    %406 = vmatprep.subr.mxu0 0.0
    %407 = vmatpush2.msra.mxu0 0.0
    %408 = vmatprep.subr.mxu0 0.0
    %409 = vmatpush2.msra.mxu0 0.0
    %410 = vmatprep.subr.mxu0 0.0
    %411 = vmatpush2.msra.mxu0 0.0
    %412 = vmatprep.subr.mxu0 0.0
    %413 = vmatpush2.msra.mxu0 0.0
    %414 = vmatprep.subr.mxu0 0.0
    %415 = vmatpush2.msra.mxu0 0.0
    %416 = vmatprep.subr.mxu0 0.0
    %417 = vmatpush2.msra.mxu0 0.0
    %418 = vmatprep.subr.mxu0 0.0
    %419 = vmatpush2.msra.mxu0 0.0
    %420 = vmatprep.mubr.f32.mxu0 0.0
    %v421 = vand.u32 %v39, 4294901760
    %422 = vmatmul.mubr.f32.gmra.mxu0 %v421
    %v423 = vpop.f32.mrf.mxu0
    %v424 = vadd.f32 %v347, %v423
    %v425 = vpop.f32.mrf.mxu0
    %426 = vdwg.mxu0
    %427 = vmatprep.subr.mxu0 0.0
    %428 = vmatpush1.msra.mxu0 0.0
    %429 = vmatprep.subr.mxu0 0.0
    %430 = vmatpush1.msra.mxu0 0.0
    %431 = vmatprep.subr.mxu0 0.0
    %432 = vmatpush1.msra.mxu0 0.0
    %433 = vmatprep.subr.mxu0 0.0
    %434 = vmatpush1.msra.mxu0 0.0
    %435 = vmatprep.subr.mxu0 0.0
    %436 = vmatpush1.msra.mxu0 0.0
    %437 = vmatprep.subr.mxu0 0.0
    %438 = vmatpush1.msra.mxu0 0.0
    %439 = vmatprep.subr.mxu0 0.0
    %440 = vmatpush1.msra.mxu0 0.0
    %441 = vmatprep.subr.mxu0 0.0
    %442 = vmatpush1.msra.mxu0 0.0
    %443 = vmatprep.subr.mxu0 0.0
    %444 = vmatpush1.msra.mxu0 0.0
    %445 = vmatprep.subr.mxu0 0.0
    %446 = vmatpush1.msra.mxu0 0.0
    %447 = vmatprep.subr.mxu0 0.0
    %448 = vmatpush1.msra.mxu0 0.0
    %449 = vmatprep.subr.mxu0 0.0
    %450 = vmatpush1.msra.mxu0 0.0
    %451 = vmatprep.subr.mxu0 0.0
    %452 = vmatpush1.msra.mxu0 0.0
    %453 = vmatprep.subr.mxu0 0.0
    %454 = vmatpush1.msra.mxu0 0.0
    %455 = vmatprep.subr.mxu0 0.0
    %v456 = vand.u32 %v29, 4294901760
    %457 = vmatpush1.msra.mxu0 %v456
    %458 = vmatprep.subr.mxu0 0.0
    %v459 = vand.u32 %v28, 4294901760
    %460 = vmatpush1.msra.mxu0 %v459
    %461 = vmatprep.subr.mxu0 0.0
    %462 = vmatpush2.msra.mxu0 0.0
    %463 = vmatprep.subr.mxu0 0.0
    %464 = vmatpush2.msra.mxu0 0.0
    %465 = vmatprep.subr.mxu0 0.0
    %466 = vmatpush2.msra.mxu0 0.0
    %467 = vmatprep.subr.mxu0 0.0
    %468 = vmatpush2.msra.mxu0 0.0
    %469 = vmatprep.subr.mxu0 0.0
    %470 = vmatpush2.msra.mxu0 0.0
    %471 = vmatprep.subr.mxu0 0.0
    %472 = vmatpush2.msra.mxu0 0.0
    %473 = vmatprep.subr.mxu0 0.0
    %474 = vmatpush2.msra.mxu0 0.0
    %475 = vmatprep.subr.mxu0 0.0
    %476 = vmatpush2.msra.mxu0 0.0
    %477 = vmatprep.subr.mxu0 0.0
    %478 = vmatpush2.msra.mxu0 0.0
    %479 = vmatprep.subr.mxu0 0.0
    %480 = vmatpush2.msra.mxu0 0.0
    %481 = vmatprep.subr.mxu0 0.0
    %482 = vmatpush2.msra.mxu0 0.0
    %483 = vmatprep.subr.mxu0 0.0
    %484 = vmatpush2.msra.mxu0 0.0
    %485 = vmatprep.subr.mxu0 0.0
    %486 = vmatpush2.msra.mxu0 0.0
    %487 = vmatprep.subr.mxu0 0.0
    %488 = vmatpush2.msra.mxu0 0.0
    %489 = vmatprep.subr.mxu0 0.0
    %490 = vmatpush2.msra.mxu0 0.0
    %491 = vmatprep.subr.mxu0 0.0
    %492 = vmatpush2.msra.mxu0 0.0
    %493 = vmatprep.mubr.f32.mxu0 0.0
    %v494 = vand.u32 %v39, 4294901760
    %495 = vmatmul.mubr.f32.gmra.mxu0 %v494
    %v496 = vpop.f32.mrf.mxu0
    %v497 = vadd.f32 %v424, %v496
    %v498 = vpop.f32.mrf.mxu0
    %499 = vdwg.mxu0
    %v500 = vmax.f32 %v497, 0.0
    %v501 = vld [vmem:[%s3] sm:$0xff]
    %v502 = vld [vmem:[%s3 + $0x8] sm:$0xff]
    %v503 = vld [vmem:[%s3 + $0x10] sm:$0xff]
    %v504 = vld [vmem:[%s3 + $0x18] sm:$0xff]
    %v505 = vld [vmem:[%s3 + $0x20] sm:$0xff]
    %v506 = vld [vmem:[%s3 + $0x28] sm:$0xff]
    %v507 = vld [vmem:[%s3 + $0x30] sm:$0xff]
    %v508 = vld [vmem:[%s3 + $0x38] sm:$0xff]
    %v509 = vld [vmem:[%s3 + $0x40] sm:$0xff]
    %v510 = vld [vmem:[%s3 + $0x48] sm:$0xff]
    %v511 = vld [vmem:[%s3 + $0x50] sm:$0xff]
    %v512 = vld [vmem:[%s3 + $0x58] sm:$0xff]
    %v513 = vld [vmem:[%s3 + $0x60] sm:$0xff]
    %v514 = vld [vmem:[%s3 + $0x68] sm:$0xff]
    %v515 = vld [vmem:[%s3 + $0x70] sm:$0xff]
    %v516 = vld [vmem:[%s3 + $0x78] sm:$0xff]
    %v517 = vld [vmem:[%s3 + $0x80] sm:$0xff]
    %v518 = vld [vmem:[%s3 + $0x88] sm:$0xff]
    %v519 = vld [vmem:[%s3 + $0x90] sm:$0xff]
    %v520 = vld [vmem:[%s3 + $0x98] sm:$0xff]
    %v521 = vld [vmem:[%s3 + $0xa0] sm:$0xff]
    %v522 = vld [vmem:[%s3 + $0xa8] sm:$0xff]
    %v523 = vld [vmem:[%s3 + $0xb0] sm:$0xff]
    %v524 = vld [vmem:[%s3 + $0xb8] sm:$0xff]
    %v525 = vld [vmem:[%s3 + $0xc0] sm:$0xff]
    %v526 = vld [vmem:[%s3 + $0xc8] sm:$0xff]
    %v527 = vld [vmem:[%s3 + $0xd0] sm:$0xff]
    %v528 = vld [vmem:[%s3 + $0xd8] sm:$0xff]
    %v529 = vld [vmem:[%s3 + $0xe0] sm:$0xff]
    %v530 = vld [vmem:[%s3 + $0xe8] sm:$0xff]
    %v531 = vld [vmem:[%s3 + $0xf0] sm:$0xff]
    %v532 = vld [vmem:[%s3 + $0xf8] sm:$0xff]
    %v533 = vld [vmem:[%s4] sm:$0x3]
    %v535 = vlaneseq
    %v536 = vshrl.u32 %v535, 7
    %v537 = vsub.s32 0, %v536
    %v538 = vrot.slane %v533, %v537
    %v539 = vlaneseq
    %v540 = vshrl.u32 %v539, 7
    %v541 = vsub.s32 1, %v540
    %v542 = vrot.slane %v533, %v541
    %v545 = vand.u32 %v532, 4294901760
    %546 = vmatprep.subr.mxu0 %v545
    %v547 = vand.u32 %v531, 4294901760
    %548 = vmatpush1.msra.mxu0 %v547
    %v549 = vand.u32 %v530, 4294901760
    %550 = vmatprep.subr.mxu0 %v549
    %v551 = vand.u32 %v529, 4294901760
    %552 = vmatpush1.msra.mxu0 %v551
    %v553 = vand.u32 %v528, 4294901760
    %554 = vmatprep.subr.mxu0 %v553
    %v555 = vand.u32 %v527, 4294901760
    %556 = vmatpush1.msra.mxu0 %v555
    %v557 = vand.u32 %v526, 4294901760
    %558 = vmatprep.subr.mxu0 %v557
    %v559 = vand.u32 %v525, 4294901760
    %560 = vmatpush1.msra.mxu0 %v559
    %v561 = vand.u32 %v524, 4294901760
    %562 = vmatprep.subr.mxu0 %v561
    %v563 = vand.u32 %v523, 4294901760
    %564 = vmatpush1.msra.mxu0 %v563
    %v565 = vand.u32 %v522, 4294901760
    %566 = vmatprep.subr.mxu0 %v565
    %v567 = vand.u32 %v521, 4294901760
    %568 = vmatpush1.msra.mxu0 %v567
    %v569 = vand.u32 %v520, 4294901760
    %570 = vmatprep.subr.mxu0 %v569
    %v571 = vand.u32 %v519, 4294901760
    %572 = vmatpush1.msra.mxu0 %v571
    %v573 = vand.u32 %v518, 4294901760
    %574 = vmatprep.subr.mxu0 %v573
    %v575 = vand.u32 %v517, 4294901760
    %576 = vmatpush1.msra.mxu0 %v575
    %v577 = vand.u32 %v516, 4294901760
    %578 = vmatprep.subr.mxu0 %v577
    %v579 = vand.u32 %v515, 4294901760
    %580 = vmatpush1.msra.mxu0 %v579
    %v581 = vand.u32 %v514, 4294901760
    %582 = vmatprep.subr.mxu0 %v581
    %v583 = vand.u32 %v513, 4294901760
    %584 = vmatpush1.msra.mxu0 %v583
    %v585 = vand.u32 %v512, 4294901760
    %586 = vmatprep.subr.mxu0 %v585
    %v587 = vand.u32 %v511, 4294901760
    %588 = vmatpush1.msra.mxu0 %v587
    %v589 = vand.u32 %v510, 4294901760
    %590 = vmatprep.subr.mxu0 %v589
    %v591 = vand.u32 %v509, 4294901760
    %592 = vmatpush1.msra.mxu0 %v591
    %v593 = vand.u32 %v508, 4294901760
    %594 = vmatprep.subr.mxu0 %v593
    %v595 = vand.u32 %v507, 4294901760
    %596 = vmatpush1.msra.mxu0 %v595
    %v597 = vand.u32 %v506, 4294901760
    %598 = vmatprep.subr.mxu0 %v597
    %v599 = vand.u32 %v505, 4294901760
    %600 = vmatpush1.msra.mxu0 %v599
    %v601 = vand.u32 %v504, 4294901760
    %602 = vmatprep.subr.mxu0 %v601
    %v603 = vand.u32 %v503, 4294901760
    %604 = vmatpush1.msra.mxu0 %v603
    %v605 = vand.u32 %v502, 4294901760
    %606 = vmatprep.subr.mxu0 %v605
    %v607 = vand.u32 %v501, 4294901760
    %608 = vmatpush1.msra.mxu0 %v607
    %609 = vmatprep.subr.mxu0 0.0
    %610 = vmatpush2.msra.mxu0 0.0
    %611 = vmatprep.subr.mxu0 0.0
    %612 = vmatpush2.msra.mxu0 0.0
    %613 = vmatprep.subr.mxu0 0.0
    %614 = vmatpush2.msra.mxu0 0.0
    %615 = vmatprep.subr.mxu0 0.0
    %616 = vmatpush2.msra.mxu0 0.0
    %617 = vmatprep.subr.mxu0 0.0
    %618 = vmatpush2.msra.mxu0 0.0
    %619 = vmatprep.subr.mxu0 0.0
    %620 = vmatpush2.msra.mxu0 0.0
    %621 = vmatprep.subr.mxu0 0.0
    %622 = vmatpush2.msra.mxu0 0.0
    %623 = vmatprep.subr.mxu0 0.0
    %624 = vmatpush2.msra.mxu0 0.0
    %625 = vmatprep.subr.mxu0 0.0
    %626 = vmatpush2.msra.mxu0 0.0
    %627 = vmatprep.subr.mxu0 0.0
    %628 = vmatpush2.msra.mxu0 0.0
    %629 = vmatprep.subr.mxu0 0.0
    %630 = vmatpush2.msra.mxu0 0.0
    %631 = vmatprep.subr.mxu0 0.0
    %632 = vmatpush2.msra.mxu0 0.0
    %633 = vmatprep.subr.mxu0 0.0
    %634 = vmatpush2.msra.mxu0 0.0
    %635 = vmatprep.subr.mxu0 0.0
    %636 = vmatpush2.msra.mxu0 0.0
    %637 = vmatprep.subr.mxu0 0.0
    %638 = vmatpush2.msra.mxu0 0.0
    %639 = vmatprep.subr.mxu0 0.0
    %640 = vmatpush2.msra.mxu0 0.0
    %641 = vmatprep.mubr.f32.mxu0 0.0
    %v642 = vand.u32 %v500, 4294901760
    %v643 = vsub.f32 %v500, %v642
    %v644 = vand.u32 %v643, 4294901760
    %v645 = vsub.f32 %v643, %v644
    %v646 = vand.u32 %v645, 4294901760
    %647 = vmatmul.mubr.f32.gmra.mxu0 %v646
    %v648 = vpop.f32.mrf.mxu0
    %v649 = vadd.f32 %v538, %v648
    %v650 = vpop.f32.mrf.mxu0
    %v651 = vadd.f32 %v542, %v650
    %652 = vdwg.mxu0
    %v653 = vand.u32 %v532, 4294901760
    %v654 = vsub.f32 %v532, %v653
    %v655 = vand.u32 %v654, 4294901760
    %v656 = vsub.f32 %v654, %v655
    %v657 = vand.u32 %v656, 4294901760
    %658 = vmatprep.subr.mxu0 %v657
    %v659 = vand.u32 %v531, 4294901760
    %v660 = vsub.f32 %v531, %v659
    %v661 = vand.u32 %v660, 4294901760
    %v662 = vsub.f32 %v660, %v661
    %v663 = vand.u32 %v662, 4294901760
    %664 = vmatpush1.msra.mxu0 %v663
    %v665 = vand.u32 %v530, 4294901760
    %v666 = vsub.f32 %v530, %v665
    %v667 = vand.u32 %v666, 4294901760
    %v668 = vsub.f32 %v666, %v667
    %v669 = vand.u32 %v668, 4294901760
    %670 = vmatprep.subr.mxu0 %v669
    %v671 = vand.u32 %v529, 4294901760
    %v672 = vsub.f32 %v529, %v671
    %v673 = vand.u32 %v672, 4294901760
    %v674 = vsub.f32 %v672, %v673
    %v675 = vand.u32 %v674, 4294901760
    %676 = vmatpush1.msra.mxu0 %v675
    %v677 = vand.u32 %v528, 4294901760
    %v678 = vsub.f32 %v528, %v677
    %v679 = vand.u32 %v678, 4294901760
    %v680 = vsub.f32 %v678, %v679
    %v681 = vand.u32 %v680, 4294901760
    %682 = vmatprep.subr.mxu0 %v681
    %v683 = vand.u32 %v527, 4294901760
    %v684 = vsub.f32 %v527, %v683
    %v685 = vand.u32 %v684, 4294901760
    %v686 = vsub.f32 %v684, %v685
    %v687 = vand.u32 %v686, 4294901760
    %688 = vmatpush1.msra.mxu0 %v687
    %v689 = vand.u32 %v526, 4294901760
    %v690 = vsub.f32 %v526, %v689
    %v691 = vand.u32 %v690, 4294901760
    %v692 = vsub.f32 %v690, %v691
    %v693 = vand.u32 %v692, 4294901760
    %694 = vmatprep.subr.mxu0 %v693
    %v695 = vand.u32 %v525, 4294901760
    %v696 = vsub.f32 %v525, %v695
    %v697 = vand.u32 %v696, 4294901760
    %v698 = vsub.f32 %v696, %v697
    %v699 = vand.u32 %v698, 4294901760
    %700 = vmatpush1.msra.mxu0 %v699
    %v701 = vand.u32 %v524, 4294901760
    %v702 = vsub.f32 %v524, %v701
    %v703 = vand.u32 %v702, 4294901760
    %v704 = vsub.f32 %v702, %v703
    %v705 = vand.u32 %v704, 4294901760
    %706 = vmatprep.subr.mxu0 %v705
    %v707 = vand.u32 %v523, 4294901760
    %v708 = vsub.f32 %v523, %v707
    %v709 = vand.u32 %v708, 4294901760
    %v710 = vsub.f32 %v708, %v709
    %v711 = vand.u32 %v710, 4294901760
    %712 = vmatpush1.msra.mxu0 %v711
    %v713 = vand.u32 %v522, 4294901760
    %v714 = vsub.f32 %v522, %v713
    %v715 = vand.u32 %v714, 4294901760
    %v716 = vsub.f32 %v714, %v715
    %v717 = vand.u32 %v716, 4294901760
    %718 = vmatprep.subr.mxu0 %v717
    %v719 = vand.u32 %v521, 4294901760
    %v720 = vsub.f32 %v521, %v719
    %v721 = vand.u32 %v720, 4294901760
    %v722 = vsub.f32 %v720, %v721
    %v723 = vand.u32 %v722, 4294901760
    %724 = vmatpush1.msra.mxu0 %v723
    %v725 = vand.u32 %v520, 4294901760
    %v726 = vsub.f32 %v520, %v725
    %v727 = vand.u32 %v726, 4294901760
    %v728 = vsub.f32 %v726, %v727
    %v729 = vand.u32 %v728, 4294901760
    %730 = vmatprep.subr.mxu0 %v729
    %v731 = vand.u32 %v519, 4294901760
    %v732 = vsub.f32 %v519, %v731
    %v733 = vand.u32 %v732, 4294901760
    %v734 = vsub.f32 %v732, %v733
    %v735 = vand.u32 %v734, 4294901760
    %736 = vmatpush1.msra.mxu0 %v735
    %v737 = vand.u32 %v518, 4294901760
    %v738 = vsub.f32 %v518, %v737
    %v739 = vand.u32 %v738, 4294901760
    %v740 = vsub.f32 %v738, %v739
    %v741 = vand.u32 %v740, 4294901760
    %742 = vmatprep.subr.mxu0 %v741
    %v743 = vand.u32 %v517, 4294901760
    %v744 = vsub.f32 %v517, %v743
    %v745 = vand.u32 %v744, 4294901760
    %v746 = vsub.f32 %v744, %v745
    %v747 = vand.u32 %v746, 4294901760
    %748 = vmatpush1.msra.mxu0 %v747
    %v749 = vand.u32 %v516, 4294901760
    %v750 = vsub.f32 %v516, %v749
    %v751 = vand.u32 %v750, 4294901760
    %v752 = vsub.f32 %v750, %v751
    %v753 = vand.u32 %v752, 4294901760
    %754 = vmatprep.subr.mxu0 %v753
    %v755 = vand.u32 %v515, 4294901760
    %v756 = vsub.f32 %v515, %v755
    %v757 = vand.u32 %v756, 4294901760
    %v758 = vsub.f32 %v756, %v757
    %v759 = vand.u32 %v758, 4294901760
    %760 = vmatpush1.msra.mxu0 %v759
    %v761 = vand.u32 %v514, 4294901760
    %v762 = vsub.f32 %v514, %v761
    %v763 = vand.u32 %v762, 4294901760
    %v764 = vsub.f32 %v762, %v763
    %v765 = vand.u32 %v764, 4294901760
    %766 = vmatprep.subr.mxu0 %v765
    %v767 = vand.u32 %v513, 4294901760
    %v768 = vsub.f32 %v513, %v767
    %v769 = vand.u32 %v768, 4294901760
    %v770 = vsub.f32 %v768, %v769
    %v771 = vand.u32 %v770, 4294901760
    %772 = vmatpush1.msra.mxu0 %v771
    %v773 = vand.u32 %v512, 4294901760
    %v774 = vsub.f32 %v512, %v773
    %v775 = vand.u32 %v774, 4294901760
    %v776 = vsub.f32 %v774, %v775
    %v777 = vand.u32 %v776, 4294901760
    %778 = vmatprep.subr.mxu0 %v777
    %v779 = vand.u32 %v511, 4294901760
    %v780 = vsub.f32 %v511, %v779
    %v781 = vand.u32 %v780, 4294901760
    %v782 = vsub.f32 %v780, %v781
    %v783 = vand.u32 %v782, 4294901760
    %784 = vmatpush1.msra.mxu0 %v783
    %v785 = vand.u32 %v510, 4294901760
    %v786 = vsub.f32 %v510, %v785
    %v787 = vand.u32 %v786, 4294901760
    %v788 = vsub.f32 %v786, %v787
    %v789 = vand.u32 %v788, 4294901760
    %790 = vmatprep.subr.mxu0 %v789
    %v791 = vand.u32 %v509, 4294901760
    %v792 = vsub.f32 %v509, %v791
    %v793 = vand.u32 %v792, 4294901760
    %v794 = vsub.f32 %v792, %v793
    %v795 = vand.u32 %v794, 4294901760
    %796 = vmatpush1.msra.mxu0 %v795
    %v797 = vand.u32 %v508, 4294901760
    %v798 = vsub.f32 %v508, %v797
    %v799 = vand.u32 %v798, 4294901760
    %v800 = vsub.f32 %v798, %v799
    %v801 = vand.u32 %v800, 4294901760
    %802 = vmatprep.subr.mxu0 %v801
    %v803 = vand.u32 %v507, 4294901760
    %v804 = vsub.f32 %v507, %v803
    %v805 = vand.u32 %v804, 4294901760
    %v806 = vsub.f32 %v804, %v805
    %v807 = vand.u32 %v806, 4294901760
    %808 = vmatpush1.msra.mxu0 %v807
    %v809 = vand.u32 %v506, 4294901760
    %v810 = vsub.f32 %v506, %v809
    %v811 = vand.u32 %v810, 4294901760
    %v812 = vsub.f32 %v810, %v811
    %v813 = vand.u32 %v812, 4294901760
    %814 = vmatprep.subr.mxu0 %v813
    %v815 = vand.u32 %v505, 4294901760
    %v816 = vsub.f32 %v505, %v815
    %v817 = vand.u32 %v816, 4294901760
    %v818 = vsub.f32 %v816, %v817
    %v819 = vand.u32 %v818, 4294901760
    %820 = vmatpush1.msra.mxu0 %v819
    %v821 = vand.u32 %v504, 4294901760
    %v822 = vsub.f32 %v504, %v821
    %v823 = vand.u32 %v822, 4294901760
    %v824 = vsub.f32 %v822, %v823
    %v825 = vand.u32 %v824, 4294901760
    %826 = vmatprep.subr.mxu0 %v825
    %v827 = vand.u32 %v503, 4294901760
    %v828 = vsub.f32 %v503, %v827
    %v829 = vand.u32 %v828, 4294901760
    %v830 = vsub.f32 %v828, %v829
    %v831 = vand.u32 %v830, 4294901760
    %832 = vmatpush1.msra.mxu0 %v831
    %v833 = vand.u32 %v502, 4294901760
    %v834 = vsub.f32 %v502, %v833
    %v835 = vand.u32 %v834, 4294901760
    %v836 = vsub.f32 %v834, %v835
    %v837 = vand.u32 %v836, 4294901760
    %838 = vmatprep.subr.mxu0 %v837
    %v839 = vand.u32 %v501, 4294901760
    %v840 = vsub.f32 %v501, %v839
    %v841 = vand.u32 %v840, 4294901760
    %v842 = vsub.f32 %v840, %v841
    %v843 = vand.u32 %v842, 4294901760
    %844 = vmatpush1.msra.mxu0 %v843
    %845 = vmatprep.subr.mxu0 0.0
    %846 = vmatpush2.msra.mxu0 0.0
    %847 = vmatprep.subr.mxu0 0.0
    %848 = vmatpush2.msra.mxu0 0.0
    %849 = vmatprep.subr.mxu0 0.0
    %850 = vmatpush2.msra.mxu0 0.0
    %851 = vmatprep.subr.mxu0 0.0
    %852 = vmatpush2.msra.mxu0 0.0
    %853 = vmatprep.subr.mxu0 0.0
    %854 = vmatpush2.msra.mxu0 0.0
    %855 = vmatprep.subr.mxu0 0.0
    %856 = vmatpush2.msra.mxu0 0.0
    %857 = vmatprep.subr.mxu0 0.0
    %858 = vmatpush2.msra.mxu0 0.0
    %859 = vmatprep.subr.mxu0 0.0
    %860 = vmatpush2.msra.mxu0 0.0
    %861 = vmatprep.subr.mxu0 0.0
    %862 = vmatpush2.msra.mxu0 0.0
    %863 = vmatprep.subr.mxu0 0.0
    %864 = vmatpush2.msra.mxu0 0.0
    %865 = vmatprep.subr.mxu0 0.0
    %866 = vmatpush2.msra.mxu0 0.0
    %867 = vmatprep.subr.mxu0 0.0
    %868 = vmatpush2.msra.mxu0 0.0
    %869 = vmatprep.subr.mxu0 0.0
    %870 = vmatpush2.msra.mxu0 0.0
    %871 = vmatprep.subr.mxu0 0.0
    %872 = vmatpush2.msra.mxu0 0.0
    %873 = vmatprep.subr.mxu0 0.0
    %874 = vmatpush2.msra.mxu0 0.0
    %875 = vmatprep.subr.mxu0 0.0
    %876 = vmatpush2.msra.mxu0 0.0
    %877 = vmatprep.mubr.f32.mxu0 0.0
    %v878 = vand.u32 %v500, 4294901760
    %879 = vmatmul.mubr.f32.gmra.mxu0 %v878
    %v880 = vpop.f32.mrf.mxu0
    %v881 = vadd.f32 %v649, %v880
    %v882 = vpop.f32.mrf.mxu0
    %v883 = vadd.f32 %v651, %v882
    %884 = vdwg.mxu0
    %v885 = vand.u32 %v532, 4294901760
    %v886 = vsub.f32 %v532, %v885
    %887 = vmatprep.subr.mxu0 %v886
    %v888 = vand.u32 %v531, 4294901760
    %v889 = vsub.f32 %v531, %v888
    %890 = vmatpush1.msra.mxu0 %v889
    %v891 = vand.u32 %v530, 4294901760
    %v892 = vsub.f32 %v530, %v891
    %893 = vmatprep.subr.mxu0 %v892
    %v894 = vand.u32 %v529, 4294901760
    %v895 = vsub.f32 %v529, %v894
    %896 = vmatpush1.msra.mxu0 %v895
    %v897 = vand.u32 %v528, 4294901760
    %v898 = vsub.f32 %v528, %v897
    %899 = vmatprep.subr.mxu0 %v898
    %v900 = vand.u32 %v527, 4294901760
    %v901 = vsub.f32 %v527, %v900
    %902 = vmatpush1.msra.mxu0 %v901
    %v903 = vand.u32 %v526, 4294901760
    %v904 = vsub.f32 %v526, %v903
    %905 = vmatprep.subr.mxu0 %v904
    %v906 = vand.u32 %v525, 4294901760
    %v907 = vsub.f32 %v525, %v906
    %908 = vmatpush1.msra.mxu0 %v907
    %v909 = vand.u32 %v524, 4294901760
    %v910 = vsub.f32 %v524, %v909
    %911 = vmatprep.subr.mxu0 %v910
    %v912 = vand.u32 %v523, 4294901760
    %v913 = vsub.f32 %v523, %v912
    %914 = vmatpush1.msra.mxu0 %v913
    %v915 = vand.u32 %v522, 4294901760
    %v916 = vsub.f32 %v522, %v915
    %917 = vmatprep.subr.mxu0 %v916
    %v918 = vand.u32 %v521, 4294901760
    %v919 = vsub.f32 %v521, %v918
    %920 = vmatpush1.msra.mxu0 %v919
    %v921 = vand.u32 %v520, 4294901760
    %v922 = vsub.f32 %v520, %v921
    %923 = vmatprep.subr.mxu0 %v922
    %v924 = vand.u32 %v519, 4294901760
    %v925 = vsub.f32 %v519, %v924
    %926 = vmatpush1.msra.mxu0 %v925
    %v927 = vand.u32 %v518, 4294901760
    %v928 = vsub.f32 %v518, %v927
    %929 = vmatprep.subr.mxu0 %v928
    %v930 = vand.u32 %v517, 4294901760
    %v931 = vsub.f32 %v517, %v930
    %932 = vmatpush1.msra.mxu0 %v931
    %v933 = vand.u32 %v516, 4294901760
    %v934 = vsub.f32 %v516, %v933
    %935 = vmatprep.subr.mxu0 %v934
    %v936 = vand.u32 %v515, 4294901760
    %v937 = vsub.f32 %v515, %v936
    %938 = vmatpush1.msra.mxu0 %v937
    %v939 = vand.u32 %v514, 4294901760
    %v940 = vsub.f32 %v514, %v939
    %941 = vmatprep.subr.mxu0 %v940
    %v942 = vand.u32 %v513, 4294901760
    %v943 = vsub.f32 %v513, %v942
    %944 = vmatpush1.msra.mxu0 %v943
    %v945 = vand.u32 %v512, 4294901760
    %v946 = vsub.f32 %v512, %v945
    %947 = vmatprep.subr.mxu0 %v946
    %v948 = vand.u32 %v511, 4294901760
    %v949 = vsub.f32 %v511, %v948
    %950 = vmatpush1.msra.mxu0 %v949
    %v951 = vand.u32 %v510, 4294901760
    %v952 = vsub.f32 %v510, %v951
    %953 = vmatprep.subr.mxu0 %v952
    %v954 = vand.u32 %v509, 4294901760
    %v955 = vsub.f32 %v509, %v954
    %956 = vmatpush1.msra.mxu0 %v955
    %v957 = vand.u32 %v508, 4294901760
    %v958 = vsub.f32 %v508, %v957
    %959 = vmatprep.subr.mxu0 %v958
    %v960 = vand.u32 %v507, 4294901760
    %v961 = vsub.f32 %v507, %v960
    %962 = vmatpush1.msra.mxu0 %v961
    %v963 = vand.u32 %v506, 4294901760
    %v964 = vsub.f32 %v506, %v963
    %965 = vmatprep.subr.mxu0 %v964
    %v966 = vand.u32 %v505, 4294901760
    %v967 = vsub.f32 %v505, %v966
    %968 = vmatpush1.msra.mxu0 %v967
    %v969 = vand.u32 %v504, 4294901760
    %v970 = vsub.f32 %v504, %v969
    %971 = vmatprep.subr.mxu0 %v970
    %v972 = vand.u32 %v503, 4294901760
    %v973 = vsub.f32 %v503, %v972
    %974 = vmatpush1.msra.mxu0 %v973
    %v975 = vand.u32 %v502, 4294901760
    %v976 = vsub.f32 %v502, %v975
    %977 = vmatprep.subr.mxu0 %v976
    %v978 = vand.u32 %v501, 4294901760
    %v979 = vsub.f32 %v501, %v978
    %980 = vmatpush1.msra.mxu0 %v979
    %981 = vmatprep.subr.mxu0 0.0
    %982 = vmatpush2.msra.mxu0 0.0
    %983 = vmatprep.subr.mxu0 0.0
    %984 = vmatpush2.msra.mxu0 0.0
    %985 = vmatprep.subr.mxu0 0.0
    %986 = vmatpush2.msra.mxu0 0.0
    %987 = vmatprep.subr.mxu0 0.0
    %988 = vmatpush2.msra.mxu0 0.0
    %989 = vmatprep.subr.mxu0 0.0
    %990 = vmatpush2.msra.mxu0 0.0
    %991 = vmatprep.subr.mxu0 0.0
    %992 = vmatpush2.msra.mxu0 0.0
    %993 = vmatprep.subr.mxu0 0.0
    %994 = vmatpush2.msra.mxu0 0.0
    %995 = vmatprep.subr.mxu0 0.0
    %996 = vmatpush2.msra.mxu0 0.0
    %997 = vmatprep.subr.mxu0 0.0
    %998 = vmatpush2.msra.mxu0 0.0
    %999 = vmatprep.subr.mxu0 0.0
    %1000 = vmatpush2.msra.mxu0 0.0
    %1001 = vmatprep.subr.mxu0 0.0
    %1002 = vmatpush2.msra.mxu0 0.0
    %1003 = vmatprep.subr.mxu0 0.0
    %1004 = vmatpush2.msra.mxu0 0.0
    %1005 = vmatprep.subr.mxu0 0.0
    %1006 = vmatpush2.msra.mxu0 0.0
    %1007 = vmatprep.subr.mxu0 0.0
    %1008 = vmatpush2.msra.mxu0 0.0
    %1009 = vmatprep.subr.mxu0 0.0
    %1010 = vmatpush2.msra.mxu0 0.0
    %1011 = vmatprep.subr.mxu0 0.0
    %1012 = vmatpush2.msra.mxu0 0.0
    %1013 = vmatprep.mubr.f32.mxu0 0.0
    %v1014 = vand.u32 %v500, 4294901760
    %v1015 = vsub.f32 %v500, %v1014
    %1016 = vmatmul.mubr.f32.gmra.mxu0 %v1015
    %v1017 = vpop.f32.mrf.mxu0
    %v1018 = vadd.f32 %v881, %v1017
    %v1019 = vpop.f32.mrf.mxu0
    %v1020 = vadd.f32 %v883, %v1019
    %1021 = vdwg.mxu0
    %v1022 = vand.u32 %v532, 4294901760
    %1023 = vmatprep.subr.mxu0 %v1022
    %v1024 = vand.u32 %v531, 4294901760
    %1025 = vmatpush1.msra.mxu0 %v1024
    %v1026 = vand.u32 %v530, 4294901760
    %1027 = vmatprep.subr.mxu0 %v1026
    %v1028 = vand.u32 %v529, 4294901760
    %1029 = vmatpush1.msra.mxu0 %v1028
    %v1030 = vand.u32 %v528, 4294901760
    %1031 = vmatprep.subr.mxu0 %v1030
    %v1032 = vand.u32 %v527, 4294901760
    %1033 = vmatpush1.msra.mxu0 %v1032
    %v1034 = vand.u32 %v526, 4294901760
    %1035 = vmatprep.subr.mxu0 %v1034
    %v1036 = vand.u32 %v525, 4294901760
    %1037 = vmatpush1.msra.mxu0 %v1036
    %v1038 = vand.u32 %v524, 4294901760
    %1039 = vmatprep.subr.mxu0 %v1038
    %v1040 = vand.u32 %v523, 4294901760
    %1041 = vmatpush1.msra.mxu0 %v1040
    %v1042 = vand.u32 %v522, 4294901760
    %1043 = vmatprep.subr.mxu0 %v1042
    %v1044 = vand.u32 %v521, 4294901760
    %1045 = vmatpush1.msra.mxu0 %v1044
    %v1046 = vand.u32 %v520, 4294901760
    %1047 = vmatprep.subr.mxu0 %v1046
    %v1048 = vand.u32 %v519, 4294901760
    %1049 = vmatpush1.msra.mxu0 %v1048
    %v1050 = vand.u32 %v518, 4294901760
    %1051 = vmatprep.subr.mxu0 %v1050
    %v1052 = vand.u32 %v517, 4294901760
    %1053 = vmatpush1.msra.mxu0 %v1052
    %v1054 = vand.u32 %v516, 4294901760
    %1055 = vmatprep.subr.mxu0 %v1054
    %v1056 = vand.u32 %v515, 4294901760
    %1057 = vmatpush1.msra.mxu0 %v1056
    %v1058 = vand.u32 %v514, 4294901760
    %1059 = vmatprep.subr.mxu0 %v1058
    %v1060 = vand.u32 %v513, 4294901760
    %1061 = vmatpush1.msra.mxu0 %v1060
    %v1062 = vand.u32 %v512, 4294901760
    %1063 = vmatprep.subr.mxu0 %v1062
    %v1064 = vand.u32 %v511, 4294901760
    %1065 = vmatpush1.msra.mxu0 %v1064
    %v1066 = vand.u32 %v510, 4294901760
    %1067 = vmatprep.subr.mxu0 %v1066
    %v1068 = vand.u32 %v509, 4294901760
    %1069 = vmatpush1.msra.mxu0 %v1068
    %v1070 = vand.u32 %v508, 4294901760
    %1071 = vmatprep.subr.mxu0 %v1070
    %v1072 = vand.u32 %v507, 4294901760
    %1073 = vmatpush1.msra.mxu0 %v1072
    %v1074 = vand.u32 %v506, 4294901760
    %1075 = vmatprep.subr.mxu0 %v1074
    %v1076 = vand.u32 %v505, 4294901760
    %1077 = vmatpush1.msra.mxu0 %v1076
    %v1078 = vand.u32 %v504, 4294901760
    %1079 = vmatprep.subr.mxu0 %v1078
    %v1080 = vand.u32 %v503, 4294901760
    %1081 = vmatpush1.msra.mxu0 %v1080
    %v1082 = vand.u32 %v502, 4294901760
    %1083 = vmatprep.subr.mxu0 %v1082
    %v1084 = vand.u32 %v501, 4294901760
    %1085 = vmatpush1.msra.mxu0 %v1084
    %1086 = vmatprep.subr.mxu0 0.0
    %1087 = vmatpush2.msra.mxu0 0.0
    %1088 = vmatprep.subr.mxu0 0.0
    %1089 = vmatpush2.msra.mxu0 0.0
    %1090 = vmatprep.subr.mxu0 0.0
    %1091 = vmatpush2.msra.mxu0 0.0
    %1092 = vmatprep.subr.mxu0 0.0
    %1093 = vmatpush2.msra.mxu0 0.0
    %1094 = vmatprep.subr.mxu0 0.0
    %1095 = vmatpush2.msra.mxu0 0.0
    %1096 = vmatprep.subr.mxu0 0.0
    %1097 = vmatpush2.msra.mxu0 0.0
    %1098 = vmatprep.subr.mxu0 0.0
    %1099 = vmatpush2.msra.mxu0 0.0
    %1100 = vmatprep.subr.mxu0 0.0
    %1101 = vmatpush2.msra.mxu0 0.0
    %1102 = vmatprep.subr.mxu0 0.0
    %1103 = vmatpush2.msra.mxu0 0.0
    %1104 = vmatprep.subr.mxu0 0.0
    %1105 = vmatpush2.msra.mxu0 0.0
    %1106 = vmatprep.subr.mxu0 0.0
    %1107 = vmatpush2.msra.mxu0 0.0
    %1108 = vmatprep.subr.mxu0 0.0
    %1109 = vmatpush2.msra.mxu0 0.0
    %1110 = vmatprep.subr.mxu0 0.0
    %1111 = vmatpush2.msra.mxu0 0.0
    %1112 = vmatprep.subr.mxu0 0.0
    %1113 = vmatpush2.msra.mxu0 0.0
    %1114 = vmatprep.subr.mxu0 0.0
    %1115 = vmatpush2.msra.mxu0 0.0
    %1116 = vmatprep.subr.mxu0 0.0
    %1117 = vmatpush2.msra.mxu0 0.0
    %1118 = vmatprep.mubr.f32.mxu0 0.0
    %v1119 = vand.u32 %v500, 4294901760
    %v1120 = vsub.f32 %v500, %v1119
    %v1121 = vand.u32 %v1120, 4294901760
    %1122 = vmatmul.mubr.f32.gmra.mxu0 %v1121
    %v1123 = vpop.f32.mrf.mxu0
    %v1124 = vadd.f32 %v1018, %v1123
    %v1125 = vpop.f32.mrf.mxu0
    %v1126 = vadd.f32 %v1020, %v1125
    %1127 = vdwg.mxu0
    %v1128 = vand.u32 %v532, 4294901760
    %v1129 = vsub.f32 %v532, %v1128
    %v1130 = vand.u32 %v1129, 4294901760
    %1131 = vmatprep.subr.mxu0 %v1130
    %v1132 = vand.u32 %v531, 4294901760
    %v1133 = vsub.f32 %v531, %v1132
    %v1134 = vand.u32 %v1133, 4294901760
    %1135 = vmatpush1.msra.mxu0 %v1134
    %v1136 = vand.u32 %v530, 4294901760
    %v1137 = vsub.f32 %v530, %v1136
    %v1138 = vand.u32 %v1137, 4294901760
    %1139 = vmatprep.subr.mxu0 %v1138
    %v1140 = vand.u32 %v529, 4294901760
    %v1141 = vsub.f32 %v529, %v1140
    %v1142 = vand.u32 %v1141, 4294901760
    %1143 = vmatpush1.msra.mxu0 %v1142
    %v1144 = vand.u32 %v528, 4294901760
    %v1145 = vsub.f32 %v528, %v1144
    %v1146 = vand.u32 %v1145, 4294901760
    %1147 = vmatprep.subr.mxu0 %v1146
    %v1148 = vand.u32 %v527, 4294901760
    %v1149 = vsub.f32 %v527, %v1148
    %v1150 = vand.u32 %v1149, 4294901760
    %1151 = vmatpush1.msra.mxu0 %v1150
    %v1152 = vand.u32 %v526, 4294901760
    %v1153 = vsub.f32 %v526, %v1152
    %v1154 = vand.u32 %v1153, 4294901760
    %1155 = vmatprep.subr.mxu0 %v1154
    %v1156 = vand.u32 %v525, 4294901760
    %v1157 = vsub.f32 %v525, %v1156
    %v1158 = vand.u32 %v1157, 4294901760
    %1159 = vmatpush1.msra.mxu0 %v1158
    %v1160 = vand.u32 %v524, 4294901760
    %v1161 = vsub.f32 %v524, %v1160
    %v1162 = vand.u32 %v1161, 4294901760
    %1163 = vmatprep.subr.mxu0 %v1162
    %v1164 = vand.u32 %v523, 4294901760
    %v1165 = vsub.f32 %v523, %v1164
    %v1166 = vand.u32 %v1165, 4294901760
    %1167 = vmatpush1.msra.mxu0 %v1166
    %v1168 = vand.u32 %v522, 4294901760
    %v1169 = vsub.f32 %v522, %v1168
    %v1170 = vand.u32 %v1169, 4294901760
    %1171 = vmatprep.subr.mxu0 %v1170
    %v1172 = vand.u32 %v521, 4294901760
    %v1173 = vsub.f32 %v521, %v1172
    %v1174 = vand.u32 %v1173, 4294901760
    %1175 = vmatpush1.msra.mxu0 %v1174
    %v1176 = vand.u32 %v520, 4294901760
    %v1177 = vsub.f32 %v520, %v1176
    %v1178 = vand.u32 %v1177, 4294901760
    %1179 = vmatprep.subr.mxu0 %v1178
    %v1180 = vand.u32 %v519, 4294901760
    %v1181 = vsub.f32 %v519, %v1180
    %v1182 = vand.u32 %v1181, 4294901760
    %1183 = vmatpush1.msra.mxu0 %v1182
    %v1184 = vand.u32 %v518, 4294901760
    %v1185 = vsub.f32 %v518, %v1184
    %v1186 = vand.u32 %v1185, 4294901760
    %1187 = vmatprep.subr.mxu0 %v1186
    %v1188 = vand.u32 %v517, 4294901760
    %v1189 = vsub.f32 %v517, %v1188
    %v1190 = vand.u32 %v1189, 4294901760
    %1191 = vmatpush1.msra.mxu0 %v1190
    %v1192 = vand.u32 %v516, 4294901760
    %v1193 = vsub.f32 %v516, %v1192
    %v1194 = vand.u32 %v1193, 4294901760
    %1195 = vmatprep.subr.mxu0 %v1194
    %v1196 = vand.u32 %v515, 4294901760
    %v1197 = vsub.f32 %v515, %v1196
    %v1198 = vand.u32 %v1197, 4294901760
    %1199 = vmatpush1.msra.mxu0 %v1198
    %v1200 = vand.u32 %v514, 4294901760
    %v1201 = vsub.f32 %v514, %v1200
    %v1202 = vand.u32 %v1201, 4294901760
    %1203 = vmatprep.subr.mxu0 %v1202
    %v1204 = vand.u32 %v513, 4294901760
    %v1205 = vsub.f32 %v513, %v1204
    %v1206 = vand.u32 %v1205, 4294901760
    %1207 = vmatpush1.msra.mxu0 %v1206
    %v1208 = vand.u32 %v512, 4294901760
    %v1209 = vsub.f32 %v512, %v1208
    %v1210 = vand.u32 %v1209, 4294901760
    %1211 = vmatprep.subr.mxu0 %v1210
    %v1212 = vand.u32 %v511, 4294901760
    %v1213 = vsub.f32 %v511, %v1212
    %v1214 = vand.u32 %v1213, 4294901760
    %1215 = vmatpush1.msra.mxu0 %v1214
    %v1216 = vand.u32 %v510, 4294901760
    %v1217 = vsub.f32 %v510, %v1216
    %v1218 = vand.u32 %v1217, 4294901760
    %1219 = vmatprep.subr.mxu0 %v1218
    %v1220 = vand.u32 %v509, 4294901760
    %v1221 = vsub.f32 %v509, %v1220
    %v1222 = vand.u32 %v1221, 4294901760
    %1223 = vmatpush1.msra.mxu0 %v1222
    %v1224 = vand.u32 %v508, 4294901760
    %v1225 = vsub.f32 %v508, %v1224
    %v1226 = vand.u32 %v1225, 4294901760
    %1227 = vmatprep.subr.mxu0 %v1226
    %v1228 = vand.u32 %v507, 4294901760
    %v1229 = vsub.f32 %v507, %v1228
    %v1230 = vand.u32 %v1229, 4294901760
    %1231 = vmatpush1.msra.mxu0 %v1230
    %v1232 = vand.u32 %v506, 4294901760
    %v1233 = vsub.f32 %v506, %v1232
    %v1234 = vand.u32 %v1233, 4294901760
    %1235 = vmatprep.subr.mxu0 %v1234
    %v1236 = vand.u32 %v505, 4294901760
    %v1237 = vsub.f32 %v505, %v1236
    %v1238 = vand.u32 %v1237, 4294901760
    %1239 = vmatpush1.msra.mxu0 %v1238
    %v1240 = vand.u32 %v504, 4294901760
    %v1241 = vsub.f32 %v504, %v1240
    %v1242 = vand.u32 %v1241, 4294901760
    %1243 = vmatprep.subr.mxu0 %v1242
    %v1244 = vand.u32 %v503, 4294901760
    %v1245 = vsub.f32 %v503, %v1244
    %v1246 = vand.u32 %v1245, 4294901760
    %1247 = vmatpush1.msra.mxu0 %v1246
    %v1248 = vand.u32 %v502, 4294901760
    %v1249 = vsub.f32 %v502, %v1248
    %v1250 = vand.u32 %v1249, 4294901760
    %1251 = vmatprep.subr.mxu0 %v1250
    %v1252 = vand.u32 %v501, 4294901760
    %v1253 = vsub.f32 %v501, %v1252
    %v1254 = vand.u32 %v1253, 4294901760
    %1255 = vmatpush1.msra.mxu0 %v1254
    %1256 = vmatprep.subr.mxu0 0.0
    %1257 = vmatpush2.msra.mxu0 0.0
    %1258 = vmatprep.subr.mxu0 0.0
    %1259 = vmatpush2.msra.mxu0 0.0
    %1260 = vmatprep.subr.mxu0 0.0
    %1261 = vmatpush2.msra.mxu0 0.0
    %1262 = vmatprep.subr.mxu0 0.0
    %1263 = vmatpush2.msra.mxu0 0.0
    %1264 = vmatprep.subr.mxu0 0.0
    %1265 = vmatpush2.msra.mxu0 0.0
    %1266 = vmatprep.subr.mxu0 0.0
    %1267 = vmatpush2.msra.mxu0 0.0
    %1268 = vmatprep.subr.mxu0 0.0
    %1269 = vmatpush2.msra.mxu0 0.0
    %1270 = vmatprep.subr.mxu0 0.0
    %1271 = vmatpush2.msra.mxu0 0.0
    %1272 = vmatprep.subr.mxu0 0.0
    %1273 = vmatpush2.msra.mxu0 0.0
    %1274 = vmatprep.subr.mxu0 0.0
    %1275 = vmatpush2.msra.mxu0 0.0
    %1276 = vmatprep.subr.mxu0 0.0
    %1277 = vmatpush2.msra.mxu0 0.0
    %1278 = vmatprep.subr.mxu0 0.0
    %1279 = vmatpush2.msra.mxu0 0.0
    %1280 = vmatprep.subr.mxu0 0.0
    %1281 = vmatpush2.msra.mxu0 0.0
    %1282 = vmatprep.subr.mxu0 0.0
    %1283 = vmatpush2.msra.mxu0 0.0
    %1284 = vmatprep.subr.mxu0 0.0
    %1285 = vmatpush2.msra.mxu0 0.0
    %1286 = vmatprep.subr.mxu0 0.0
    %1287 = vmatpush2.msra.mxu0 0.0
    %1288 = vmatprep.mubr.f32.mxu0 0.0
    %v1289 = vand.u32 %v500, 4294901760
    %1290 = vmatmul.mubr.f32.gmra.mxu0 %v1289
    %v1291 = vpop.f32.mrf.mxu0
    %v1292 = vadd.f32 %v1124, %v1291
    %v1293 = vpop.f32.mrf.mxu0
    %v1294 = vadd.f32 %v1126, %v1293
    %1295 = vdwg.mxu0
    %v1296 = vand.u32 %v532, 4294901760
    %1297 = vmatprep.subr.mxu0 %v1296
    %v1298 = vand.u32 %v531, 4294901760
    %1299 = vmatpush1.msra.mxu0 %v1298
    %v1300 = vand.u32 %v530, 4294901760
    %1301 = vmatprep.subr.mxu0 %v1300
    %v1302 = vand.u32 %v529, 4294901760
    %1303 = vmatpush1.msra.mxu0 %v1302
    %v1304 = vand.u32 %v528, 4294901760
    %1305 = vmatprep.subr.mxu0 %v1304
    %v1306 = vand.u32 %v527, 4294901760
    %1307 = vmatpush1.msra.mxu0 %v1306
    %v1308 = vand.u32 %v526, 4294901760
    %1309 = vmatprep.subr.mxu0 %v1308
    %v1310 = vand.u32 %v525, 4294901760
    %1311 = vmatpush1.msra.mxu0 %v1310
    %v1312 = vand.u32 %v524, 4294901760
    %1313 = vmatprep.subr.mxu0 %v1312
    %v1314 = vand.u32 %v523, 4294901760
    %1315 = vmatpush1.msra.mxu0 %v1314
    %v1316 = vand.u32 %v522, 4294901760
    %1317 = vmatprep.subr.mxu0 %v1316
    %v1318 = vand.u32 %v521, 4294901760
    %1319 = vmatpush1.msra.mxu0 %v1318
    %v1320 = vand.u32 %v520, 4294901760
    %1321 = vmatprep.subr.mxu0 %v1320
    %v1322 = vand.u32 %v519, 4294901760
    %1323 = vmatpush1.msra.mxu0 %v1322
    %v1324 = vand.u32 %v518, 4294901760
    %1325 = vmatprep.subr.mxu0 %v1324
    %v1326 = vand.u32 %v517, 4294901760
    %1327 = vmatpush1.msra.mxu0 %v1326
    %v1328 = vand.u32 %v516, 4294901760
    %1329 = vmatprep.subr.mxu0 %v1328
    %v1330 = vand.u32 %v515, 4294901760
    %1331 = vmatpush1.msra.mxu0 %v1330
    %v1332 = vand.u32 %v514, 4294901760
    %1333 = vmatprep.subr.mxu0 %v1332
    %v1334 = vand.u32 %v513, 4294901760
    %1335 = vmatpush1.msra.mxu0 %v1334
    %v1336 = vand.u32 %v512, 4294901760
    %1337 = vmatprep.subr.mxu0 %v1336
    %v1338 = vand.u32 %v511, 4294901760
    %1339 = vmatpush1.msra.mxu0 %v1338
    %v1340 = vand.u32 %v510, 4294901760
    %1341 = vmatprep.subr.mxu0 %v1340
    %v1342 = vand.u32 %v509, 4294901760
    %1343 = vmatpush1.msra.mxu0 %v1342
    %v1344 = vand.u32 %v508, 4294901760
    %1345 = vmatprep.subr.mxu0 %v1344
    %v1346 = vand.u32 %v507, 4294901760
    %1347 = vmatpush1.msra.mxu0 %v1346
    %v1348 = vand.u32 %v506, 4294901760
    %1349 = vmatprep.subr.mxu0 %v1348
    %v1350 = vand.u32 %v505, 4294901760
    %1351 = vmatpush1.msra.mxu0 %v1350
    %v1352 = vand.u32 %v504, 4294901760
    %1353 = vmatprep.subr.mxu0 %v1352
    %v1354 = vand.u32 %v503, 4294901760
    %1355 = vmatpush1.msra.mxu0 %v1354
    %v1356 = vand.u32 %v502, 4294901760
    %1357 = vmatprep.subr.mxu0 %v1356
    %v1358 = vand.u32 %v501, 4294901760
    %1359 = vmatpush1.msra.mxu0 %v1358
    %1360 = vmatprep.subr.mxu0 0.0
    %1361 = vmatpush2.msra.mxu0 0.0
    %1362 = vmatprep.subr.mxu0 0.0
    %1363 = vmatpush2.msra.mxu0 0.0
    %1364 = vmatprep.subr.mxu0 0.0
    %1365 = vmatpush2.msra.mxu0 0.0
    %1366 = vmatprep.subr.mxu0 0.0
    %1367 = vmatpush2.msra.mxu0 0.0
    %1368 = vmatprep.subr.mxu0 0.0
    %1369 = vmatpush2.msra.mxu0 0.0
    %1370 = vmatprep.subr.mxu0 0.0
    %1371 = vmatpush2.msra.mxu0 0.0
    %1372 = vmatprep.subr.mxu0 0.0
    %1373 = vmatpush2.msra.mxu0 0.0
    %1374 = vmatprep.subr.mxu0 0.0
    %1375 = vmatpush2.msra.mxu0 0.0
    %1376 = vmatprep.subr.mxu0 0.0
    %1377 = vmatpush2.msra.mxu0 0.0
    %1378 = vmatprep.subr.mxu0 0.0
    %1379 = vmatpush2.msra.mxu0 0.0
    %1380 = vmatprep.subr.mxu0 0.0
    %1381 = vmatpush2.msra.mxu0 0.0
    %1382 = vmatprep.subr.mxu0 0.0
    %1383 = vmatpush2.msra.mxu0 0.0
    %1384 = vmatprep.subr.mxu0 0.0
    %1385 = vmatpush2.msra.mxu0 0.0
    %1386 = vmatprep.subr.mxu0 0.0
    %1387 = vmatpush2.msra.mxu0 0.0
    %1388 = vmatprep.subr.mxu0 0.0
    %1389 = vmatpush2.msra.mxu0 0.0
    %1390 = vmatprep.subr.mxu0 0.0
    %1391 = vmatpush2.msra.mxu0 0.0
    %1392 = vmatprep.mubr.f32.mxu0 0.0
    %v1393 = vand.u32 %v500, 4294901760
    %1394 = vmatmul.mubr.f32.gmra.mxu0 %v1393
    %v1395 = vpop.f32.mrf.mxu0
    %v1396 = vadd.f32 %v1292, %v1395
    %v1397 = vpop.f32.mrf.mxu0
    %v1398 = vadd.f32 %v1294, %v1397
    %1399 = vdwg.mxu0
    %v1400 = vmax.f32 %v1396, 0.0
    %v1401 = vmax.f32 %v1398, 0.0
    %v1402 = vld [vmem:[%s5] sm:$0xff]
    %v1403 = vld [vmem:[%s5 + $0x8] sm:$0xff]
    %v1404 = vld [vmem:[%s5 + $0x10] sm:$0xff]
    %v1405 = vld [vmem:[%s5 + $0x18] sm:$0xff]
    %v1406 = vld [vmem:[%s5 + $0x20] sm:$0xff]
    %v1407 = vld [vmem:[%s5 + $0x28] sm:$0xff]
    %v1408 = vld [vmem:[%s5 + $0x30] sm:$0xff]
    %v1409 = vld [vmem:[%s5 + $0x38] sm:$0xff]
    %v1410 = vld [vmem:[%s5 + $0x40] sm:$0xff]
    %v1411 = vld [vmem:[%s5 + $0x48] sm:$0xff]
    %v1412 = vld [vmem:[%s5 + $0x50] sm:$0xff]
    %v1413 = vld [vmem:[%s5 + $0x58] sm:$0xff]
    %v1414 = vld [vmem:[%s5 + $0x60] sm:$0xff]
    %v1415 = vld [vmem:[%s5 + $0x68] sm:$0xff]
    %v1416 = vld [vmem:[%s5 + $0x70] sm:$0xff]
    %v1417 = vld [vmem:[%s5 + $0x78] sm:$0xff]
    %v1418 = vld [vmem:[%s5 + $0x80] sm:$0xff]
    %v1419 = vld [vmem:[%s5 + $0x88] sm:$0xff]
    %v1420 = vld [vmem:[%s5 + $0x90] sm:$0xff]
    %v1421 = vld [vmem:[%s5 + $0x98] sm:$0xff]
    %v1422 = vld [vmem:[%s5 + $0xa0] sm:$0xff]
    %v1423 = vld [vmem:[%s5 + $0xa8] sm:$0xff]
    %v1424 = vld [vmem:[%s5 + $0xb0] sm:$0xff]
    %v1425 = vld [vmem:[%s5 + $0xb8] sm:$0xff]
    %v1426 = vld [vmem:[%s5 + $0xc0] sm:$0xff]
    %v1427 = vld [vmem:[%s5 + $0xc8] sm:$0xff]
    %v1428 = vld [vmem:[%s5 + $0xd0] sm:$0xff]
    %v1429 = vld [vmem:[%s5 + $0xd8] sm:$0xff]
    %v1430 = vld [vmem:[%s5 + $0xe0] sm:$0xff]
    %v1431 = vld [vmem:[%s5 + $0xe8] sm:$0xff]
    %v1432 = vld [vmem:[%s5 + $0xf0] sm:$0xff]
    %v1433 = vld [vmem:[%s5 + $0xf8] sm:$0xff]
    %v1434 = vld [vmem:[%s5 + $0x100] sm:$0xff]
    %v1435 = vld [vmem:[%s5 + $0x108] sm:$0xff]
    %v1436 = vld [vmem:[%s5 + $0x110] sm:$0xff]
    %v1437 = vld [vmem:[%s5 + $0x118] sm:$0xff]
    %v1438 = vld [vmem:[%s5 + $0x120] sm:$0xff]
    %v1439 = vld [vmem:[%s5 + $0x128] sm:$0xff]
    %v1440 = vld [vmem:[%s5 + $0x130] sm:$0xff]
    %v1441 = vld [vmem:[%s5 + $0x138] sm:$0xff]
    %v1442 = vld [vmem:[%s5 + $0x140] sm:$0xff]
    %v1443 = vld [vmem:[%s5 + $0x148] sm:$0xff]
    %v1444 = vld [vmem:[%s5 + $0x150] sm:$0xff]
    %v1445 = vld [vmem:[%s5 + $0x158] sm:$0xff]
    %v1446 = vld [vmem:[%s5 + $0x160] sm:$0xff]
    %v1447 = vld [vmem:[%s5 + $0x168] sm:$0xff]
    %v1448 = vld [vmem:[%s5 + $0x170] sm:$0xff]
    %v1449 = vld [vmem:[%s5 + $0x178] sm:$0xff]
    %v1450 = vld [vmem:[%s5 + $0x180] sm:$0xff]
    %v1451 = vld [vmem:[%s5 + $0x188] sm:$0xff]
    %v1452 = vld [vmem:[%s5 + $0x190] sm:$0xff]
    %v1453 = vld [vmem:[%s5 + $0x198] sm:$0xff]
    %v1454 = vld [vmem:[%s5 + $0x1a0] sm:$0xff]
    %v1455 = vld [vmem:[%s5 + $0x1a8] sm:$0xff]
    %v1456 = vld [vmem:[%s5 + $0x1b0] sm:$0xff]
    %v1457 = vld [vmem:[%s5 + $0x1b8] sm:$0xff]
    %v1458 = vld [vmem:[%s5 + $0x1c0] sm:$0xff]
    %v1459 = vld [vmem:[%s5 + $0x1c8] sm:$0xff]
    %v1460 = vld [vmem:[%s5 + $0x1d0] sm:$0xff]
    %v1461 = vld [vmem:[%s5 + $0x1d8] sm:$0xff]
    %v1462 = vld [vmem:[%s5 + $0x1e0] sm:$0xff]
    %v1463 = vld [vmem:[%s5 + $0x1e8] sm:$0xff]
    %v1464 = vld [vmem:[%s5 + $0x1f0] sm:$0xff]
    %v1465 = vld [vmem:[%s5 + $0x1f8] sm:$0xff]
    %v1466 = vld [vmem:[%s5 + $0x200] sm:$0xff]
    %v1467 = vld [vmem:[%s5 + $0x208] sm:$0xff]
    %v1468 = vld [vmem:[%s5 + $0x210] sm:$0xff]
    %v1469 = vld [vmem:[%s5 + $0x218] sm:$0xff]
    %v1470 = vld [vmem:[%s5 + $0x220] sm:$0xff]
    %v1471 = vld [vmem:[%s5 + $0x228] sm:$0xff]
    %v1472 = vld [vmem:[%s5 + $0x230] sm:$0xff]
    %v1473 = vld [vmem:[%s5 + $0x238] sm:$0xff]
    %v1474 = vld [vmem:[%s5 + $0x240] sm:$0xff]
    %v1475 = vld [vmem:[%s5 + $0x248] sm:$0xff]
    %v1476 = vld [vmem:[%s5 + $0x250] sm:$0xff]
    %v1477 = vld [vmem:[%s5 + $0x258] sm:$0xff]
    %v1478 = vld [vmem:[%s5 + $0x260] sm:$0xff]
    %v1479 = vld [vmem:[%s5 + $0x268] sm:$0xff]
    %v1480 = vld [vmem:[%s5 + $0x270] sm:$0xff]
    %v1481 = vld [vmem:[%s5 + $0x278] sm:$0xff]
    %v1482 = vld [vmem:[%s5 + $0x280] sm:$0xff]
    %v1483 = vld [vmem:[%s5 + $0x288] sm:$0xff]
    %v1484 = vld [vmem:[%s5 + $0x290] sm:$0xff]
    %v1485 = vld [vmem:[%s5 + $0x298] sm:$0xff]
    %v1486 = vld [vmem:[%s5 + $0x2a0] sm:$0xff]
    %v1487 = vld [vmem:[%s5 + $0x2a8] sm:$0xff]
    %v1488 = vld [vmem:[%s5 + $0x2b0] sm:$0xff]
    %v1489 = vld [vmem:[%s5 + $0x2b8] sm:$0xff]
    %v1490 = vld [vmem:[%s5 + $0x2c0] sm:$0xff]
    %v1491 = vld [vmem:[%s5 + $0x2c8] sm:$0xff]
    %v1492 = vld [vmem:[%s5 + $0x2d0] sm:$0xff]
    %v1493 = vld [vmem:[%s5 + $0x2d8] sm:$0xff]
    %v1494 = vld [vmem:[%s5 + $0x2e0] sm:$0xff]
    %v1495 = vld [vmem:[%s5 + $0x2e8] sm:$0xff]
    %v1496 = vld [vmem:[%s5 + $0x2f0] sm:$0xff]
    %v1497 = vld [vmem:[%s5 + $0x2f8] sm:$0xff]
    %v1498 = vld [vmem:[%s5 + $0x300] sm:$0xff]
    %v1499 = vld [vmem:[%s5 + $0x308] sm:$0xff]
    %v1500 = vld [vmem:[%s5 + $0x310] sm:$0xff]
    %v1501 = vld [vmem:[%s5 + $0x318] sm:$0xff]
    %v1502 = vld [vmem:[%s5 + $0x320] sm:$0xff]
    %v1503 = vld [vmem:[%s5 + $0x328] sm:$0xff]
    %v1504 = vld [vmem:[%s5 + $0x330] sm:$0xff]
    %v1505 = vld [vmem:[%s5 + $0x338] sm:$0xff]
    %v1506 = vld [vmem:[%s5 + $0x340] sm:$0xff]
    %v1507 = vld [vmem:[%s5 + $0x348] sm:$0xff]
    %v1508 = vld [vmem:[%s5 + $0x350] sm:$0xff]
    %v1509 = vld [vmem:[%s5 + $0x358] sm:$0xff]
    %v1510 = vld [vmem:[%s5 + $0x360] sm:$0xff]
    %v1511 = vld [vmem:[%s5 + $0x368] sm:$0xff]
    %v1512 = vld [vmem:[%s5 + $0x370] sm:$0xff]
    %v1513 = vld [vmem:[%s5 + $0x378] sm:$0xff]
    %v1514 = vld [vmem:[%s5 + $0x380] sm:$0xff]
    %v1515 = vld [vmem:[%s5 + $0x388] sm:$0xff]
    %v1516 = vld [vmem:[%s5 + $0x390] sm:$0xff]
    %v1517 = vld [vmem:[%s5 + $0x398] sm:$0xff]
    %v1518 = vld [vmem:[%s5 + $0x3a0] sm:$0xff]
    %v1519 = vld [vmem:[%s5 + $0x3a8] sm:$0xff]
    %v1520 = vld [vmem:[%s5 + $0x3b0] sm:$0xff]
    %v1521 = vld [vmem:[%s5 + $0x3b8] sm:$0xff]
    %v1522 = vld [vmem:[%s5 + $0x3c0] sm:$0xff]
    %v1523 = vld [vmem:[%s5 + $0x3c8] sm:$0xff]
    %v1524 = vld [vmem:[%s5 + $0x3d0] sm:$0xff]
    %v1525 = vld [vmem:[%s5 + $0x3d8] sm:$0xff]
    %v1526 = vld [vmem:[%s5 + $0x3e0] sm:$0xff]
    %v1527 = vld [vmem:[%s5 + $0x3e8] sm:$0xff]
    %v1528 = vld [vmem:[%s5 + $0x3f0] sm:$0xff]
    %v1529 = vld [vmem:[%s5 + $0x3f8] sm:$0xff]
    %v1530 = vld [vmem:[%s5 + $0x400] sm:$0xff]
    %v1531 = vld [vmem:[%s5 + $0x408] sm:$0xff]
    %v1532 = vld [vmem:[%s5 + $0x410] sm:$0xff]
    %v1533 = vld [vmem:[%s5 + $0x418] sm:$0xff]
    %v1534 = vld [vmem:[%s5 + $0x420] sm:$0xff]
    %v1535 = vld [vmem:[%s5 + $0x428] sm:$0xff]
    %v1536 = vld [vmem:[%s5 + $0x430] sm:$0xff]
    %v1537 = vld [vmem:[%s5 + $0x438] sm:$0xff]
    %v1538 = vld [vmem:[%s5 + $0x440] sm:$0xff]
    %v1539 = vld [vmem:[%s5 + $0x448] sm:$0xff]
    %v1540 = vld [vmem:[%s5 + $0x450] sm:$0xff]
    %v1541 = vld [vmem:[%s5 + $0x458] sm:$0xff]
    %v1542 = vld [vmem:[%s5 + $0x460] sm:$0xff]
    %v1543 = vld [vmem:[%s5 + $0x468] sm:$0xff]
    %v1544 = vld [vmem:[%s5 + $0x470] sm:$0xff]
    %v1545 = vld [vmem:[%s5 + $0x478] sm:$0xff]
    %v1546 = vld [vmem:[%s5 + $0x480] sm:$0xff]
    %v1547 = vld [vmem:[%s5 + $0x488] sm:$0xff]
    %v1548 = vld [vmem:[%s5 + $0x490] sm:$0xff]
    %v1549 = vld [vmem:[%s5 + $0x498] sm:$0xff]
    %v1550 = vld [vmem:[%s5 + $0x4a0] sm:$0xff]
    %v1551 = vld [vmem:[%s5 + $0x4a8] sm:$0xff]
    %v1552 = vld [vmem:[%s5 + $0x4b0] sm:$0xff]
    %v1553 = vld [vmem:[%s5 + $0x4b8] sm:$0xff]
    %v1554 = vld [vmem:[%s5 + $0x4c0] sm:$0xff]
    %v1555 = vld [vmem:[%s5 + $0x4c8] sm:$0xff]
    %v1556 = vld [vmem:[%s5 + $0x4d0] sm:$0xff]
    %v1557 = vld [vmem:[%s5 + $0x4d8] sm:$0xff]
    %v1558 = vld [vmem:[%s5 + $0x4e0] sm:$0xff]
    %v1559 = vld [vmem:[%s5 + $0x4e8] sm:$0xff]
    %v1560 = vld [vmem:[%s5 + $0x4f0] sm:$0xff]
    %v1561 = vld [vmem:[%s5 + $0x4f8] sm:$0xff]
    %v1562 = vld [vmem:[%s6] sm:$0x1f]
    %v1564 = vlaneseq
    %v1565 = vshrl.u32 %v1564, 7
    %v1566 = vsub.s32 0, %v1565
    %v1567 = vrot.slane %v1562, %v1566
    %v1568 = vlaneseq
    %v1569 = vshrl.u32 %v1568, 7
    %v1570 = vsub.s32 1, %v1569
    %v1571 = vrot.slane %v1562, %v1570
    %v1572 = vlaneseq
    %v1573 = vshrl.u32 %v1572, 7
    %v1574 = vsub.s32 2, %v1573
    %v1575 = vrot.slane %v1562, %v1574
    %v1576 = vlaneseq
    %v1577 = vshrl.u32 %v1576, 7
    %v1578 = vsub.s32 3, %v1577
    %v1579 = vrot.slane %v1562, %v1578
    %v1580 = vlaneseq
    %v1581 = vshrl.u32 %v1580, 7
    %v1582 = vsub.s32 4, %v1581
    %v1583 = vrot.slane %v1562, %v1582
    %v1589 = vand.u32 %v1478, 4294901760
    %1590 = vmatprep.subr.mxu0 %v1589
    %v1591 = vand.u32 %v1477, 4294901760
    %1592 = vmatpush1.msra.mxu0 %v1591
    %v1593 = vand.u32 %v1473, 4294901760
    %1594 = vmatprep.subr.mxu0 %v1593
    %v1595 = vand.u32 %v1472, 4294901760
    %1596 = vmatpush1.msra.mxu0 %v1595
    %v1597 = vand.u32 %v1468, 4294901760
    %1598 = vmatprep.subr.mxu0 %v1597
    %v1599 = vand.u32 %v1467, 4294901760
    %1600 = vmatpush1.msra.mxu0 %v1599
    %v1601 = vand.u32 %v1463, 4294901760
    %1602 = vmatprep.subr.mxu0 %v1601
    %v1603 = vand.u32 %v1462, 4294901760
    %1604 = vmatpush1.msra.mxu0 %v1603
    %v1605 = vand.u32 %v1458, 4294901760
    %1606 = vmatprep.subr.mxu0 %v1605
    %v1607 = vand.u32 %v1457, 4294901760
    %1608 = vmatpush1.msra.mxu0 %v1607
    %v1609 = vand.u32 %v1453, 4294901760
    %1610 = vmatprep.subr.mxu0 %v1609
    %v1611 = vand.u32 %v1452, 4294901760
    %1612 = vmatpush1.msra.mxu0 %v1611
    %v1613 = vand.u32 %v1448, 4294901760
    %1614 = vmatprep.subr.mxu0 %v1613
    %v1615 = vand.u32 %v1447, 4294901760
    %1616 = vmatpush1.msra.mxu0 %v1615
    %v1617 = vand.u32 %v1443, 4294901760
    %1618 = vmatprep.subr.mxu0 %v1617
    %v1619 = vand.u32 %v1442, 4294901760
    %1620 = vmatpush1.msra.mxu0 %v1619
    %v1621 = vand.u32 %v1438, 4294901760
    %1622 = vmatprep.subr.mxu0 %v1621
    %v1623 = vand.u32 %v1437, 4294901760
    %1624 = vmatpush1.msra.mxu0 %v1623
    %v1625 = vand.u32 %v1433, 4294901760
    %1626 = vmatprep.subr.mxu0 %v1625
    %v1627 = vand.u32 %v1432, 4294901760
    %1628 = vmatpush1.msra.mxu0 %v1627
    %v1629 = vand.u32 %v1428, 4294901760
    %1630 = vmatprep.subr.mxu0 %v1629
    %v1631 = vand.u32 %v1427, 4294901760
    %1632 = vmatpush1.msra.mxu0 %v1631
    %v1633 = vand.u32 %v1423, 4294901760
    %1634 = vmatprep.subr.mxu0 %v1633
    %v1635 = vand.u32 %v1422, 4294901760
    %1636 = vmatpush1.msra.mxu0 %v1635
    %v1637 = vand.u32 %v1418, 4294901760
    %1638 = vmatprep.subr.mxu0 %v1637
    %v1639 = vand.u32 %v1417, 4294901760
    %1640 = vmatpush1.msra.mxu0 %v1639
    %v1641 = vand.u32 %v1413, 4294901760
    %1642 = vmatprep.subr.mxu0 %v1641
    %v1643 = vand.u32 %v1412, 4294901760
    %1644 = vmatpush1.msra.mxu0 %v1643
    %v1645 = vand.u32 %v1408, 4294901760
    %1646 = vmatprep.subr.mxu0 %v1645
    %v1647 = vand.u32 %v1407, 4294901760
    %1648 = vmatpush1.msra.mxu0 %v1647
    %v1649 = vand.u32 %v1403, 4294901760
    %1650 = vmatprep.subr.mxu0 %v1649
    %v1651 = vand.u32 %v1402, 4294901760
    %1652 = vmatpush1.msra.mxu0 %v1651
    %v1653 = vand.u32 %v1558, 4294901760
    %1654 = vmatprep.subr.mxu0 %v1653
    %v1655 = vand.u32 %v1557, 4294901760
    %1656 = vmatpush2.msra.mxu0 %v1655
    %v1657 = vand.u32 %v1553, 4294901760
    %1658 = vmatprep.subr.mxu0 %v1657
    %v1659 = vand.u32 %v1552, 4294901760
    %1660 = vmatpush2.msra.mxu0 %v1659
    %v1661 = vand.u32 %v1548, 4294901760
    %1662 = vmatprep.subr.mxu0 %v1661
    %v1663 = vand.u32 %v1547, 4294901760
    %1664 = vmatpush2.msra.mxu0 %v1663
    %v1665 = vand.u32 %v1543, 4294901760
    %1666 = vmatprep.subr.mxu0 %v1665
    %v1667 = vand.u32 %v1542, 4294901760
    %1668 = vmatpush2.msra.mxu0 %v1667
    %v1669 = vand.u32 %v1538, 4294901760
    %1670 = vmatprep.subr.mxu0 %v1669
    %v1671 = vand.u32 %v1537, 4294901760
    %1672 = vmatpush2.msra.mxu0 %v1671
    %v1673 = vand.u32 %v1533, 4294901760
    %1674 = vmatprep.subr.mxu0 %v1673
    %v1675 = vand.u32 %v1532, 4294901760
    %1676 = vmatpush2.msra.mxu0 %v1675
    %v1677 = vand.u32 %v1528, 4294901760
    %1678 = vmatprep.subr.mxu0 %v1677
    %v1679 = vand.u32 %v1527, 4294901760
    %1680 = vmatpush2.msra.mxu0 %v1679
    %v1681 = vand.u32 %v1523, 4294901760
    %1682 = vmatprep.subr.mxu0 %v1681
    %v1683 = vand.u32 %v1522, 4294901760
    %1684 = vmatpush2.msra.mxu0 %v1683
    %v1685 = vand.u32 %v1518, 4294901760
    %1686 = vmatprep.subr.mxu0 %v1685
    %v1687 = vand.u32 %v1517, 4294901760
    %1688 = vmatpush2.msra.mxu0 %v1687
    %v1689 = vand.u32 %v1513, 4294901760
    %1690 = vmatprep.subr.mxu0 %v1689
    %v1691 = vand.u32 %v1512, 4294901760
    %1692 = vmatpush2.msra.mxu0 %v1691
    %v1693 = vand.u32 %v1508, 4294901760
    %1694 = vmatprep.subr.mxu0 %v1693
    %v1695 = vand.u32 %v1507, 4294901760
    %1696 = vmatpush2.msra.mxu0 %v1695
    %v1697 = vand.u32 %v1503, 4294901760
    %1698 = vmatprep.subr.mxu0 %v1697
    %v1699 = vand.u32 %v1502, 4294901760
    %1700 = vmatpush2.msra.mxu0 %v1699
    %v1701 = vand.u32 %v1498, 4294901760
    %1702 = vmatprep.subr.mxu0 %v1701
    %v1703 = vand.u32 %v1497, 4294901760
    %1704 = vmatpush2.msra.mxu0 %v1703
    %v1705 = vand.u32 %v1493, 4294901760
    %1706 = vmatprep.subr.mxu0 %v1705
    %v1707 = vand.u32 %v1492, 4294901760
    %1708 = vmatpush2.msra.mxu0 %v1707
    %v1709 = vand.u32 %v1488, 4294901760
    %1710 = vmatprep.subr.mxu0 %v1709
    %v1711 = vand.u32 %v1487, 4294901760
    %1712 = vmatpush2.msra.mxu0 %v1711
    %v1713 = vand.u32 %v1483, 4294901760
    %1714 = vmatprep.subr.mxu0 %v1713
    %v1715 = vand.u32 %v1482, 4294901760
    %1716 = vmatpush2.msra.mxu0 %v1715
    %v1717 = vand.u32 %v1401, 4294901760
    %v1718 = vsub.f32 %v1401, %v1717
    %v1719 = vand.u32 %v1718, 4294901760
    %v1720 = vsub.f32 %v1718, %v1719
    %v1721 = vand.u32 %v1720, 4294901760
    %1722 = vmatprep.mubr.f32.mxu0 %v1721
    %v1723 = vand.u32 %v1400, 4294901760
    %v1724 = vsub.f32 %v1400, %v1723
    %v1725 = vand.u32 %v1724, 4294901760
    %v1726 = vsub.f32 %v1724, %v1725
    %v1727 = vand.u32 %v1726, 4294901760
    %1728 = vmatmul.mubr.f32.gmra.mxu0 %v1727
    %v1729 = vpop.f32.mrf.mxu0
    %v1730 = vadd.f32 %v1567, %v1729
    %v1731 = vpop.f32.mrf.mxu0
    %v1732 = vadd.f32 %v1571, %v1731
    %1733 = vdwg.mxu0
    %v1734 = vand.u32 %v1478, 4294901760
    %v1735 = vsub.f32 %v1478, %v1734
    %v1736 = vand.u32 %v1735, 4294901760
    %v1737 = vsub.f32 %v1735, %v1736
    %v1738 = vand.u32 %v1737, 4294901760
    %1739 = vmatprep.subr.mxu0 %v1738
    %v1740 = vand.u32 %v1477, 4294901760
    %v1741 = vsub.f32 %v1477, %v1740
    %v1742 = vand.u32 %v1741, 4294901760
    %v1743 = vsub.f32 %v1741, %v1742
    %v1744 = vand.u32 %v1743, 4294901760
    %1745 = vmatpush1.msra.mxu0 %v1744
    %v1746 = vand.u32 %v1473, 4294901760
    %v1747 = vsub.f32 %v1473, %v1746
    %v1748 = vand.u32 %v1747, 4294901760
    %v1749 = vsub.f32 %v1747, %v1748
    %v1750 = vand.u32 %v1749, 4294901760
    %1751 = vmatprep.subr.mxu0 %v1750
    %v1752 = vand.u32 %v1472, 4294901760
    %v1753 = vsub.f32 %v1472, %v1752
    %v1754 = vand.u32 %v1753, 4294901760
    %v1755 = vsub.f32 %v1753, %v1754
    %v1756 = vand.u32 %v1755, 4294901760
    %1757 = vmatpush1.msra.mxu0 %v1756
    %v1758 = vand.u32 %v1468, 4294901760
    %v1759 = vsub.f32 %v1468, %v1758
    %v1760 = vand.u32 %v1759, 4294901760
    %v1761 = vsub.f32 %v1759, %v1760
    %v1762 = vand.u32 %v1761, 4294901760
    %1763 = vmatprep.subr.mxu0 %v1762
    %v1764 = vand.u32 %v1467, 4294901760
    %v1765 = vsub.f32 %v1467, %v1764
    %v1766 = vand.u32 %v1765, 4294901760
    %v1767 = vsub.f32 %v1765, %v1766
    %v1768 = vand.u32 %v1767, 4294901760
    %1769 = vmatpush1.msra.mxu0 %v1768
    %v1770 = vand.u32 %v1463, 4294901760
    %v1771 = vsub.f32 %v1463, %v1770
    %v1772 = vand.u32 %v1771, 4294901760
    %v1773 = vsub.f32 %v1771, %v1772
    %v1774 = vand.u32 %v1773, 4294901760
    %1775 = vmatprep.subr.mxu0 %v1774
    %v1776 = vand.u32 %v1462, 4294901760
    %v1777 = vsub.f32 %v1462, %v1776
    %v1778 = vand.u32 %v1777, 4294901760
    %v1779 = vsub.f32 %v1777, %v1778
    %v1780 = vand.u32 %v1779, 4294901760
    %1781 = vmatpush1.msra.mxu0 %v1780
    %v1782 = vand.u32 %v1458, 4294901760
    %v1783 = vsub.f32 %v1458, %v1782
    %v1784 = vand.u32 %v1783, 4294901760
    %v1785 = vsub.f32 %v1783, %v1784
    %v1786 = vand.u32 %v1785, 4294901760
    %1787 = vmatprep.subr.mxu0 %v1786
    %v1788 = vand.u32 %v1457, 4294901760
    %v1789 = vsub.f32 %v1457, %v1788
    %v1790 = vand.u32 %v1789, 4294901760
    %v1791 = vsub.f32 %v1789, %v1790
    %v1792 = vand.u32 %v1791, 4294901760
    %1793 = vmatpush1.msra.mxu0 %v1792
    %v1794 = vand.u32 %v1453, 4294901760
    %v1795 = vsub.f32 %v1453, %v1794
    %v1796 = vand.u32 %v1795, 4294901760
    %v1797 = vsub.f32 %v1795, %v1796
    %v1798 = vand.u32 %v1797, 4294901760
    %1799 = vmatprep.subr.mxu0 %v1798
    %v1800 = vand.u32 %v1452, 4294901760
    %v1801 = vsub.f32 %v1452, %v1800
    %v1802 = vand.u32 %v1801, 4294901760
    %v1803 = vsub.f32 %v1801, %v1802
    %v1804 = vand.u32 %v1803, 4294901760
    %1805 = vmatpush1.msra.mxu0 %v1804
    %v1806 = vand.u32 %v1448, 4294901760
    %v1807 = vsub.f32 %v1448, %v1806
    %v1808 = vand.u32 %v1807, 4294901760
    %v1809 = vsub.f32 %v1807, %v1808
    %v1810 = vand.u32 %v1809, 4294901760
    %1811 = vmatprep.subr.mxu0 %v1810
    %v1812 = vand.u32 %v1447, 4294901760
    %v1813 = vsub.f32 %v1447, %v1812
    %v1814 = vand.u32 %v1813, 4294901760
    %v1815 = vsub.f32 %v1813, %v1814
    %v1816 = vand.u32 %v1815, 4294901760
    %1817 = vmatpush1.msra.mxu0 %v1816
    %v1818 = vand.u32 %v1443, 4294901760
    %v1819 = vsub.f32 %v1443, %v1818
    %v1820 = vand.u32 %v1819, 4294901760
    %v1821 = vsub.f32 %v1819, %v1820
    %v1822 = vand.u32 %v1821, 4294901760
    %1823 = vmatprep.subr.mxu0 %v1822
    %v1824 = vand.u32 %v1442, 4294901760
    %v1825 = vsub.f32 %v1442, %v1824
    %v1826 = vand.u32 %v1825, 4294901760
    %v1827 = vsub.f32 %v1825, %v1826
    %v1828 = vand.u32 %v1827, 4294901760
    %1829 = vmatpush1.msra.mxu0 %v1828
    %v1830 = vand.u32 %v1438, 4294901760
    %v1831 = vsub.f32 %v1438, %v1830
    %v1832 = vand.u32 %v1831, 4294901760
    %v1833 = vsub.f32 %v1831, %v1832
    %v1834 = vand.u32 %v1833, 4294901760
    %1835 = vmatprep.subr.mxu0 %v1834
    %v1836 = vand.u32 %v1437, 4294901760
    %v1837 = vsub.f32 %v1437, %v1836
    %v1838 = vand.u32 %v1837, 4294901760
    %v1839 = vsub.f32 %v1837, %v1838
    %v1840 = vand.u32 %v1839, 4294901760
    %1841 = vmatpush1.msra.mxu0 %v1840
    %v1842 = vand.u32 %v1433, 4294901760
    %v1843 = vsub.f32 %v1433, %v1842
    %v1844 = vand.u32 %v1843, 4294901760
    %v1845 = vsub.f32 %v1843, %v1844
    %v1846 = vand.u32 %v1845, 4294901760
    %1847 = vmatprep.subr.mxu0 %v1846
    %v1848 = vand.u32 %v1432, 4294901760
    %v1849 = vsub.f32 %v1432, %v1848
    %v1850 = vand.u32 %v1849, 4294901760
    %v1851 = vsub.f32 %v1849, %v1850
    %v1852 = vand.u32 %v1851, 4294901760
    %1853 = vmatpush1.msra.mxu0 %v1852
    %v1854 = vand.u32 %v1428, 4294901760
    %v1855 = vsub.f32 %v1428, %v1854
    %v1856 = vand.u32 %v1855, 4294901760
    %v1857 = vsub.f32 %v1855, %v1856
    %v1858 = vand.u32 %v1857, 4294901760
    %1859 = vmatprep.subr.mxu0 %v1858
    %v1860 = vand.u32 %v1427, 4294901760
    %v1861 = vsub.f32 %v1427, %v1860
    %v1862 = vand.u32 %v1861, 4294901760
    %v1863 = vsub.f32 %v1861, %v1862
    %v1864 = vand.u32 %v1863, 4294901760
    %1865 = vmatpush1.msra.mxu0 %v1864
    %v1866 = vand.u32 %v1423, 4294901760
    %v1867 = vsub.f32 %v1423, %v1866
    %v1868 = vand.u32 %v1867, 4294901760
    %v1869 = vsub.f32 %v1867, %v1868
    %v1870 = vand.u32 %v1869, 4294901760
    %1871 = vmatprep.subr.mxu0 %v1870
    %v1872 = vand.u32 %v1422, 4294901760
    %v1873 = vsub.f32 %v1422, %v1872
    %v1874 = vand.u32 %v1873, 4294901760
    %v1875 = vsub.f32 %v1873, %v1874
    %v1876 = vand.u32 %v1875, 4294901760
    %1877 = vmatpush1.msra.mxu0 %v1876
    %v1878 = vand.u32 %v1418, 4294901760
    %v1879 = vsub.f32 %v1418, %v1878
    %v1880 = vand.u32 %v1879, 4294901760
    %v1881 = vsub.f32 %v1879, %v1880
    %v1882 = vand.u32 %v1881, 4294901760
    %1883 = vmatprep.subr.mxu0 %v1882
    %v1884 = vand.u32 %v1417, 4294901760
    %v1885 = vsub.f32 %v1417, %v1884
    %v1886 = vand.u32 %v1885, 4294901760
    %v1887 = vsub.f32 %v1885, %v1886
    %v1888 = vand.u32 %v1887, 4294901760
    %1889 = vmatpush1.msra.mxu0 %v1888
    %v1890 = vand.u32 %v1413, 4294901760
    %v1891 = vsub.f32 %v1413, %v1890
    %v1892 = vand.u32 %v1891, 4294901760
    %v1893 = vsub.f32 %v1891, %v1892
    %v1894 = vand.u32 %v1893, 4294901760
    %1895 = vmatprep.subr.mxu0 %v1894
    %v1896 = vand.u32 %v1412, 4294901760
    %v1897 = vsub.f32 %v1412, %v1896
    %v1898 = vand.u32 %v1897, 4294901760
    %v1899 = vsub.f32 %v1897, %v1898
    %v1900 = vand.u32 %v1899, 4294901760
    %1901 = vmatpush1.msra.mxu0 %v1900
    %v1902 = vand.u32 %v1408, 4294901760
    %v1903 = vsub.f32 %v1408, %v1902
    %v1904 = vand.u32 %v1903, 4294901760
    %v1905 = vsub.f32 %v1903, %v1904
    %v1906 = vand.u32 %v1905, 4294901760
    %1907 = vmatprep.subr.mxu0 %v1906
    %v1908 = vand.u32 %v1407, 4294901760
    %v1909 = vsub.f32 %v1407, %v1908
    %v1910 = vand.u32 %v1909, 4294901760
    %v1911 = vsub.f32 %v1909, %v1910
    %v1912 = vand.u32 %v1911, 4294901760
    %1913 = vmatpush1.msra.mxu0 %v1912
    %v1914 = vand.u32 %v1403, 4294901760
    %v1915 = vsub.f32 %v1403, %v1914
    %v1916 = vand.u32 %v1915, 4294901760
    %v1917 = vsub.f32 %v1915, %v1916
    %v1918 = vand.u32 %v1917, 4294901760
    %1919 = vmatprep.subr.mxu0 %v1918
    %v1920 = vand.u32 %v1402, 4294901760
    %v1921 = vsub.f32 %v1402, %v1920
    %v1922 = vand.u32 %v1921, 4294901760
    %v1923 = vsub.f32 %v1921, %v1922
    %v1924 = vand.u32 %v1923, 4294901760
    %1925 = vmatpush1.msra.mxu0 %v1924
    %v1926 = vand.u32 %v1558, 4294901760
    %v1927 = vsub.f32 %v1558, %v1926
    %v1928 = vand.u32 %v1927, 4294901760
    %v1929 = vsub.f32 %v1927, %v1928
    %v1930 = vand.u32 %v1929, 4294901760
    %1931 = vmatprep.subr.mxu0 %v1930
    %v1932 = vand.u32 %v1557, 4294901760
    %v1933 = vsub.f32 %v1557, %v1932
    %v1934 = vand.u32 %v1933, 4294901760
    %v1935 = vsub.f32 %v1933, %v1934
    %v1936 = vand.u32 %v1935, 4294901760
    %1937 = vmatpush2.msra.mxu0 %v1936
    %v1938 = vand.u32 %v1553, 4294901760
    %v1939 = vsub.f32 %v1553, %v1938
    %v1940 = vand.u32 %v1939, 4294901760
    %v1941 = vsub.f32 %v1939, %v1940
    %v1942 = vand.u32 %v1941, 4294901760
    %1943 = vmatprep.subr.mxu0 %v1942
    %v1944 = vand.u32 %v1552, 4294901760
    %v1945 = vsub.f32 %v1552, %v1944
    %v1946 = vand.u32 %v1945, 4294901760
    %v1947 = vsub.f32 %v1945, %v1946
    %v1948 = vand.u32 %v1947, 4294901760
    %1949 = vmatpush2.msra.mxu0 %v1948
    %v1950 = vand.u32 %v1548, 4294901760
    %v1951 = vsub.f32 %v1548, %v1950
    %v1952 = vand.u32 %v1951, 4294901760
    %v1953 = vsub.f32 %v1951, %v1952
    %v1954 = vand.u32 %v1953, 4294901760
    %1955 = vmatprep.subr.mxu0 %v1954
    %v1956 = vand.u32 %v1547, 4294901760
    %v1957 = vsub.f32 %v1547, %v1956
    %v1958 = vand.u32 %v1957, 4294901760
    %v1959 = vsub.f32 %v1957, %v1958
    %v1960 = vand.u32 %v1959, 4294901760
    %1961 = vmatpush2.msra.mxu0 %v1960
    %v1962 = vand.u32 %v1543, 4294901760
    %v1963 = vsub.f32 %v1543, %v1962
    %v1964 = vand.u32 %v1963, 4294901760
    %v1965 = vsub.f32 %v1963, %v1964
    %v1966 = vand.u32 %v1965, 4294901760
    %1967 = vmatprep.subr.mxu0 %v1966
    %v1968 = vand.u32 %v1542, 4294901760
    %v1969 = vsub.f32 %v1542, %v1968
    %v1970 = vand.u32 %v1969, 4294901760
    %v1971 = vsub.f32 %v1969, %v1970
    %v1972 = vand.u32 %v1971, 4294901760
    %1973 = vmatpush2.msra.mxu0 %v1972
    %v1974 = vand.u32 %v1538, 4294901760
    %v1975 = vsub.f32 %v1538, %v1974
    %v1976 = vand.u32 %v1975, 4294901760
    %v1977 = vsub.f32 %v1975, %v1976
    %v1978 = vand.u32 %v1977, 4294901760
    %1979 = vmatprep.subr.mxu0 %v1978
    %v1980 = vand.u32 %v1537, 4294901760
    %v1981 = vsub.f32 %v1537, %v1980
    %v1982 = vand.u32 %v1981, 4294901760
    %v1983 = vsub.f32 %v1981, %v1982
    %v1984 = vand.u32 %v1983, 4294901760
    %1985 = vmatpush2.msra.mxu0 %v1984
    %v1986 = vand.u32 %v1533, 4294901760
    %v1987 = vsub.f32 %v1533, %v1986
    %v1988 = vand.u32 %v1987, 4294901760
    %v1989 = vsub.f32 %v1987, %v1988
    %v1990 = vand.u32 %v1989, 4294901760
    %1991 = vmatprep.subr.mxu0 %v1990
    %v1992 = vand.u32 %v1532, 4294901760
    %v1993 = vsub.f32 %v1532, %v1992
    %v1994 = vand.u32 %v1993, 4294901760
    %v1995 = vsub.f32 %v1993, %v1994
    %v1996 = vand.u32 %v1995, 4294901760
    %1997 = vmatpush2.msra.mxu0 %v1996
    %v1998 = vand.u32 %v1528, 4294901760
    %v1999 = vsub.f32 %v1528, %v1998
    %v2000 = vand.u32 %v1999, 4294901760
    %v2001 = vsub.f32 %v1999, %v2000
    %v2002 = vand.u32 %v2001, 4294901760
    %2003 = vmatprep.subr.mxu0 %v2002
    %v2004 = vand.u32 %v1527, 4294901760
    %v2005 = vsub.f32 %v1527, %v2004
    %v2006 = vand.u32 %v2005, 4294901760
    %v2007 = vsub.f32 %v2005, %v2006
    %v2008 = vand.u32 %v2007, 4294901760
    %2009 = vmatpush2.msra.mxu0 %v2008
    %v2010 = vand.u32 %v1523, 4294901760
    %v2011 = vsub.f32 %v1523, %v2010
    %v2012 = vand.u32 %v2011, 4294901760
    %v2013 = vsub.f32 %v2011, %v2012
    %v2014 = vand.u32 %v2013, 4294901760
    %2015 = vmatprep.subr.mxu0 %v2014
    %v2016 = vand.u32 %v1522, 4294901760
    %v2017 = vsub.f32 %v1522, %v2016
    %v2018 = vand.u32 %v2017, 4294901760
    %v2019 = vsub.f32 %v2017, %v2018
    %v2020 = vand.u32 %v2019, 4294901760
    %2021 = vmatpush2.msra.mxu0 %v2020
    %v2022 = vand.u32 %v1518, 4294901760
    %v2023 = vsub.f32 %v1518, %v2022
    %v2024 = vand.u32 %v2023, 4294901760
    %v2025 = vsub.f32 %v2023, %v2024
    %v2026 = vand.u32 %v2025, 4294901760
    %2027 = vmatprep.subr.mxu0 %v2026
    %v2028 = vand.u32 %v1517, 4294901760
    %v2029 = vsub.f32 %v1517, %v2028
    %v2030 = vand.u32 %v2029, 4294901760
    %v2031 = vsub.f32 %v2029, %v2030
    %v2032 = vand.u32 %v2031, 4294901760
    %2033 = vmatpush2.msra.mxu0 %v2032
    %v2034 = vand.u32 %v1513, 4294901760
    %v2035 = vsub.f32 %v1513, %v2034
    %v2036 = vand.u32 %v2035, 4294901760
    %v2037 = vsub.f32 %v2035, %v2036
    %v2038 = vand.u32 %v2037, 4294901760
    %2039 = vmatprep.subr.mxu0 %v2038
    %v2040 = vand.u32 %v1512, 4294901760
    %v2041 = vsub.f32 %v1512, %v2040
    %v2042 = vand.u32 %v2041, 4294901760
    %v2043 = vsub.f32 %v2041, %v2042
    %v2044 = vand.u32 %v2043, 4294901760
    %2045 = vmatpush2.msra.mxu0 %v2044
    %v2046 = vand.u32 %v1508, 4294901760
    %v2047 = vsub.f32 %v1508, %v2046
    %v2048 = vand.u32 %v2047, 4294901760
    %v2049 = vsub.f32 %v2047, %v2048
    %v2050 = vand.u32 %v2049, 4294901760
    %2051 = vmatprep.subr.mxu0 %v2050
    %v2052 = vand.u32 %v1507, 4294901760
    %v2053 = vsub.f32 %v1507, %v2052
    %v2054 = vand.u32 %v2053, 4294901760
    %v2055 = vsub.f32 %v2053, %v2054
    %v2056 = vand.u32 %v2055, 4294901760
    %2057 = vmatpush2.msra.mxu0 %v2056
    %v2058 = vand.u32 %v1503, 4294901760
    %v2059 = vsub.f32 %v1503, %v2058
    %v2060 = vand.u32 %v2059, 4294901760
    %v2061 = vsub.f32 %v2059, %v2060
    %v2062 = vand.u32 %v2061, 4294901760
    %2063 = vmatprep.subr.mxu0 %v2062
    %v2064 = vand.u32 %v1502, 4294901760
    %v2065 = vsub.f32 %v1502, %v2064
    %v2066 = vand.u32 %v2065, 4294901760
    %v2067 = vsub.f32 %v2065, %v2066
    %v2068 = vand.u32 %v2067, 4294901760
    %2069 = vmatpush2.msra.mxu0 %v2068
    %v2070 = vand.u32 %v1498, 4294901760
    %v2071 = vsub.f32 %v1498, %v2070
    %v2072 = vand.u32 %v2071, 4294901760
    %v2073 = vsub.f32 %v2071, %v2072
    %v2074 = vand.u32 %v2073, 4294901760
    %2075 = vmatprep.subr.mxu0 %v2074
    %v2076 = vand.u32 %v1497, 4294901760
    %v2077 = vsub.f32 %v1497, %v2076
    %v2078 = vand.u32 %v2077, 4294901760
    %v2079 = vsub.f32 %v2077, %v2078
    %v2080 = vand.u32 %v2079, 4294901760
    %2081 = vmatpush2.msra.mxu0 %v2080
    %v2082 = vand.u32 %v1493, 4294901760
    %v2083 = vsub.f32 %v1493, %v2082
    %v2084 = vand.u32 %v2083, 4294901760
    %v2085 = vsub.f32 %v2083, %v2084
    %v2086 = vand.u32 %v2085, 4294901760
    %2087 = vmatprep.subr.mxu0 %v2086
    %v2088 = vand.u32 %v1492, 4294901760
    %v2089 = vsub.f32 %v1492, %v2088
    %v2090 = vand.u32 %v2089, 4294901760
    %v2091 = vsub.f32 %v2089, %v2090
    %v2092 = vand.u32 %v2091, 4294901760
    %2093 = vmatpush2.msra.mxu0 %v2092
    %v2094 = vand.u32 %v1488, 4294901760
    %v2095 = vsub.f32 %v1488, %v2094
    %v2096 = vand.u32 %v2095, 4294901760
    %v2097 = vsub.f32 %v2095, %v2096
    %v2098 = vand.u32 %v2097, 4294901760
    %2099 = vmatprep.subr.mxu0 %v2098
    %v2100 = vand.u32 %v1487, 4294901760
    %v2101 = vsub.f32 %v1487, %v2100
    %v2102 = vand.u32 %v2101, 4294901760
    %v2103 = vsub.f32 %v2101, %v2102
    %v2104 = vand.u32 %v2103, 4294901760
    %2105 = vmatpush2.msra.mxu0 %v2104
    %v2106 = vand.u32 %v1483, 4294901760
    %v2107 = vsub.f32 %v1483, %v2106
    %v2108 = vand.u32 %v2107, 4294901760
    %v2109 = vsub.f32 %v2107, %v2108
    %v2110 = vand.u32 %v2109, 4294901760
    %2111 = vmatprep.subr.mxu0 %v2110
    %v2112 = vand.u32 %v1482, 4294901760
    %v2113 = vsub.f32 %v1482, %v2112
    %v2114 = vand.u32 %v2113, 4294901760
    %v2115 = vsub.f32 %v2113, %v2114
    %v2116 = vand.u32 %v2115, 4294901760
    %2117 = vmatpush2.msra.mxu0 %v2116
    %v2118 = vand.u32 %v1401, 4294901760
    %2119 = vmatprep.mubr.f32.mxu0 %v2118
    %v2120 = vand.u32 %v1400, 4294901760
    %2121 = vmatmul.mubr.f32.gmra.mxu0 %v2120
    %v2122 = vpop.f32.mrf.mxu0
    %v2123 = vadd.f32 %v1730, %v2122
    %v2124 = vpop.f32.mrf.mxu0
    %v2125 = vadd.f32 %v1732, %v2124
    %2126 = vdwg.mxu0
    %v2127 = vand.u32 %v1478, 4294901760
    %v2128 = vsub.f32 %v1478, %v2127
    %2129 = vmatprep.subr.mxu0 %v2128
    %v2130 = vand.u32 %v1477, 4294901760
    %v2131 = vsub.f32 %v1477, %v2130
    %2132 = vmatpush1.msra.mxu0 %v2131
    %v2133 = vand.u32 %v1473, 4294901760
    %v2134 = vsub.f32 %v1473, %v2133
    %2135 = vmatprep.subr.mxu0 %v2134
    %v2136 = vand.u32 %v1472, 4294901760
    %v2137 = vsub.f32 %v1472, %v2136
    %2138 = vmatpush1.msra.mxu0 %v2137
    %v2139 = vand.u32 %v1468, 4294901760
    %v2140 = vsub.f32 %v1468, %v2139
    %2141 = vmatprep.subr.mxu0 %v2140
    %v2142 = vand.u32 %v1467, 4294901760
    %v2143 = vsub.f32 %v1467, %v2142
    %2144 = vmatpush1.msra.mxu0 %v2143
    %v2145 = vand.u32 %v1463, 4294901760
    %v2146 = vsub.f32 %v1463, %v2145
    %2147 = vmatprep.subr.mxu0 %v2146
    %v2148 = vand.u32 %v1462, 4294901760
    %v2149 = vsub.f32 %v1462, %v2148
    %2150 = vmatpush1.msra.mxu0 %v2149
    %v2151 = vand.u32 %v1458, 4294901760
    %v2152 = vsub.f32 %v1458, %v2151
    %2153 = vmatprep.subr.mxu0 %v2152
    %v2154 = vand.u32 %v1457, 4294901760
    %v2155 = vsub.f32 %v1457, %v2154
    %2156 = vmatpush1.msra.mxu0 %v2155
    %v2157 = vand.u32 %v1453, 4294901760
    %v2158 = vsub.f32 %v1453, %v2157
    %2159 = vmatprep.subr.mxu0 %v2158
    %v2160 = vand.u32 %v1452, 4294901760
    %v2161 = vsub.f32 %v1452, %v2160
    %2162 = vmatpush1.msra.mxu0 %v2161
    %v2163 = vand.u32 %v1448, 4294901760
    %v2164 = vsub.f32 %v1448, %v2163
    %2165 = vmatprep.subr.mxu0 %v2164
    %v2166 = vand.u32 %v1447, 4294901760
    %v2167 = vsub.f32 %v1447, %v2166
    %2168 = vmatpush1.msra.mxu0 %v2167
    %v2169 = vand.u32 %v1443, 4294901760
    %v2170 = vsub.f32 %v1443, %v2169
    %2171 = vmatprep.subr.mxu0 %v2170
    %v2172 = vand.u32 %v1442, 4294901760
    %v2173 = vsub.f32 %v1442, %v2172
    %2174 = vmatpush1.msra.mxu0 %v2173
    %v2175 = vand.u32 %v1438, 4294901760
    %v2176 = vsub.f32 %v1438, %v2175
    %2177 = vmatprep.subr.mxu0 %v2176
    %v2178 = vand.u32 %v1437, 4294901760
    %v2179 = vsub.f32 %v1437, %v2178
    %2180 = vmatpush1.msra.mxu0 %v2179
    %v2181 = vand.u32 %v1433, 4294901760
    %v2182 = vsub.f32 %v1433, %v2181
    %2183 = vmatprep.subr.mxu0 %v2182
    %v2184 = vand.u32 %v1432, 4294901760
    %v2185 = vsub.f32 %v1432, %v2184
    %2186 = vmatpush1.msra.mxu0 %v2185
    %v2187 = vand.u32 %v1428, 4294901760
    %v2188 = vsub.f32 %v1428, %v2187
    %2189 = vmatprep.subr.mxu0 %v2188
    %v2190 = vand.u32 %v1427, 4294901760
    %v2191 = vsub.f32 %v1427, %v2190
    %2192 = vmatpush1.msra.mxu0 %v2191
    %v2193 = vand.u32 %v1423, 4294901760
    %v2194 = vsub.f32 %v1423, %v2193
    %2195 = vmatprep.subr.mxu0 %v2194
    %v2196 = vand.u32 %v1422, 4294901760
    %v2197 = vsub.f32 %v1422, %v2196
    %2198 = vmatpush1.msra.mxu0 %v2197
    %v2199 = vand.u32 %v1418, 4294901760
    %v2200 = vsub.f32 %v1418, %v2199
    %2201 = vmatprep.subr.mxu0 %v2200
    %v2202 = vand.u32 %v1417, 4294901760
    %v2203 = vsub.f32 %v1417, %v2202
    %2204 = vmatpush1.msra.mxu0 %v2203
    %v2205 = vand.u32 %v1413, 4294901760
    %v2206 = vsub.f32 %v1413, %v2205
    %2207 = vmatprep.subr.mxu0 %v2206
    %v2208 = vand.u32 %v1412, 4294901760
    %v2209 = vsub.f32 %v1412, %v2208
    %2210 = vmatpush1.msra.mxu0 %v2209
    %v2211 = vand.u32 %v1408, 4294901760
    %v2212 = vsub.f32 %v1408, %v2211
    %2213 = vmatprep.subr.mxu0 %v2212
    %v2214 = vand.u32 %v1407, 4294901760
    %v2215 = vsub.f32 %v1407, %v2214
    %2216 = vmatpush1.msra.mxu0 %v2215
    %v2217 = vand.u32 %v1403, 4294901760
    %v2218 = vsub.f32 %v1403, %v2217
    %2219 = vmatprep.subr.mxu0 %v2218
    %v2220 = vand.u32 %v1402, 4294901760
    %v2221 = vsub.f32 %v1402, %v2220
    %2222 = vmatpush1.msra.mxu0 %v2221
    %v2223 = vand.u32 %v1558, 4294901760
    %v2224 = vsub.f32 %v1558, %v2223
    %2225 = vmatprep.subr.mxu0 %v2224
    %v2226 = vand.u32 %v1557, 4294901760
    %v2227 = vsub.f32 %v1557, %v2226
    %2228 = vmatpush2.msra.mxu0 %v2227
    %v2229 = vand.u32 %v1553, 4294901760
    %v2230 = vsub.f32 %v1553, %v2229
    %2231 = vmatprep.subr.mxu0 %v2230
    %v2232 = vand.u32 %v1552, 4294901760
    %v2233 = vsub.f32 %v1552, %v2232
    %2234 = vmatpush2.msra.mxu0 %v2233
    %v2235 = vand.u32 %v1548, 4294901760
    %v2236 = vsub.f32 %v1548, %v2235
    %2237 = vmatprep.subr.mxu0 %v2236
    %v2238 = vand.u32 %v1547, 4294901760
    %v2239 = vsub.f32 %v1547, %v2238
    %2240 = vmatpush2.msra.mxu0 %v2239
    %v2241 = vand.u32 %v1543, 4294901760
    %v2242 = vsub.f32 %v1543, %v2241
    %2243 = vmatprep.subr.mxu0 %v2242
    %v2244 = vand.u32 %v1542, 4294901760
    %v2245 = vsub.f32 %v1542, %v2244
    %2246 = vmatpush2.msra.mxu0 %v2245
    %v2247 = vand.u32 %v1538, 4294901760
    %v2248 = vsub.f32 %v1538, %v2247
    %2249 = vmatprep.subr.mxu0 %v2248
    %v2250 = vand.u32 %v1537, 4294901760
    %v2251 = vsub.f32 %v1537, %v2250
    %2252 = vmatpush2.msra.mxu0 %v2251
    %v2253 = vand.u32 %v1533, 4294901760
    %v2254 = vsub.f32 %v1533, %v2253
    %2255 = vmatprep.subr.mxu0 %v2254
    %v2256 = vand.u32 %v1532, 4294901760
    %v2257 = vsub.f32 %v1532, %v2256
    %2258 = vmatpush2.msra.mxu0 %v2257
    %v2259 = vand.u32 %v1528, 4294901760
    %v2260 = vsub.f32 %v1528, %v2259
    %2261 = vmatprep.subr.mxu0 %v2260
    %v2262 = vand.u32 %v1527, 4294901760
    %v2263 = vsub.f32 %v1527, %v2262
    %2264 = vmatpush2.msra.mxu0 %v2263
    %v2265 = vand.u32 %v1523, 4294901760
    %v2266 = vsub.f32 %v1523, %v2265
    %2267 = vmatprep.subr.mxu0 %v2266
    %v2268 = vand.u32 %v1522, 4294901760
    %v2269 = vsub.f32 %v1522, %v2268
    %2270 = vmatpush2.msra.mxu0 %v2269
    %v2271 = vand.u32 %v1518, 4294901760
    %v2272 = vsub.f32 %v1518, %v2271
    %2273 = vmatprep.subr.mxu0 %v2272
    %v2274 = vand.u32 %v1517, 4294901760
    %v2275 = vsub.f32 %v1517, %v2274
    %2276 = vmatpush2.msra.mxu0 %v2275
    %v2277 = vand.u32 %v1513, 4294901760
    %v2278 = vsub.f32 %v1513, %v2277
    %2279 = vmatprep.subr.mxu0 %v2278
    %v2280 = vand.u32 %v1512, 4294901760
    %v2281 = vsub.f32 %v1512, %v2280
    %2282 = vmatpush2.msra.mxu0 %v2281
    %v2283 = vand.u32 %v1508, 4294901760
    %v2284 = vsub.f32 %v1508, %v2283
    %2285 = vmatprep.subr.mxu0 %v2284
    %v2286 = vand.u32 %v1507, 4294901760
    %v2287 = vsub.f32 %v1507, %v2286
    %2288 = vmatpush2.msra.mxu0 %v2287
    %v2289 = vand.u32 %v1503, 4294901760
    %v2290 = vsub.f32 %v1503, %v2289
    %2291 = vmatprep.subr.mxu0 %v2290
    %v2292 = vand.u32 %v1502, 4294901760
    %v2293 = vsub.f32 %v1502, %v2292
    %2294 = vmatpush2.msra.mxu0 %v2293
    %v2295 = vand.u32 %v1498, 4294901760
    %v2296 = vsub.f32 %v1498, %v2295
    %2297 = vmatprep.subr.mxu0 %v2296
    %v2298 = vand.u32 %v1497, 4294901760
    %v2299 = vsub.f32 %v1497, %v2298
    %2300 = vmatpush2.msra.mxu0 %v2299
    %v2301 = vand.u32 %v1493, 4294901760
    %v2302 = vsub.f32 %v1493, %v2301
    %2303 = vmatprep.subr.mxu0 %v2302
    %v2304 = vand.u32 %v1492, 4294901760
    %v2305 = vsub.f32 %v1492, %v2304
    %2306 = vmatpush2.msra.mxu0 %v2305
    %v2307 = vand.u32 %v1488, 4294901760
    %v2308 = vsub.f32 %v1488, %v2307
    %2309 = vmatprep.subr.mxu0 %v2308
    %v2310 = vand.u32 %v1487, 4294901760
    %v2311 = vsub.f32 %v1487, %v2310
    %2312 = vmatpush2.msra.mxu0 %v2311
    %v2313 = vand.u32 %v1483, 4294901760
    %v2314 = vsub.f32 %v1483, %v2313
    %2315 = vmatprep.subr.mxu0 %v2314
    %v2316 = vand.u32 %v1482, 4294901760
    %v2317 = vsub.f32 %v1482, %v2316
    %2318 = vmatpush2.msra.mxu0 %v2317
    %v2319 = vand.u32 %v1401, 4294901760
    %v2320 = vsub.f32 %v1401, %v2319
    %2321 = vmatprep.mubr.f32.mxu0 %v2320
    %v2322 = vand.u32 %v1400, 4294901760
    %v2323 = vsub.f32 %v1400, %v2322
    %2324 = vmatmul.mubr.f32.gmra.mxu0 %v2323
    %v2325 = vpop.f32.mrf.mxu0
    %v2326 = vadd.f32 %v2123, %v2325
    %v2327 = vpop.f32.mrf.mxu0
    %v2328 = vadd.f32 %v2125, %v2327
    %2329 = vdwg.mxu0
    %v2330 = vand.u32 %v1478, 4294901760
    %2331 = vmatprep.subr.mxu0 %v2330
    %v2332 = vand.u32 %v1477, 4294901760
    %2333 = vmatpush1.msra.mxu0 %v2332
    %v2334 = vand.u32 %v1473, 4294901760
    %2335 = vmatprep.subr.mxu0 %v2334
    %v2336 = vand.u32 %v1472, 4294901760
    %2337 = vmatpush1.msra.mxu0 %v2336
    %v2338 = vand.u32 %v1468, 4294901760
    %2339 = vmatprep.subr.mxu0 %v2338
    %v2340 = vand.u32 %v1467, 4294901760
    %2341 = vmatpush1.msra.mxu0 %v2340
    %v2342 = vand.u32 %v1463, 4294901760
    %2343 = vmatprep.subr.mxu0 %v2342
    %v2344 = vand.u32 %v1462, 4294901760
    %2345 = vmatpush1.msra.mxu0 %v2344
    %v2346 = vand.u32 %v1458, 4294901760
    %2347 = vmatprep.subr.mxu0 %v2346
    %v2348 = vand.u32 %v1457, 4294901760
    %2349 = vmatpush1.msra.mxu0 %v2348
    %v2350 = vand.u32 %v1453, 4294901760
    %2351 = vmatprep.subr.mxu0 %v2350
    %v2352 = vand.u32 %v1452, 4294901760
    %2353 = vmatpush1.msra.mxu0 %v2352
    %v2354 = vand.u32 %v1448, 4294901760
    %2355 = vmatprep.subr.mxu0 %v2354
    %v2356 = vand.u32 %v1447, 4294901760
    %2357 = vmatpush1.msra.mxu0 %v2356
    %v2358 = vand.u32 %v1443, 4294901760
    %2359 = vmatprep.subr.mxu0 %v2358
    %v2360 = vand.u32 %v1442, 4294901760
    %2361 = vmatpush1.msra.mxu0 %v2360
    %v2362 = vand.u32 %v1438, 4294901760
    %2363 = vmatprep.subr.mxu0 %v2362
    %v2364 = vand.u32 %v1437, 4294901760
    %2365 = vmatpush1.msra.mxu0 %v2364
    %v2366 = vand.u32 %v1433, 4294901760
    %2367 = vmatprep.subr.mxu0 %v2366
    %v2368 = vand.u32 %v1432, 4294901760
    %2369 = vmatpush1.msra.mxu0 %v2368
    %v2370 = vand.u32 %v1428, 4294901760
    %2371 = vmatprep.subr.mxu0 %v2370
    %v2372 = vand.u32 %v1427, 4294901760
    %2373 = vmatpush1.msra.mxu0 %v2372
    %v2374 = vand.u32 %v1423, 4294901760
    %2375 = vmatprep.subr.mxu0 %v2374
    %v2376 = vand.u32 %v1422, 4294901760
    %2377 = vmatpush1.msra.mxu0 %v2376
    %v2378 = vand.u32 %v1418, 4294901760
    %2379 = vmatprep.subr.mxu0 %v2378
    %v2380 = vand.u32 %v1417, 4294901760
    %2381 = vmatpush1.msra.mxu0 %v2380
    %v2382 = vand.u32 %v1413, 4294901760
    %2383 = vmatprep.subr.mxu0 %v2382
    %v2384 = vand.u32 %v1412, 4294901760
    %2385 = vmatpush1.msra.mxu0 %v2384
    %v2386 = vand.u32 %v1408, 4294901760
    %2387 = vmatprep.subr.mxu0 %v2386
    %v2388 = vand.u32 %v1407, 4294901760
    %2389 = vmatpush1.msra.mxu0 %v2388
    %v2390 = vand.u32 %v1403, 4294901760
    %2391 = vmatprep.subr.mxu0 %v2390
    %v2392 = vand.u32 %v1402, 4294901760
    %2393 = vmatpush1.msra.mxu0 %v2392
    %v2394 = vand.u32 %v1558, 4294901760
    %2395 = vmatprep.subr.mxu0 %v2394
    %v2396 = vand.u32 %v1557, 4294901760
    %2397 = vmatpush2.msra.mxu0 %v2396
    %v2398 = vand.u32 %v1553, 4294901760
    %2399 = vmatprep.subr.mxu0 %v2398
    %v2400 = vand.u32 %v1552, 4294901760
    %2401 = vmatpush2.msra.mxu0 %v2400
    %v2402 = vand.u32 %v1548, 4294901760
    %2403 = vmatprep.subr.mxu0 %v2402
    %v2404 = vand.u32 %v1547, 4294901760
    %2405 = vmatpush2.msra.mxu0 %v2404
    %v2406 = vand.u32 %v1543, 4294901760
    %2407 = vmatprep.subr.mxu0 %v2406
    %v2408 = vand.u32 %v1542, 4294901760
    %2409 = vmatpush2.msra.mxu0 %v2408
    %v2410 = vand.u32 %v1538, 4294901760
    %2411 = vmatprep.subr.mxu0 %v2410
    %v2412 = vand.u32 %v1537, 4294901760
    %2413 = vmatpush2.msra.mxu0 %v2412
    %v2414 = vand.u32 %v1533, 4294901760
    %2415 = vmatprep.subr.mxu0 %v2414
    %v2416 = vand.u32 %v1532, 4294901760
    %2417 = vmatpush2.msra.mxu0 %v2416
    %v2418 = vand.u32 %v1528, 4294901760
    %2419 = vmatprep.subr.mxu0 %v2418
    %v2420 = vand.u32 %v1527, 4294901760
    %2421 = vmatpush2.msra.mxu0 %v2420
    %v2422 = vand.u32 %v1523, 4294901760
    %2423 = vmatprep.subr.mxu0 %v2422
    %v2424 = vand.u32 %v1522, 4294901760
    %2425 = vmatpush2.msra.mxu0 %v2424
    %v2426 = vand.u32 %v1518, 4294901760
    %2427 = vmatprep.subr.mxu0 %v2426
    %v2428 = vand.u32 %v1517, 4294901760
    %2429 = vmatpush2.msra.mxu0 %v2428
    %v2430 = vand.u32 %v1513, 4294901760
    %2431 = vmatprep.subr.mxu0 %v2430
    %v2432 = vand.u32 %v1512, 4294901760
    %2433 = vmatpush2.msra.mxu0 %v2432
    %v2434 = vand.u32 %v1508, 4294901760
    %2435 = vmatprep.subr.mxu0 %v2434
    %v2436 = vand.u32 %v1507, 4294901760
    %2437 = vmatpush2.msra.mxu0 %v2436
    %v2438 = vand.u32 %v1503, 4294901760
    %2439 = vmatprep.subr.mxu0 %v2438
    %v2440 = vand.u32 %v1502, 4294901760
    %2441 = vmatpush2.msra.mxu0 %v2440
    %v2442 = vand.u32 %v1498, 4294901760
    %2443 = vmatprep.subr.mxu0 %v2442
    %v2444 = vand.u32 %v1497, 4294901760
    %2445 = vmatpush2.msra.mxu0 %v2444
    %v2446 = vand.u32 %v1493, 4294901760
    %2447 = vmatprep.subr.mxu0 %v2446
    %v2448 = vand.u32 %v1492, 4294901760
    %2449 = vmatpush2.msra.mxu0 %v2448
    %v2450 = vand.u32 %v1488, 4294901760
    %2451 = vmatprep.subr.mxu0 %v2450
    %v2452 = vand.u32 %v1487, 4294901760
    %2453 = vmatpush2.msra.mxu0 %v2452
    %v2454 = vand.u32 %v1483, 4294901760
    %2455 = vmatprep.subr.mxu0 %v2454
    %v2456 = vand.u32 %v1482, 4294901760
    %2457 = vmatpush2.msra.mxu0 %v2456
    %v2458 = vand.u32 %v1401, 4294901760
    %v2459 = vsub.f32 %v1401, %v2458
    %v2460 = vand.u32 %v2459, 4294901760
    %2461 = vmatprep.mubr.f32.mxu0 %v2460
    %v2462 = vand.u32 %v1400, 4294901760
    %v2463 = vsub.f32 %v1400, %v2462
    %v2464 = vand.u32 %v2463, 4294901760
    %2465 = vmatmul.mubr.f32.gmra.mxu0 %v2464
    %v2466 = vpop.f32.mrf.mxu0
    %v2467 = vadd.f32 %v2326, %v2466
    %v2468 = vpop.f32.mrf.mxu0
    %v2469 = vadd.f32 %v2328, %v2468
    %2470 = vdwg.mxu0
    %v2471 = vand.u32 %v1478, 4294901760
    %v2472 = vsub.f32 %v1478, %v2471
    %v2473 = vand.u32 %v2472, 4294901760
    %2474 = vmatprep.subr.mxu0 %v2473
    %v2475 = vand.u32 %v1477, 4294901760
    %v2476 = vsub.f32 %v1477, %v2475
    %v2477 = vand.u32 %v2476, 4294901760
    %2478 = vmatpush1.msra.mxu0 %v2477
    %v2479 = vand.u32 %v1473, 4294901760
    %v2480 = vsub.f32 %v1473, %v2479
    %v2481 = vand.u32 %v2480, 4294901760
    %2482 = vmatprep.subr.mxu0 %v2481
    %v2483 = vand.u32 %v1472, 4294901760
    %v2484 = vsub.f32 %v1472, %v2483
    %v2485 = vand.u32 %v2484, 4294901760
    %2486 = vmatpush1.msra.mxu0 %v2485
    %v2487 = vand.u32 %v1468, 4294901760
    %v2488 = vsub.f32 %v1468, %v2487
    %v2489 = vand.u32 %v2488, 4294901760
    %2490 = vmatprep.subr.mxu0 %v2489
    %v2491 = vand.u32 %v1467, 4294901760
    %v2492 = vsub.f32 %v1467, %v2491
    %v2493 = vand.u32 %v2492, 4294901760
    %2494 = vmatpush1.msra.mxu0 %v2493
    %v2495 = vand.u32 %v1463, 4294901760
    %v2496 = vsub.f32 %v1463, %v2495
    %v2497 = vand.u32 %v2496, 4294901760
    %2498 = vmatprep.subr.mxu0 %v2497
    %v2499 = vand.u32 %v1462, 4294901760
    %v2500 = vsub.f32 %v1462, %v2499
    %v2501 = vand.u32 %v2500, 4294901760
    %2502 = vmatpush1.msra.mxu0 %v2501
    %v2503 = vand.u32 %v1458, 4294901760
    %v2504 = vsub.f32 %v1458, %v2503
    %v2505 = vand.u32 %v2504, 4294901760
    %2506 = vmatprep.subr.mxu0 %v2505
    %v2507 = vand.u32 %v1457, 4294901760
    %v2508 = vsub.f32 %v1457, %v2507
    %v2509 = vand.u32 %v2508, 4294901760
    %2510 = vmatpush1.msra.mxu0 %v2509
    %v2511 = vand.u32 %v1453, 4294901760
    %v2512 = vsub.f32 %v1453, %v2511
    %v2513 = vand.u32 %v2512, 4294901760
    %2514 = vmatprep.subr.mxu0 %v2513
    %v2515 = vand.u32 %v1452, 4294901760
    %v2516 = vsub.f32 %v1452, %v2515
    %v2517 = vand.u32 %v2516, 4294901760
    %2518 = vmatpush1.msra.mxu0 %v2517
    %v2519 = vand.u32 %v1448, 4294901760
    %v2520 = vsub.f32 %v1448, %v2519
    %v2521 = vand.u32 %v2520, 4294901760
    %2522 = vmatprep.subr.mxu0 %v2521
    %v2523 = vand.u32 %v1447, 4294901760
    %v2524 = vsub.f32 %v1447, %v2523
    %v2525 = vand.u32 %v2524, 4294901760
    %2526 = vmatpush1.msra.mxu0 %v2525
    %v2527 = vand.u32 %v1443, 4294901760
    %v2528 = vsub.f32 %v1443, %v2527
    %v2529 = vand.u32 %v2528, 4294901760
    %2530 = vmatprep.subr.mxu0 %v2529
    %v2531 = vand.u32 %v1442, 4294901760
    %v2532 = vsub.f32 %v1442, %v2531
    %v2533 = vand.u32 %v2532, 4294901760
    %2534 = vmatpush1.msra.mxu0 %v2533
    %v2535 = vand.u32 %v1438, 4294901760
    %v2536 = vsub.f32 %v1438, %v2535
    %v2537 = vand.u32 %v2536, 4294901760
    %2538 = vmatprep.subr.mxu0 %v2537
    %v2539 = vand.u32 %v1437, 4294901760
    %v2540 = vsub.f32 %v1437, %v2539
    %v2541 = vand.u32 %v2540, 4294901760
    %2542 = vmatpush1.msra.mxu0 %v2541
    %v2543 = vand.u32 %v1433, 4294901760
    %v2544 = vsub.f32 %v1433, %v2543
    %v2545 = vand.u32 %v2544, 4294901760
    %2546 = vmatprep.subr.mxu0 %v2545
    %v2547 = vand.u32 %v1432, 4294901760
    %v2548 = vsub.f32 %v1432, %v2547
    %v2549 = vand.u32 %v2548, 4294901760
    %2550 = vmatpush1.msra.mxu0 %v2549
    %v2551 = vand.u32 %v1428, 4294901760
    %v2552 = vsub.f32 %v1428, %v2551
    %v2553 = vand.u32 %v2552, 4294901760
    %2554 = vmatprep.subr.mxu0 %v2553
    %v2555 = vand.u32 %v1427, 4294901760
    %v2556 = vsub.f32 %v1427, %v2555
    %v2557 = vand.u32 %v2556, 4294901760
    %2558 = vmatpush1.msra.mxu0 %v2557
    %v2559 = vand.u32 %v1423, 4294901760
    %v2560 = vsub.f32 %v1423, %v2559
    %v2561 = vand.u32 %v2560, 4294901760
    %2562 = vmatprep.subr.mxu0 %v2561
    %v2563 = vand.u32 %v1422, 4294901760
    %v2564 = vsub.f32 %v1422, %v2563
    %v2565 = vand.u32 %v2564, 4294901760
    %2566 = vmatpush1.msra.mxu0 %v2565
    %v2567 = vand.u32 %v1418, 4294901760
    %v2568 = vsub.f32 %v1418, %v2567
    %v2569 = vand.u32 %v2568, 4294901760
    %2570 = vmatprep.subr.mxu0 %v2569
    %v2571 = vand.u32 %v1417, 4294901760
    %v2572 = vsub.f32 %v1417, %v2571
    %v2573 = vand.u32 %v2572, 4294901760
    %2574 = vmatpush1.msra.mxu0 %v2573
    %v2575 = vand.u32 %v1413, 4294901760
    %v2576 = vsub.f32 %v1413, %v2575
    %v2577 = vand.u32 %v2576, 4294901760
    %2578 = vmatprep.subr.mxu0 %v2577
    %v2579 = vand.u32 %v1412, 4294901760
    %v2580 = vsub.f32 %v1412, %v2579
    %v2581 = vand.u32 %v2580, 4294901760
    %2582 = vmatpush1.msra.mxu0 %v2581
    %v2583 = vand.u32 %v1408, 4294901760
    %v2584 = vsub.f32 %v1408, %v2583
    %v2585 = vand.u32 %v2584, 4294901760
    %2586 = vmatprep.subr.mxu0 %v2585
    %v2587 = vand.u32 %v1407, 4294901760
    %v2588 = vsub.f32 %v1407, %v2587
    %v2589 = vand.u32 %v2588, 4294901760
    %2590 = vmatpush1.msra.mxu0 %v2589
    %v2591 = vand.u32 %v1403, 4294901760
    %v2592 = vsub.f32 %v1403, %v2591
    %v2593 = vand.u32 %v2592, 4294901760
    %2594 = vmatprep.subr.mxu0 %v2593
    %v2595 = vand.u32 %v1402, 4294901760
    %v2596 = vsub.f32 %v1402, %v2595
    %v2597 = vand.u32 %v2596, 4294901760
    %2598 = vmatpush1.msra.mxu0 %v2597
    %v2599 = vand.u32 %v1558, 4294901760
    %v2600 = vsub.f32 %v1558, %v2599
    %v2601 = vand.u32 %v2600, 4294901760
    %2602 = vmatprep.subr.mxu0 %v2601
    %v2603 = vand.u32 %v1557, 4294901760
    %v2604 = vsub.f32 %v1557, %v2603
    %v2605 = vand.u32 %v2604, 4294901760
    %2606 = vmatpush2.msra.mxu0 %v2605
    %v2607 = vand.u32 %v1553, 4294901760
    %v2608 = vsub.f32 %v1553, %v2607
    %v2609 = vand.u32 %v2608, 4294901760
    %2610 = vmatprep.subr.mxu0 %v2609
    %v2611 = vand.u32 %v1552, 4294901760
    %v2612 = vsub.f32 %v1552, %v2611
    %v2613 = vand.u32 %v2612, 4294901760
    %2614 = vmatpush2.msra.mxu0 %v2613
    %v2615 = vand.u32 %v1548, 4294901760
    %v2616 = vsub.f32 %v1548, %v2615
    %v2617 = vand.u32 %v2616, 4294901760
    %2618 = vmatprep.subr.mxu0 %v2617
    %v2619 = vand.u32 %v1547, 4294901760
    %v2620 = vsub.f32 %v1547, %v2619
    %v2621 = vand.u32 %v2620, 4294901760
    %2622 = vmatpush2.msra.mxu0 %v2621
    %v2623 = vand.u32 %v1543, 4294901760
    %v2624 = vsub.f32 %v1543, %v2623
    %v2625 = vand.u32 %v2624, 4294901760
    %2626 = vmatprep.subr.mxu0 %v2625
    %v2627 = vand.u32 %v1542, 4294901760
    %v2628 = vsub.f32 %v1542, %v2627
    %v2629 = vand.u32 %v2628, 4294901760
    %2630 = vmatpush2.msra.mxu0 %v2629
    %v2631 = vand.u32 %v1538, 4294901760
    %v2632 = vsub.f32 %v1538, %v2631
    %v2633 = vand.u32 %v2632, 4294901760
    %2634 = vmatprep.subr.mxu0 %v2633
    %v2635 = vand.u32 %v1537, 4294901760
    %v2636 = vsub.f32 %v1537, %v2635
    %v2637 = vand.u32 %v2636, 4294901760
    %2638 = vmatpush2.msra.mxu0 %v2637
    %v2639 = vand.u32 %v1533, 4294901760
    %v2640 = vsub.f32 %v1533, %v2639
    %v2641 = vand.u32 %v2640, 4294901760
    %2642 = vmatprep.subr.mxu0 %v2641
    %v2643 = vand.u32 %v1532, 4294901760
    %v2644 = vsub.f32 %v1532, %v2643
    %v2645 = vand.u32 %v2644, 4294901760
    %2646 = vmatpush2.msra.mxu0 %v2645
    %v2647 = vand.u32 %v1528, 4294901760
    %v2648 = vsub.f32 %v1528, %v2647
    %v2649 = vand.u32 %v2648, 4294901760
    %2650 = vmatprep.subr.mxu0 %v2649
    %v2651 = vand.u32 %v1527, 4294901760
    %v2652 = vsub.f32 %v1527, %v2651
    %v2653 = vand.u32 %v2652, 4294901760
    %2654 = vmatpush2.msra.mxu0 %v2653
    %v2655 = vand.u32 %v1523, 4294901760
    %v2656 = vsub.f32 %v1523, %v2655
    %v2657 = vand.u32 %v2656, 4294901760
    %2658 = vmatprep.subr.mxu0 %v2657
    %v2659 = vand.u32 %v1522, 4294901760
    %v2660 = vsub.f32 %v1522, %v2659
    %v2661 = vand.u32 %v2660, 4294901760
    %2662 = vmatpush2.msra.mxu0 %v2661
    %v2663 = vand.u32 %v1518, 4294901760
    %v2664 = vsub.f32 %v1518, %v2663
    %v2665 = vand.u32 %v2664, 4294901760
    %2666 = vmatprep.subr.mxu0 %v2665
    %v2667 = vand.u32 %v1517, 4294901760
    %v2668 = vsub.f32 %v1517, %v2667
    %v2669 = vand.u32 %v2668, 4294901760
    %2670 = vmatpush2.msra.mxu0 %v2669
    %v2671 = vand.u32 %v1513, 4294901760
    %v2672 = vsub.f32 %v1513, %v2671
    %v2673 = vand.u32 %v2672, 4294901760
    %2674 = vmatprep.subr.mxu0 %v2673
    %v2675 = vand.u32 %v1512, 4294901760
    %v2676 = vsub.f32 %v1512, %v2675
    %v2677 = vand.u32 %v2676, 4294901760
    %2678 = vmatpush2.msra.mxu0 %v2677
    %v2679 = vand.u32 %v1508, 4294901760
    %v2680 = vsub.f32 %v1508, %v2679
    %v2681 = vand.u32 %v2680, 4294901760
    %2682 = vmatprep.subr.mxu0 %v2681
    %v2683 = vand.u32 %v1507, 4294901760
    %v2684 = vsub.f32 %v1507, %v2683
    %v2685 = vand.u32 %v2684, 4294901760
    %2686 = vmatpush2.msra.mxu0 %v2685
    %v2687 = vand.u32 %v1503, 4294901760
    %v2688 = vsub.f32 %v1503, %v2687
    %v2689 = vand.u32 %v2688, 4294901760
    %2690 = vmatprep.subr.mxu0 %v2689
    %v2691 = vand.u32 %v1502, 4294901760
    %v2692 = vsub.f32 %v1502, %v2691
    %v2693 = vand.u32 %v2692, 4294901760
    %2694 = vmatpush2.msra.mxu0 %v2693
    %v2695 = vand.u32 %v1498, 4294901760
    %v2696 = vsub.f32 %v1498, %v2695
    %v2697 = vand.u32 %v2696, 4294901760
    %2698 = vmatprep.subr.mxu0 %v2697
    %v2699 = vand.u32 %v1497, 4294901760
    %v2700 = vsub.f32 %v1497, %v2699
    %v2701 = vand.u32 %v2700, 4294901760
    %2702 = vmatpush2.msra.mxu0 %v2701
    %v2703 = vand.u32 %v1493, 4294901760
    %v2704 = vsub.f32 %v1493, %v2703
    %v2705 = vand.u32 %v2704, 4294901760
    %2706 = vmatprep.subr.mxu0 %v2705
    %v2707 = vand.u32 %v1492, 4294901760
    %v2708 = vsub.f32 %v1492, %v2707
    %v2709 = vand.u32 %v2708, 4294901760
    %2710 = vmatpush2.msra.mxu0 %v2709
    %v2711 = vand.u32 %v1488, 4294901760
    %v2712 = vsub.f32 %v1488, %v2711
    %v2713 = vand.u32 %v2712, 4294901760
    %2714 = vmatprep.subr.mxu0 %v2713
    %v2715 = vand.u32 %v1487, 4294901760
    %v2716 = vsub.f32 %v1487, %v2715
    %v2717 = vand.u32 %v2716, 4294901760
    %2718 = vmatpush2.msra.mxu0 %v2717
    %v2719 = vand.u32 %v1483, 4294901760
    %v2720 = vsub.f32 %v1483, %v2719
    %v2721 = vand.u32 %v2720, 4294901760
    %2722 = vmatprep.subr.mxu0 %v2721
    %v2723 = vand.u32 %v1482, 4294901760
    %v2724 = vsub.f32 %v1482, %v2723
    %v2725 = vand.u32 %v2724, 4294901760
    %2726 = vmatpush2.msra.mxu0 %v2725
    %v2727 = vand.u32 %v1401, 4294901760
    %2728 = vmatprep.mubr.f32.mxu0 %v2727
    %v2729 = vand.u32 %v1400, 4294901760
    %2730 = vmatmul.mubr.f32.gmra.mxu0 %v2729
    %v2731 = vpop.f32.mrf.mxu0
    %v2732 = vadd.f32 %v2467, %v2731
    %v2733 = vpop.f32.mrf.mxu0
    %v2734 = vadd.f32 %v2469, %v2733
    %2735 = vdwg.mxu0
    %v2736 = vand.u32 %v1478, 4294901760
    %2737 = vmatprep.subr.mxu0 %v2736
    %v2738 = vand.u32 %v1477, 4294901760
    %2739 = vmatpush1.msra.mxu0 %v2738
    %v2740 = vand.u32 %v1473, 4294901760
    %2741 = vmatprep.subr.mxu0 %v2740
    %v2742 = vand.u32 %v1472, 4294901760
    %2743 = vmatpush1.msra.mxu0 %v2742
    %v2744 = vand.u32 %v1468, 4294901760
    %2745 = vmatprep.subr.mxu0 %v2744
    %v2746 = vand.u32 %v1467, 4294901760
    %2747 = vmatpush1.msra.mxu0 %v2746
    %v2748 = vand.u32 %v1463, 4294901760
    %2749 = vmatprep.subr.mxu0 %v2748
    %v2750 = vand.u32 %v1462, 4294901760
    %2751 = vmatpush1.msra.mxu0 %v2750
    %v2752 = vand.u32 %v1458, 4294901760
    %2753 = vmatprep.subr.mxu0 %v2752
    %v2754 = vand.u32 %v1457, 4294901760
    %2755 = vmatpush1.msra.mxu0 %v2754
    %v2756 = vand.u32 %v1453, 4294901760
    %2757 = vmatprep.subr.mxu0 %v2756
    %v2758 = vand.u32 %v1452, 4294901760
    %2759 = vmatpush1.msra.mxu0 %v2758
    %v2760 = vand.u32 %v1448, 4294901760
    %2761 = vmatprep.subr.mxu0 %v2760
    %v2762 = vand.u32 %v1447, 4294901760
    %2763 = vmatpush1.msra.mxu0 %v2762
    %v2764 = vand.u32 %v1443, 4294901760
    %2765 = vmatprep.subr.mxu0 %v2764
    %v2766 = vand.u32 %v1442, 4294901760
    %2767 = vmatpush1.msra.mxu0 %v2766
    %v2768 = vand.u32 %v1438, 4294901760
    %2769 = vmatprep.subr.mxu0 %v2768
    %v2770 = vand.u32 %v1437, 4294901760
    %2771 = vmatpush1.msra.mxu0 %v2770
    %v2772 = vand.u32 %v1433, 4294901760
    %2773 = vmatprep.subr.mxu0 %v2772
    %v2774 = vand.u32 %v1432, 4294901760
    %2775 = vmatpush1.msra.mxu0 %v2774
    %v2776 = vand.u32 %v1428, 4294901760
    %2777 = vmatprep.subr.mxu0 %v2776
    %v2778 = vand.u32 %v1427, 4294901760
    %2779 = vmatpush1.msra.mxu0 %v2778
    %v2780 = vand.u32 %v1423, 4294901760
    %2781 = vmatprep.subr.mxu0 %v2780
    %v2782 = vand.u32 %v1422, 4294901760
    %2783 = vmatpush1.msra.mxu0 %v2782
    %v2784 = vand.u32 %v1418, 4294901760
    %2785 = vmatprep.subr.mxu0 %v2784
    %v2786 = vand.u32 %v1417, 4294901760
    %2787 = vmatpush1.msra.mxu0 %v2786
    %v2788 = vand.u32 %v1413, 4294901760
    %2789 = vmatprep.subr.mxu0 %v2788
    %v2790 = vand.u32 %v1412, 4294901760
    %2791 = vmatpush1.msra.mxu0 %v2790
    %v2792 = vand.u32 %v1408, 4294901760
    %2793 = vmatprep.subr.mxu0 %v2792
    %v2794 = vand.u32 %v1407, 4294901760
    %2795 = vmatpush1.msra.mxu0 %v2794
    %v2796 = vand.u32 %v1403, 4294901760
    %2797 = vmatprep.subr.mxu0 %v2796
    %v2798 = vand.u32 %v1402, 4294901760
    %2799 = vmatpush1.msra.mxu0 %v2798
    %v2800 = vand.u32 %v1558, 4294901760
    %2801 = vmatprep.subr.mxu0 %v2800
    %v2802 = vand.u32 %v1557, 4294901760
    %2803 = vmatpush2.msra.mxu0 %v2802
    %v2804 = vand.u32 %v1553, 4294901760
    %2805 = vmatprep.subr.mxu0 %v2804
    %v2806 = vand.u32 %v1552, 4294901760
    %2807 = vmatpush2.msra.mxu0 %v2806
    %v2808 = vand.u32 %v1548, 4294901760
    %2809 = vmatprep.subr.mxu0 %v2808
    %v2810 = vand.u32 %v1547, 4294901760
    %2811 = vmatpush2.msra.mxu0 %v2810
    %v2812 = vand.u32 %v1543, 4294901760
    %2813 = vmatprep.subr.mxu0 %v2812
    %v2814 = vand.u32 %v1542, 4294901760
    %2815 = vmatpush2.msra.mxu0 %v2814
    %v2816 = vand.u32 %v1538, 4294901760
    %2817 = vmatprep.subr.mxu0 %v2816
    %v2818 = vand.u32 %v1537, 4294901760
    %2819 = vmatpush2.msra.mxu0 %v2818
    %v2820 = vand.u32 %v1533, 4294901760
    %2821 = vmatprep.subr.mxu0 %v2820
    %v2822 = vand.u32 %v1532, 4294901760
    %2823 = vmatpush2.msra.mxu0 %v2822
    %v2824 = vand.u32 %v1528, 4294901760
    %2825 = vmatprep.subr.mxu0 %v2824
    %v2826 = vand.u32 %v1527, 4294901760
    %2827 = vmatpush2.msra.mxu0 %v2826
    %v2828 = vand.u32 %v1523, 4294901760
    %2829 = vmatprep.subr.mxu0 %v2828
    %v2830 = vand.u32 %v1522, 4294901760
    %2831 = vmatpush2.msra.mxu0 %v2830
    %v2832 = vand.u32 %v1518, 4294901760
    %2833 = vmatprep.subr.mxu0 %v2832
    %v2834 = vand.u32 %v1517, 4294901760
    %2835 = vmatpush2.msra.mxu0 %v2834
    %v2836 = vand.u32 %v1513, 4294901760
    %2837 = vmatprep.subr.mxu0 %v2836
    %v2838 = vand.u32 %v1512, 4294901760
    %2839 = vmatpush2.msra.mxu0 %v2838
    %v2840 = vand.u32 %v1508, 4294901760
    %2841 = vmatprep.subr.mxu0 %v2840
    %v2842 = vand.u32 %v1507, 4294901760
    %2843 = vmatpush2.msra.mxu0 %v2842
    %v2844 = vand.u32 %v1503, 4294901760
    %2845 = vmatprep.subr.mxu0 %v2844
    %v2846 = vand.u32 %v1502, 4294901760
    %2847 = vmatpush2.msra.mxu0 %v2846
    %v2848 = vand.u32 %v1498, 4294901760
    %2849 = vmatprep.subr.mxu0 %v2848
    %v2850 = vand.u32 %v1497, 4294901760
    %2851 = vmatpush2.msra.mxu0 %v2850
    %v2852 = vand.u32 %v1493, 4294901760
    %2853 = vmatprep.subr.mxu0 %v2852
    %v2854 = vand.u32 %v1492, 4294901760
    %2855 = vmatpush2.msra.mxu0 %v2854
    %v2856 = vand.u32 %v1488, 4294901760
    %2857 = vmatprep.subr.mxu0 %v2856
    %v2858 = vand.u32 %v1487, 4294901760
    %2859 = vmatpush2.msra.mxu0 %v2858
    %v2860 = vand.u32 %v1483, 4294901760
    %2861 = vmatprep.subr.mxu0 %v2860
    %v2862 = vand.u32 %v1482, 4294901760
    %2863 = vmatpush2.msra.mxu0 %v2862
    %v2864 = vand.u32 %v1401, 4294901760
    %2865 = vmatprep.mubr.f32.mxu0 %v2864
    %v2866 = vand.u32 %v1400, 4294901760
    %2867 = vmatmul.mubr.f32.gmra.mxu0 %v2866
    %v2868 = vpop.f32.mrf.mxu0
    %v2869 = vadd.f32 %v2732, %v2868
    %v2870 = vpop.f32.mrf.mxu0
    %v2871 = vadd.f32 %v2734, %v2870
    %2872 = vdwg.mxu0
    %v2873 = vand.u32 %v1480, 4294901760
    %2874 = vmatprep.subr.mxu0 %v2873
    %v2875 = vand.u32 %v1479, 4294901760
    %2876 = vmatpush1.msra.mxu0 %v2875
    %v2877 = vand.u32 %v1475, 4294901760
    %2878 = vmatprep.subr.mxu0 %v2877
    %v2879 = vand.u32 %v1474, 4294901760
    %2880 = vmatpush1.msra.mxu0 %v2879
    %v2881 = vand.u32 %v1470, 4294901760
    %2882 = vmatprep.subr.mxu0 %v2881
    %v2883 = vand.u32 %v1469, 4294901760
    %2884 = vmatpush1.msra.mxu0 %v2883
    %v2885 = vand.u32 %v1465, 4294901760
    %2886 = vmatprep.subr.mxu0 %v2885
    %v2887 = vand.u32 %v1464, 4294901760
    %2888 = vmatpush1.msra.mxu0 %v2887
    %v2889 = vand.u32 %v1460, 4294901760
    %2890 = vmatprep.subr.mxu0 %v2889
    %v2891 = vand.u32 %v1459, 4294901760
    %2892 = vmatpush1.msra.mxu0 %v2891
    %v2893 = vand.u32 %v1455, 4294901760
    %2894 = vmatprep.subr.mxu0 %v2893
    %v2895 = vand.u32 %v1454, 4294901760
    %2896 = vmatpush1.msra.mxu0 %v2895
    %v2897 = vand.u32 %v1450, 4294901760
    %2898 = vmatprep.subr.mxu0 %v2897
    %v2899 = vand.u32 %v1449, 4294901760
    %2900 = vmatpush1.msra.mxu0 %v2899
    %v2901 = vand.u32 %v1445, 4294901760
    %2902 = vmatprep.subr.mxu0 %v2901
    %v2903 = vand.u32 %v1444, 4294901760
    %2904 = vmatpush1.msra.mxu0 %v2903
    %v2905 = vand.u32 %v1440, 4294901760
    %2906 = vmatprep.subr.mxu0 %v2905
    %v2907 = vand.u32 %v1439, 4294901760
    %2908 = vmatpush1.msra.mxu0 %v2907
    %v2909 = vand.u32 %v1435, 4294901760
    %2910 = vmatprep.subr.mxu0 %v2909
    %v2911 = vand.u32 %v1434, 4294901760
    %2912 = vmatpush1.msra.mxu0 %v2911
    %v2913 = vand.u32 %v1430, 4294901760
    %2914 = vmatprep.subr.mxu0 %v2913
    %v2915 = vand.u32 %v1429, 4294901760
    %2916 = vmatpush1.msra.mxu0 %v2915
    %v2917 = vand.u32 %v1425, 4294901760
    %2918 = vmatprep.subr.mxu0 %v2917
    %v2919 = vand.u32 %v1424, 4294901760
    %2920 = vmatpush1.msra.mxu0 %v2919
    %v2921 = vand.u32 %v1420, 4294901760
    %2922 = vmatprep.subr.mxu0 %v2921
    %v2923 = vand.u32 %v1419, 4294901760
    %2924 = vmatpush1.msra.mxu0 %v2923
    %v2925 = vand.u32 %v1415, 4294901760
    %2926 = vmatprep.subr.mxu0 %v2925
    %v2927 = vand.u32 %v1414, 4294901760
    %2928 = vmatpush1.msra.mxu0 %v2927
    %v2929 = vand.u32 %v1410, 4294901760
    %2930 = vmatprep.subr.mxu0 %v2929
    %v2931 = vand.u32 %v1409, 4294901760
    %2932 = vmatpush1.msra.mxu0 %v2931
    %v2933 = vand.u32 %v1405, 4294901760
    %2934 = vmatprep.subr.mxu0 %v2933
    %v2935 = vand.u32 %v1404, 4294901760
    %2936 = vmatpush1.msra.mxu0 %v2935
    %v2937 = vand.u32 %v1560, 4294901760
    %2938 = vmatprep.subr.mxu0 %v2937
    %v2939 = vand.u32 %v1559, 4294901760
    %2940 = vmatpush2.msra.mxu0 %v2939
    %v2941 = vand.u32 %v1555, 4294901760
    %2942 = vmatprep.subr.mxu0 %v2941
    %v2943 = vand.u32 %v1554, 4294901760
    %2944 = vmatpush2.msra.mxu0 %v2943
    %v2945 = vand.u32 %v1550, 4294901760
    %2946 = vmatprep.subr.mxu0 %v2945
    %v2947 = vand.u32 %v1549, 4294901760
    %2948 = vmatpush2.msra.mxu0 %v2947
    %v2949 = vand.u32 %v1545, 4294901760
    %2950 = vmatprep.subr.mxu0 %v2949
    %v2951 = vand.u32 %v1544, 4294901760
    %2952 = vmatpush2.msra.mxu0 %v2951
    %v2953 = vand.u32 %v1540, 4294901760
    %2954 = vmatprep.subr.mxu0 %v2953
    %v2955 = vand.u32 %v1539, 4294901760
    %2956 = vmatpush2.msra.mxu0 %v2955
    %v2957 = vand.u32 %v1535, 4294901760
    %2958 = vmatprep.subr.mxu0 %v2957
    %v2959 = vand.u32 %v1534, 4294901760
    %2960 = vmatpush2.msra.mxu0 %v2959
    %v2961 = vand.u32 %v1530, 4294901760
    %2962 = vmatprep.subr.mxu0 %v2961
    %v2963 = vand.u32 %v1529, 4294901760
    %2964 = vmatpush2.msra.mxu0 %v2963
    %v2965 = vand.u32 %v1525, 4294901760
    %2966 = vmatprep.subr.mxu0 %v2965
    %v2967 = vand.u32 %v1524, 4294901760
    %2968 = vmatpush2.msra.mxu0 %v2967
    %v2969 = vand.u32 %v1520, 4294901760
    %2970 = vmatprep.subr.mxu0 %v2969
    %v2971 = vand.u32 %v1519, 4294901760
    %2972 = vmatpush2.msra.mxu0 %v2971
    %v2973 = vand.u32 %v1515, 4294901760
    %2974 = vmatprep.subr.mxu0 %v2973
    %v2975 = vand.u32 %v1514, 4294901760
    %2976 = vmatpush2.msra.mxu0 %v2975
    %v2977 = vand.u32 %v1510, 4294901760
    %2978 = vmatprep.subr.mxu0 %v2977
    %v2979 = vand.u32 %v1509, 4294901760
    %2980 = vmatpush2.msra.mxu0 %v2979
    %v2981 = vand.u32 %v1505, 4294901760
    %2982 = vmatprep.subr.mxu0 %v2981
    %v2983 = vand.u32 %v1504, 4294901760
    %2984 = vmatpush2.msra.mxu0 %v2983
    %v2985 = vand.u32 %v1500, 4294901760
    %2986 = vmatprep.subr.mxu0 %v2985
    %v2987 = vand.u32 %v1499, 4294901760
    %2988 = vmatpush2.msra.mxu0 %v2987
    %v2989 = vand.u32 %v1495, 4294901760
    %2990 = vmatprep.subr.mxu0 %v2989
    %v2991 = vand.u32 %v1494, 4294901760
    %2992 = vmatpush2.msra.mxu0 %v2991
    %v2993 = vand.u32 %v1490, 4294901760
    %2994 = vmatprep.subr.mxu0 %v2993
    %v2995 = vand.u32 %v1489, 4294901760
    %2996 = vmatpush2.msra.mxu0 %v2995
    %v2997 = vand.u32 %v1485, 4294901760
    %2998 = vmatprep.subr.mxu0 %v2997
    %v2999 = vand.u32 %v1484, 4294901760
    %3000 = vmatpush2.msra.mxu0 %v2999
    %v3001 = vand.u32 %v1401, 4294901760
    %v3002 = vsub.f32 %v1401, %v3001
    %v3003 = vand.u32 %v3002, 4294901760
    %v3004 = vsub.f32 %v3002, %v3003
    %v3005 = vand.u32 %v3004, 4294901760
    %3006 = vmatprep.mubr.f32.mxu0 %v3005
    %v3007 = vand.u32 %v1400, 4294901760
    %v3008 = vsub.f32 %v1400, %v3007
    %v3009 = vand.u32 %v3008, 4294901760
    %v3010 = vsub.f32 %v3008, %v3009
    %v3011 = vand.u32 %v3010, 4294901760
    %3012 = vmatmul.mubr.f32.gmra.mxu0 %v3011
    %v3013 = vpop.f32.mrf.mxu0
    %v3014 = vadd.f32 %v1575, %v3013
    %v3015 = vpop.f32.mrf.mxu0
    %v3016 = vadd.f32 %v1579, %v3015
    %3017 = vdwg.mxu0
    %v3018 = vand.u32 %v1480, 4294901760
    %v3019 = vsub.f32 %v1480, %v3018
    %v3020 = vand.u32 %v3019, 4294901760
    %v3021 = vsub.f32 %v3019, %v3020
    %v3022 = vand.u32 %v3021, 4294901760
    %3023 = vmatprep.subr.mxu0 %v3022
    %v3024 = vand.u32 %v1479, 4294901760
    %v3025 = vsub.f32 %v1479, %v3024
    %v3026 = vand.u32 %v3025, 4294901760
    %v3027 = vsub.f32 %v3025, %v3026
    %v3028 = vand.u32 %v3027, 4294901760
    %3029 = vmatpush1.msra.mxu0 %v3028
    %v3030 = vand.u32 %v1475, 4294901760
    %v3031 = vsub.f32 %v1475, %v3030
    %v3032 = vand.u32 %v3031, 4294901760
    %v3033 = vsub.f32 %v3031, %v3032
    %v3034 = vand.u32 %v3033, 4294901760
    %3035 = vmatprep.subr.mxu0 %v3034
    %v3036 = vand.u32 %v1474, 4294901760
    %v3037 = vsub.f32 %v1474, %v3036
    %v3038 = vand.u32 %v3037, 4294901760
    %v3039 = vsub.f32 %v3037, %v3038
    %v3040 = vand.u32 %v3039, 4294901760
    %3041 = vmatpush1.msra.mxu0 %v3040
    %v3042 = vand.u32 %v1470, 4294901760
    %v3043 = vsub.f32 %v1470, %v3042
    %v3044 = vand.u32 %v3043, 4294901760
    %v3045 = vsub.f32 %v3043, %v3044
    %v3046 = vand.u32 %v3045, 4294901760
    %3047 = vmatprep.subr.mxu0 %v3046
    %v3048 = vand.u32 %v1469, 4294901760
    %v3049 = vsub.f32 %v1469, %v3048
    %v3050 = vand.u32 %v3049, 4294901760
    %v3051 = vsub.f32 %v3049, %v3050
    %v3052 = vand.u32 %v3051, 4294901760
    %3053 = vmatpush1.msra.mxu0 %v3052
    %v3054 = vand.u32 %v1465, 4294901760
    %v3055 = vsub.f32 %v1465, %v3054
    %v3056 = vand.u32 %v3055, 4294901760
    %v3057 = vsub.f32 %v3055, %v3056
    %v3058 = vand.u32 %v3057, 4294901760
    %3059 = vmatprep.subr.mxu0 %v3058
    %v3060 = vand.u32 %v1464, 4294901760
    %v3061 = vsub.f32 %v1464, %v3060
    %v3062 = vand.u32 %v3061, 4294901760
    %v3063 = vsub.f32 %v3061, %v3062
    %v3064 = vand.u32 %v3063, 4294901760
    %3065 = vmatpush1.msra.mxu0 %v3064
    %v3066 = vand.u32 %v1460, 4294901760
    %v3067 = vsub.f32 %v1460, %v3066
    %v3068 = vand.u32 %v3067, 4294901760
    %v3069 = vsub.f32 %v3067, %v3068
    %v3070 = vand.u32 %v3069, 4294901760
    %3071 = vmatprep.subr.mxu0 %v3070
    %v3072 = vand.u32 %v1459, 4294901760
    %v3073 = vsub.f32 %v1459, %v3072
    %v3074 = vand.u32 %v3073, 4294901760
    %v3075 = vsub.f32 %v3073, %v3074
    %v3076 = vand.u32 %v3075, 4294901760
    %3077 = vmatpush1.msra.mxu0 %v3076
    %v3078 = vand.u32 %v1455, 4294901760
    %v3079 = vsub.f32 %v1455, %v3078
    %v3080 = vand.u32 %v3079, 4294901760
    %v3081 = vsub.f32 %v3079, %v3080
    %v3082 = vand.u32 %v3081, 4294901760
    %3083 = vmatprep.subr.mxu0 %v3082
    %v3084 = vand.u32 %v1454, 4294901760
    %v3085 = vsub.f32 %v1454, %v3084
    %v3086 = vand.u32 %v3085, 4294901760
    %v3087 = vsub.f32 %v3085, %v3086
    %v3088 = vand.u32 %v3087, 4294901760
    %3089 = vmatpush1.msra.mxu0 %v3088
    %v3090 = vand.u32 %v1450, 4294901760
    %v3091 = vsub.f32 %v1450, %v3090
    %v3092 = vand.u32 %v3091, 4294901760
    %v3093 = vsub.f32 %v3091, %v3092
    %v3094 = vand.u32 %v3093, 4294901760
    %3095 = vmatprep.subr.mxu0 %v3094
    %v3096 = vand.u32 %v1449, 4294901760
    %v3097 = vsub.f32 %v1449, %v3096
    %v3098 = vand.u32 %v3097, 4294901760
    %v3099 = vsub.f32 %v3097, %v3098
    %v3100 = vand.u32 %v3099, 4294901760
    %3101 = vmatpush1.msra.mxu0 %v3100
    %v3102 = vand.u32 %v1445, 4294901760
    %v3103 = vsub.f32 %v1445, %v3102
    %v3104 = vand.u32 %v3103, 4294901760
    %v3105 = vsub.f32 %v3103, %v3104
    %v3106 = vand.u32 %v3105, 4294901760
    %3107 = vmatprep.subr.mxu0 %v3106
    %v3108 = vand.u32 %v1444, 4294901760
    %v3109 = vsub.f32 %v1444, %v3108
    %v3110 = vand.u32 %v3109, 4294901760
    %v3111 = vsub.f32 %v3109, %v3110
    %v3112 = vand.u32 %v3111, 4294901760
    %3113 = vmatpush1.msra.mxu0 %v3112
    %v3114 = vand.u32 %v1440, 4294901760
    %v3115 = vsub.f32 %v1440, %v3114
    %v3116 = vand.u32 %v3115, 4294901760
    %v3117 = vsub.f32 %v3115, %v3116
    %v3118 = vand.u32 %v3117, 4294901760
    %3119 = vmatprep.subr.mxu0 %v3118
    %v3120 = vand.u32 %v1439, 4294901760
    %v3121 = vsub.f32 %v1439, %v3120
    %v3122 = vand.u32 %v3121, 4294901760
    %v3123 = vsub.f32 %v3121, %v3122
    %v3124 = vand.u32 %v3123, 4294901760
    %3125 = vmatpush1.msra.mxu0 %v3124
    %v3126 = vand.u32 %v1435, 4294901760
    %v3127 = vsub.f32 %v1435, %v3126
    %v3128 = vand.u32 %v3127, 4294901760
    %v3129 = vsub.f32 %v3127, %v3128
    %v3130 = vand.u32 %v3129, 4294901760
    %3131 = vmatprep.subr.mxu0 %v3130
    %v3132 = vand.u32 %v1434, 4294901760
    %v3133 = vsub.f32 %v1434, %v3132
    %v3134 = vand.u32 %v3133, 4294901760
    %v3135 = vsub.f32 %v3133, %v3134
    %v3136 = vand.u32 %v3135, 4294901760
    %3137 = vmatpush1.msra.mxu0 %v3136
    %v3138 = vand.u32 %v1430, 4294901760
    %v3139 = vsub.f32 %v1430, %v3138
    %v3140 = vand.u32 %v3139, 4294901760
    %v3141 = vsub.f32 %v3139, %v3140
    %v3142 = vand.u32 %v3141, 4294901760
    %3143 = vmatprep.subr.mxu0 %v3142
    %v3144 = vand.u32 %v1429, 4294901760
    %v3145 = vsub.f32 %v1429, %v3144
    %v3146 = vand.u32 %v3145, 4294901760
    %v3147 = vsub.f32 %v3145, %v3146
    %v3148 = vand.u32 %v3147, 4294901760
    %3149 = vmatpush1.msra.mxu0 %v3148
    %v3150 = vand.u32 %v1425, 4294901760
    %v3151 = vsub.f32 %v1425, %v3150
    %v3152 = vand.u32 %v3151, 4294901760
    %v3153 = vsub.f32 %v3151, %v3152
    %v3154 = vand.u32 %v3153, 4294901760
    %3155 = vmatprep.subr.mxu0 %v3154
    %v3156 = vand.u32 %v1424, 4294901760
    %v3157 = vsub.f32 %v1424, %v3156
    %v3158 = vand.u32 %v3157, 4294901760
    %v3159 = vsub.f32 %v3157, %v3158
    %v3160 = vand.u32 %v3159, 4294901760
    %3161 = vmatpush1.msra.mxu0 %v3160
    %v3162 = vand.u32 %v1420, 4294901760
    %v3163 = vsub.f32 %v1420, %v3162
    %v3164 = vand.u32 %v3163, 4294901760
    %v3165 = vsub.f32 %v3163, %v3164
    %v3166 = vand.u32 %v3165, 4294901760
    %3167 = vmatprep.subr.mxu0 %v3166
    %v3168 = vand.u32 %v1419, 4294901760
    %v3169 = vsub.f32 %v1419, %v3168
    %v3170 = vand.u32 %v3169, 4294901760
    %v3171 = vsub.f32 %v3169, %v3170
    %v3172 = vand.u32 %v3171, 4294901760
    %3173 = vmatpush1.msra.mxu0 %v3172
    %v3174 = vand.u32 %v1415, 4294901760
    %v3175 = vsub.f32 %v1415, %v3174
    %v3176 = vand.u32 %v3175, 4294901760
    %v3177 = vsub.f32 %v3175, %v3176
    %v3178 = vand.u32 %v3177, 4294901760
    %3179 = vmatprep.subr.mxu0 %v3178
    %v3180 = vand.u32 %v1414, 4294901760
    %v3181 = vsub.f32 %v1414, %v3180
    %v3182 = vand.u32 %v3181, 4294901760
    %v3183 = vsub.f32 %v3181, %v3182
    %v3184 = vand.u32 %v3183, 4294901760
    %3185 = vmatpush1.msra.mxu0 %v3184
    %v3186 = vand.u32 %v1410, 4294901760
    %v3187 = vsub.f32 %v1410, %v3186
    %v3188 = vand.u32 %v3187, 4294901760
    %v3189 = vsub.f32 %v3187, %v3188
    %v3190 = vand.u32 %v3189, 4294901760
    %3191 = vmatprep.subr.mxu0 %v3190
    %v3192 = vand.u32 %v1409, 4294901760
    %v3193 = vsub.f32 %v1409, %v3192
    %v3194 = vand.u32 %v3193, 4294901760
    %v3195 = vsub.f32 %v3193, %v3194
    %v3196 = vand.u32 %v3195, 4294901760
    %3197 = vmatpush1.msra.mxu0 %v3196
    %v3198 = vand.u32 %v1405, 4294901760
    %v3199 = vsub.f32 %v1405, %v3198
    %v3200 = vand.u32 %v3199, 4294901760
    %v3201 = vsub.f32 %v3199, %v3200
    %v3202 = vand.u32 %v3201, 4294901760
    %3203 = vmatprep.subr.mxu0 %v3202
    %v3204 = vand.u32 %v1404, 4294901760
    %v3205 = vsub.f32 %v1404, %v3204
    %v3206 = vand.u32 %v3205, 4294901760
    %v3207 = vsub.f32 %v3205, %v3206
    %v3208 = vand.u32 %v3207, 4294901760
    %3209 = vmatpush1.msra.mxu0 %v3208
    %v3210 = vand.u32 %v1560, 4294901760
    %v3211 = vsub.f32 %v1560, %v3210
    %v3212 = vand.u32 %v3211, 4294901760
    %v3213 = vsub.f32 %v3211, %v3212
    %v3214 = vand.u32 %v3213, 4294901760
    %3215 = vmatprep.subr.mxu0 %v3214
    %v3216 = vand.u32 %v1559, 4294901760
    %v3217 = vsub.f32 %v1559, %v3216
    %v3218 = vand.u32 %v3217, 4294901760
    %v3219 = vsub.f32 %v3217, %v3218
    %v3220 = vand.u32 %v3219, 4294901760
    %3221 = vmatpush2.msra.mxu0 %v3220
    %v3222 = vand.u32 %v1555, 4294901760
    %v3223 = vsub.f32 %v1555, %v3222
    %v3224 = vand.u32 %v3223, 4294901760
    %v3225 = vsub.f32 %v3223, %v3224
    %v3226 = vand.u32 %v3225, 4294901760
    %3227 = vmatprep.subr.mxu0 %v3226
    %v3228 = vand.u32 %v1554, 4294901760
    %v3229 = vsub.f32 %v1554, %v3228
    %v3230 = vand.u32 %v3229, 4294901760
    %v3231 = vsub.f32 %v3229, %v3230
    %v3232 = vand.u32 %v3231, 4294901760
    %3233 = vmatpush2.msra.mxu0 %v3232
    %v3234 = vand.u32 %v1550, 4294901760
    %v3235 = vsub.f32 %v1550, %v3234
    %v3236 = vand.u32 %v3235, 4294901760
    %v3237 = vsub.f32 %v3235, %v3236
    %v3238 = vand.u32 %v3237, 4294901760
    %3239 = vmatprep.subr.mxu0 %v3238
    %v3240 = vand.u32 %v1549, 4294901760
    %v3241 = vsub.f32 %v1549, %v3240
    %v3242 = vand.u32 %v3241, 4294901760
    %v3243 = vsub.f32 %v3241, %v3242
    %v3244 = vand.u32 %v3243, 4294901760
    %3245 = vmatpush2.msra.mxu0 %v3244
    %v3246 = vand.u32 %v1545, 4294901760
    %v3247 = vsub.f32 %v1545, %v3246
    %v3248 = vand.u32 %v3247, 4294901760
    %v3249 = vsub.f32 %v3247, %v3248
    %v3250 = vand.u32 %v3249, 4294901760
    %3251 = vmatprep.subr.mxu0 %v3250
    %v3252 = vand.u32 %v1544, 4294901760
    %v3253 = vsub.f32 %v1544, %v3252
    %v3254 = vand.u32 %v3253, 4294901760
    %v3255 = vsub.f32 %v3253, %v3254
    %v3256 = vand.u32 %v3255, 4294901760
    %3257 = vmatpush2.msra.mxu0 %v3256
    %v3258 = vand.u32 %v1540, 4294901760
    %v3259 = vsub.f32 %v1540, %v3258
    %v3260 = vand.u32 %v3259, 4294901760
    %v3261 = vsub.f32 %v3259, %v3260
    %v3262 = vand.u32 %v3261, 4294901760
    %3263 = vmatprep.subr.mxu0 %v3262
    %v3264 = vand.u32 %v1539, 4294901760
    %v3265 = vsub.f32 %v1539, %v3264
    %v3266 = vand.u32 %v3265, 4294901760
    %v3267 = vsub.f32 %v3265, %v3266
    %v3268 = vand.u32 %v3267, 4294901760
    %3269 = vmatpush2.msra.mxu0 %v3268
    %v3270 = vand.u32 %v1535, 4294901760
    %v3271 = vsub.f32 %v1535, %v3270
    %v3272 = vand.u32 %v3271, 4294901760
    %v3273 = vsub.f32 %v3271, %v3272
    %v3274 = vand.u32 %v3273, 4294901760
    %3275 = vmatprep.subr.mxu0 %v3274
    %v3276 = vand.u32 %v1534, 4294901760
    %v3277 = vsub.f32 %v1534, %v3276
    %v3278 = vand.u32 %v3277, 4294901760
    %v3279 = vsub.f32 %v3277, %v3278
    %v3280 = vand.u32 %v3279, 4294901760
    %3281 = vmatpush2.msra.mxu0 %v3280
    %v3282 = vand.u32 %v1530, 4294901760
    %v3283 = vsub.f32 %v1530, %v3282
    %v3284 = vand.u32 %v3283, 4294901760
    %v3285 = vsub.f32 %v3283, %v3284
    %v3286 = vand.u32 %v3285, 4294901760
    %3287 = vmatprep.subr.mxu0 %v3286
    %v3288 = vand.u32 %v1529, 4294901760
    %v3289 = vsub.f32 %v1529, %v3288
    %v3290 = vand.u32 %v3289, 4294901760
    %v3291 = vsub.f32 %v3289, %v3290
    %v3292 = vand.u32 %v3291, 4294901760
    %3293 = vmatpush2.msra.mxu0 %v3292
    %v3294 = vand.u32 %v1525, 4294901760
    %v3295 = vsub.f32 %v1525, %v3294
    %v3296 = vand.u32 %v3295, 4294901760
    %v3297 = vsub.f32 %v3295, %v3296
    %v3298 = vand.u32 %v3297, 4294901760
    %3299 = vmatprep.subr.mxu0 %v3298
    %v3300 = vand.u32 %v1524, 4294901760
    %v3301 = vsub.f32 %v1524, %v3300
    %v3302 = vand.u32 %v3301, 4294901760
    %v3303 = vsub.f32 %v3301, %v3302
    %v3304 = vand.u32 %v3303, 4294901760
    %3305 = vmatpush2.msra.mxu0 %v3304
    %v3306 = vand.u32 %v1520, 4294901760
    %v3307 = vsub.f32 %v1520, %v3306
    %v3308 = vand.u32 %v3307, 4294901760
    %v3309 = vsub.f32 %v3307, %v3308
    %v3310 = vand.u32 %v3309, 4294901760
    %3311 = vmatprep.subr.mxu0 %v3310
    %v3312 = vand.u32 %v1519, 4294901760
    %v3313 = vsub.f32 %v1519, %v3312
    %v3314 = vand.u32 %v3313, 4294901760
    %v3315 = vsub.f32 %v3313, %v3314
    %v3316 = vand.u32 %v3315, 4294901760
    %3317 = vmatpush2.msra.mxu0 %v3316
    %v3318 = vand.u32 %v1515, 4294901760
    %v3319 = vsub.f32 %v1515, %v3318
    %v3320 = vand.u32 %v3319, 4294901760
    %v3321 = vsub.f32 %v3319, %v3320
    %v3322 = vand.u32 %v3321, 4294901760
    %3323 = vmatprep.subr.mxu0 %v3322
    %v3324 = vand.u32 %v1514, 4294901760
    %v3325 = vsub.f32 %v1514, %v3324
    %v3326 = vand.u32 %v3325, 4294901760
    %v3327 = vsub.f32 %v3325, %v3326
    %v3328 = vand.u32 %v3327, 4294901760
    %3329 = vmatpush2.msra.mxu0 %v3328
    %v3330 = vand.u32 %v1510, 4294901760
    %v3331 = vsub.f32 %v1510, %v3330
    %v3332 = vand.u32 %v3331, 4294901760
    %v3333 = vsub.f32 %v3331, %v3332
    %v3334 = vand.u32 %v3333, 4294901760
    %3335 = vmatprep.subr.mxu0 %v3334
    %v3336 = vand.u32 %v1509, 4294901760
    %v3337 = vsub.f32 %v1509, %v3336
    %v3338 = vand.u32 %v3337, 4294901760
    %v3339 = vsub.f32 %v3337, %v3338
    %v3340 = vand.u32 %v3339, 4294901760
    %3341 = vmatpush2.msra.mxu0 %v3340
    %v3342 = vand.u32 %v1505, 4294901760
    %v3343 = vsub.f32 %v1505, %v3342
    %v3344 = vand.u32 %v3343, 4294901760
    %v3345 = vsub.f32 %v3343, %v3344
    %v3346 = vand.u32 %v3345, 4294901760
    %3347 = vmatprep.subr.mxu0 %v3346
    %v3348 = vand.u32 %v1504, 4294901760
    %v3349 = vsub.f32 %v1504, %v3348
    %v3350 = vand.u32 %v3349, 4294901760
    %v3351 = vsub.f32 %v3349, %v3350
    %v3352 = vand.u32 %v3351, 4294901760
    %3353 = vmatpush2.msra.mxu0 %v3352
    %v3354 = vand.u32 %v1500, 4294901760
    %v3355 = vsub.f32 %v1500, %v3354
    %v3356 = vand.u32 %v3355, 4294901760
    %v3357 = vsub.f32 %v3355, %v3356
    %v3358 = vand.u32 %v3357, 4294901760
    %3359 = vmatprep.subr.mxu0 %v3358
    %v3360 = vand.u32 %v1499, 4294901760
    %v3361 = vsub.f32 %v1499, %v3360
    %v3362 = vand.u32 %v3361, 4294901760
    %v3363 = vsub.f32 %v3361, %v3362
    %v3364 = vand.u32 %v3363, 4294901760
    %3365 = vmatpush2.msra.mxu0 %v3364
    %v3366 = vand.u32 %v1495, 4294901760
    %v3367 = vsub.f32 %v1495, %v3366
    %v3368 = vand.u32 %v3367, 4294901760
    %v3369 = vsub.f32 %v3367, %v3368
    %v3370 = vand.u32 %v3369, 4294901760
    %3371 = vmatprep.subr.mxu0 %v3370
    %v3372 = vand.u32 %v1494, 4294901760
    %v3373 = vsub.f32 %v1494, %v3372
    %v3374 = vand.u32 %v3373, 4294901760
    %v3375 = vsub.f32 %v3373, %v3374
    %v3376 = vand.u32 %v3375, 4294901760
    %3377 = vmatpush2.msra.mxu0 %v3376
    %v3378 = vand.u32 %v1490, 4294901760
    %v3379 = vsub.f32 %v1490, %v3378
    %v3380 = vand.u32 %v3379, 4294901760
    %v3381 = vsub.f32 %v3379, %v3380
    %v3382 = vand.u32 %v3381, 4294901760
    %3383 = vmatprep.subr.mxu0 %v3382
    %v3384 = vand.u32 %v1489, 4294901760
    %v3385 = vsub.f32 %v1489, %v3384
    %v3386 = vand.u32 %v3385, 4294901760
    %v3387 = vsub.f32 %v3385, %v3386
    %v3388 = vand.u32 %v3387, 4294901760
    %3389 = vmatpush2.msra.mxu0 %v3388
    %v3390 = vand.u32 %v1485, 4294901760
    %v3391 = vsub.f32 %v1485, %v3390
    %v3392 = vand.u32 %v3391, 4294901760
    %v3393 = vsub.f32 %v3391, %v3392
    %v3394 = vand.u32 %v3393, 4294901760
    %3395 = vmatprep.subr.mxu0 %v3394
    %v3396 = vand.u32 %v1484, 4294901760
    %v3397 = vsub.f32 %v1484, %v3396
    %v3398 = vand.u32 %v3397, 4294901760
    %v3399 = vsub.f32 %v3397, %v3398
    %v3400 = vand.u32 %v3399, 4294901760
    %3401 = vmatpush2.msra.mxu0 %v3400
    %v3402 = vand.u32 %v1401, 4294901760
    %3403 = vmatprep.mubr.f32.mxu0 %v3402
    %v3404 = vand.u32 %v1400, 4294901760
    %3405 = vmatmul.mubr.f32.gmra.mxu0 %v3404
    %v3406 = vpop.f32.mrf.mxu0
    %v3407 = vadd.f32 %v3014, %v3406
    %v3408 = vpop.f32.mrf.mxu0
    %v3409 = vadd.f32 %v3016, %v3408
    %3410 = vdwg.mxu0
    %v3411 = vand.u32 %v1480, 4294901760
    %v3412 = vsub.f32 %v1480, %v3411
    %3413 = vmatprep.subr.mxu0 %v3412
    %v3414 = vand.u32 %v1479, 4294901760
    %v3415 = vsub.f32 %v1479, %v3414
    %3416 = vmatpush1.msra.mxu0 %v3415
    %v3417 = vand.u32 %v1475, 4294901760
    %v3418 = vsub.f32 %v1475, %v3417
    %3419 = vmatprep.subr.mxu0 %v3418
    %v3420 = vand.u32 %v1474, 4294901760
    %v3421 = vsub.f32 %v1474, %v3420
    %3422 = vmatpush1.msra.mxu0 %v3421
    %v3423 = vand.u32 %v1470, 4294901760
    %v3424 = vsub.f32 %v1470, %v3423
    %3425 = vmatprep.subr.mxu0 %v3424
    %v3426 = vand.u32 %v1469, 4294901760
    %v3427 = vsub.f32 %v1469, %v3426
    %3428 = vmatpush1.msra.mxu0 %v3427
    %v3429 = vand.u32 %v1465, 4294901760
    %v3430 = vsub.f32 %v1465, %v3429
    %3431 = vmatprep.subr.mxu0 %v3430
    %v3432 = vand.u32 %v1464, 4294901760
    %v3433 = vsub.f32 %v1464, %v3432
    %3434 = vmatpush1.msra.mxu0 %v3433
    %v3435 = vand.u32 %v1460, 4294901760
    %v3436 = vsub.f32 %v1460, %v3435
    %3437 = vmatprep.subr.mxu0 %v3436
    %v3438 = vand.u32 %v1459, 4294901760
    %v3439 = vsub.f32 %v1459, %v3438
    %3440 = vmatpush1.msra.mxu0 %v3439
    %v3441 = vand.u32 %v1455, 4294901760
    %v3442 = vsub.f32 %v1455, %v3441
    %3443 = vmatprep.subr.mxu0 %v3442
    %v3444 = vand.u32 %v1454, 4294901760
    %v3445 = vsub.f32 %v1454, %v3444
    %3446 = vmatpush1.msra.mxu0 %v3445
    %v3447 = vand.u32 %v1450, 4294901760
    %v3448 = vsub.f32 %v1450, %v3447
    %3449 = vmatprep.subr.mxu0 %v3448
    %v3450 = vand.u32 %v1449, 4294901760
    %v3451 = vsub.f32 %v1449, %v3450
    %3452 = vmatpush1.msra.mxu0 %v3451
    %v3453 = vand.u32 %v1445, 4294901760
    %v3454 = vsub.f32 %v1445, %v3453
    %3455 = vmatprep.subr.mxu0 %v3454
    %v3456 = vand.u32 %v1444, 4294901760
    %v3457 = vsub.f32 %v1444, %v3456
    %3458 = vmatpush1.msra.mxu0 %v3457
    %v3459 = vand.u32 %v1440, 4294901760
    %v3460 = vsub.f32 %v1440, %v3459
    %3461 = vmatprep.subr.mxu0 %v3460
    %v3462 = vand.u32 %v1439, 4294901760
    %v3463 = vsub.f32 %v1439, %v3462
    %3464 = vmatpush1.msra.mxu0 %v3463
    %v3465 = vand.u32 %v1435, 4294901760
    %v3466 = vsub.f32 %v1435, %v3465
    %3467 = vmatprep.subr.mxu0 %v3466
    %v3468 = vand.u32 %v1434, 4294901760
    %v3469 = vsub.f32 %v1434, %v3468
    %3470 = vmatpush1.msra.mxu0 %v3469
    %v3471 = vand.u32 %v1430, 4294901760
    %v3472 = vsub.f32 %v1430, %v3471
    %3473 = vmatprep.subr.mxu0 %v3472
    %v3474 = vand.u32 %v1429, 4294901760
    %v3475 = vsub.f32 %v1429, %v3474
    %3476 = vmatpush1.msra.mxu0 %v3475
    %v3477 = vand.u32 %v1425, 4294901760
    %v3478 = vsub.f32 %v1425, %v3477
    %3479 = vmatprep.subr.mxu0 %v3478
    %v3480 = vand.u32 %v1424, 4294901760
    %v3481 = vsub.f32 %v1424, %v3480
    %3482 = vmatpush1.msra.mxu0 %v3481
    %v3483 = vand.u32 %v1420, 4294901760
    %v3484 = vsub.f32 %v1420, %v3483
    %3485 = vmatprep.subr.mxu0 %v3484
    %v3486 = vand.u32 %v1419, 4294901760
    %v3487 = vsub.f32 %v1419, %v3486
    %3488 = vmatpush1.msra.mxu0 %v3487
    %v3489 = vand.u32 %v1415, 4294901760
    %v3490 = vsub.f32 %v1415, %v3489
    %3491 = vmatprep.subr.mxu0 %v3490
    %v3492 = vand.u32 %v1414, 4294901760
    %v3493 = vsub.f32 %v1414, %v3492
    %3494 = vmatpush1.msra.mxu0 %v3493
    %v3495 = vand.u32 %v1410, 4294901760
    %v3496 = vsub.f32 %v1410, %v3495
    %3497 = vmatprep.subr.mxu0 %v3496
    %v3498 = vand.u32 %v1409, 4294901760
    %v3499 = vsub.f32 %v1409, %v3498
    %3500 = vmatpush1.msra.mxu0 %v3499
    %v3501 = vand.u32 %v1405, 4294901760
    %v3502 = vsub.f32 %v1405, %v3501
    %3503 = vmatprep.subr.mxu0 %v3502
    %v3504 = vand.u32 %v1404, 4294901760
    %v3505 = vsub.f32 %v1404, %v3504
    %3506 = vmatpush1.msra.mxu0 %v3505
    %v3507 = vand.u32 %v1560, 4294901760
    %v3508 = vsub.f32 %v1560, %v3507
    %3509 = vmatprep.subr.mxu0 %v3508
    %v3510 = vand.u32 %v1559, 4294901760
    %v3511 = vsub.f32 %v1559, %v3510
    %3512 = vmatpush2.msra.mxu0 %v3511
    %v3513 = vand.u32 %v1555, 4294901760
    %v3514 = vsub.f32 %v1555, %v3513
    %3515 = vmatprep.subr.mxu0 %v3514
    %v3516 = vand.u32 %v1554, 4294901760
    %v3517 = vsub.f32 %v1554, %v3516
    %3518 = vmatpush2.msra.mxu0 %v3517
    %v3519 = vand.u32 %v1550, 4294901760
    %v3520 = vsub.f32 %v1550, %v3519
    %3521 = vmatprep.subr.mxu0 %v3520
    %v3522 = vand.u32 %v1549, 4294901760
    %v3523 = vsub.f32 %v1549, %v3522
    %3524 = vmatpush2.msra.mxu0 %v3523
    %v3525 = vand.u32 %v1545, 4294901760
    %v3526 = vsub.f32 %v1545, %v3525
    %3527 = vmatprep.subr.mxu0 %v3526
    %v3528 = vand.u32 %v1544, 4294901760
    %v3529 = vsub.f32 %v1544, %v3528
    %3530 = vmatpush2.msra.mxu0 %v3529
    %v3531 = vand.u32 %v1540, 4294901760
    %v3532 = vsub.f32 %v1540, %v3531
    %3533 = vmatprep.subr.mxu0 %v3532
    %v3534 = vand.u32 %v1539, 4294901760
    %v3535 = vsub.f32 %v1539, %v3534
    %3536 = vmatpush2.msra.mxu0 %v3535
    %v3537 = vand.u32 %v1535, 4294901760
    %v3538 = vsub.f32 %v1535, %v3537
    %3539 = vmatprep.subr.mxu0 %v3538
    %v3540 = vand.u32 %v1534, 4294901760
    %v3541 = vsub.f32 %v1534, %v3540
    %3542 = vmatpush2.msra.mxu0 %v3541
    %v3543 = vand.u32 %v1530, 4294901760
    %v3544 = vsub.f32 %v1530, %v3543
    %3545 = vmatprep.subr.mxu0 %v3544
    %v3546 = vand.u32 %v1529, 4294901760
    %v3547 = vsub.f32 %v1529, %v3546
    %3548 = vmatpush2.msra.mxu0 %v3547
    %v3549 = vand.u32 %v1525, 4294901760
    %v3550 = vsub.f32 %v1525, %v3549
    %3551 = vmatprep.subr.mxu0 %v3550
    %v3552 = vand.u32 %v1524, 4294901760
    %v3553 = vsub.f32 %v1524, %v3552
    %3554 = vmatpush2.msra.mxu0 %v3553
    %v3555 = vand.u32 %v1520, 4294901760
    %v3556 = vsub.f32 %v1520, %v3555
    %3557 = vmatprep.subr.mxu0 %v3556
    %v3558 = vand.u32 %v1519, 4294901760
    %v3559 = vsub.f32 %v1519, %v3558
    %3560 = vmatpush2.msra.mxu0 %v3559
    %v3561 = vand.u32 %v1515, 4294901760
    %v3562 = vsub.f32 %v1515, %v3561
    %3563 = vmatprep.subr.mxu0 %v3562
    %v3564 = vand.u32 %v1514, 4294901760
    %v3565 = vsub.f32 %v1514, %v3564
    %3566 = vmatpush2.msra.mxu0 %v3565
    %v3567 = vand.u32 %v1510, 4294901760
    %v3568 = vsub.f32 %v1510, %v3567
    %3569 = vmatprep.subr.mxu0 %v3568
    %v3570 = vand.u32 %v1509, 4294901760
    %v3571 = vsub.f32 %v1509, %v3570
    %3572 = vmatpush2.msra.mxu0 %v3571
    %v3573 = vand.u32 %v1505, 4294901760
    %v3574 = vsub.f32 %v1505, %v3573
    %3575 = vmatprep.subr.mxu0 %v3574
    %v3576 = vand.u32 %v1504, 4294901760
    %v3577 = vsub.f32 %v1504, %v3576
    %3578 = vmatpush2.msra.mxu0 %v3577
    %v3579 = vand.u32 %v1500, 4294901760
    %v3580 = vsub.f32 %v1500, %v3579
    %3581 = vmatprep.subr.mxu0 %v3580
    %v3582 = vand.u32 %v1499, 4294901760
    %v3583 = vsub.f32 %v1499, %v3582
    %3584 = vmatpush2.msra.mxu0 %v3583
    %v3585 = vand.u32 %v1495, 4294901760
    %v3586 = vsub.f32 %v1495, %v3585
    %3587 = vmatprep.subr.mxu0 %v3586
    %v3588 = vand.u32 %v1494, 4294901760
    %v3589 = vsub.f32 %v1494, %v3588
    %3590 = vmatpush2.msra.mxu0 %v3589
    %v3591 = vand.u32 %v1490, 4294901760
    %v3592 = vsub.f32 %v1490, %v3591
    %3593 = vmatprep.subr.mxu0 %v3592
    %v3594 = vand.u32 %v1489, 4294901760
    %v3595 = vsub.f32 %v1489, %v3594
    %3596 = vmatpush2.msra.mxu0 %v3595
    %v3597 = vand.u32 %v1485, 4294901760
    %v3598 = vsub.f32 %v1485, %v3597
    %3599 = vmatprep.subr.mxu0 %v3598
    %v3600 = vand.u32 %v1484, 4294901760
    %v3601 = vsub.f32 %v1484, %v3600
    %3602 = vmatpush2.msra.mxu0 %v3601
    %v3603 = vand.u32 %v1401, 4294901760
    %v3604 = vsub.f32 %v1401, %v3603
    %3605 = vmatprep.mubr.f32.mxu0 %v3604
    %v3606 = vand.u32 %v1400, 4294901760
    %v3607 = vsub.f32 %v1400, %v3606
    %3608 = vmatmul.mubr.f32.gmra.mxu0 %v3607
    %v3609 = vpop.f32.mrf.mxu0
    %v3610 = vadd.f32 %v3407, %v3609
    %v3611 = vpop.f32.mrf.mxu0
    %v3612 = vadd.f32 %v3409, %v3611
    %3613 = vdwg.mxu0
    %v3614 = vand.u32 %v1480, 4294901760
    %3615 = vmatprep.subr.mxu0 %v3614
    %v3616 = vand.u32 %v1479, 4294901760
    %3617 = vmatpush1.msra.mxu0 %v3616
    %v3618 = vand.u32 %v1475, 4294901760
    %3619 = vmatprep.subr.mxu0 %v3618
    %v3620 = vand.u32 %v1474, 4294901760
    %3621 = vmatpush1.msra.mxu0 %v3620
    %v3622 = vand.u32 %v1470, 4294901760
    %3623 = vmatprep.subr.mxu0 %v3622
    %v3624 = vand.u32 %v1469, 4294901760
    %3625 = vmatpush1.msra.mxu0 %v3624
    %v3626 = vand.u32 %v1465, 4294901760
    %3627 = vmatprep.subr.mxu0 %v3626
    %v3628 = vand.u32 %v1464, 4294901760
    %3629 = vmatpush1.msra.mxu0 %v3628
    %v3630 = vand.u32 %v1460, 4294901760
    %3631 = vmatprep.subr.mxu0 %v3630
    %v3632 = vand.u32 %v1459, 4294901760
    %3633 = vmatpush1.msra.mxu0 %v3632
    %v3634 = vand.u32 %v1455, 4294901760
    %3635 = vmatprep.subr.mxu0 %v3634
    %v3636 = vand.u32 %v1454, 4294901760
    %3637 = vmatpush1.msra.mxu0 %v3636
    %v3638 = vand.u32 %v1450, 4294901760
    %3639 = vmatprep.subr.mxu0 %v3638
    %v3640 = vand.u32 %v1449, 4294901760
    %3641 = vmatpush1.msra.mxu0 %v3640
    %v3642 = vand.u32 %v1445, 4294901760
    %3643 = vmatprep.subr.mxu0 %v3642
    %v3644 = vand.u32 %v1444, 4294901760
    %3645 = vmatpush1.msra.mxu0 %v3644
    %v3646 = vand.u32 %v1440, 4294901760
    %3647 = vmatprep.subr.mxu0 %v3646
    %v3648 = vand.u32 %v1439, 4294901760
    %3649 = vmatpush1.msra.mxu0 %v3648
    %v3650 = vand.u32 %v1435, 4294901760
    %3651 = vmatprep.subr.mxu0 %v3650
    %v3652 = vand.u32 %v1434, 4294901760
    %3653 = vmatpush1.msra.mxu0 %v3652
    %v3654 = vand.u32 %v1430, 4294901760
    %3655 = vmatprep.subr.mxu0 %v3654
    %v3656 = vand.u32 %v1429, 4294901760
    %3657 = vmatpush1.msra.mxu0 %v3656
    %v3658 = vand.u32 %v1425, 4294901760
    %3659 = vmatprep.subr.mxu0 %v3658
    %v3660 = vand.u32 %v1424, 4294901760
    %3661 = vmatpush1.msra.mxu0 %v3660
    %v3662 = vand.u32 %v1420, 4294901760
    %3663 = vmatprep.subr.mxu0 %v3662
    %v3664 = vand.u32 %v1419, 4294901760
    %3665 = vmatpush1.msra.mxu0 %v3664
    %v3666 = vand.u32 %v1415, 4294901760
    %3667 = vmatprep.subr.mxu0 %v3666
    %v3668 = vand.u32 %v1414, 4294901760
    %3669 = vmatpush1.msra.mxu0 %v3668
    %v3670 = vand.u32 %v1410, 4294901760
    %3671 = vmatprep.subr.mxu0 %v3670
    %v3672 = vand.u32 %v1409, 4294901760
    %3673 = vmatpush1.msra.mxu0 %v3672
    %v3674 = vand.u32 %v1405, 4294901760
    %3675 = vmatprep.subr.mxu0 %v3674
    %v3676 = vand.u32 %v1404, 4294901760
    %3677 = vmatpush1.msra.mxu0 %v3676
    %v3678 = vand.u32 %v1560, 4294901760
    %3679 = vmatprep.subr.mxu0 %v3678
    %v3680 = vand.u32 %v1559, 4294901760
    %3681 = vmatpush2.msra.mxu0 %v3680
    %v3682 = vand.u32 %v1555, 4294901760
    %3683 = vmatprep.subr.mxu0 %v3682
    %v3684 = vand.u32 %v1554, 4294901760
    %3685 = vmatpush2.msra.mxu0 %v3684
    %v3686 = vand.u32 %v1550, 4294901760
    %3687 = vmatprep.subr.mxu0 %v3686
    %v3688 = vand.u32 %v1549, 4294901760
    %3689 = vmatpush2.msra.mxu0 %v3688
    %v3690 = vand.u32 %v1545, 4294901760
    %3691 = vmatprep.subr.mxu0 %v3690
    %v3692 = vand.u32 %v1544, 4294901760
    %3693 = vmatpush2.msra.mxu0 %v3692
    %v3694 = vand.u32 %v1540, 4294901760
    %3695 = vmatprep.subr.mxu0 %v3694
    %v3696 = vand.u32 %v1539, 4294901760
    %3697 = vmatpush2.msra.mxu0 %v3696
    %v3698 = vand.u32 %v1535, 4294901760
    %3699 = vmatprep.subr.mxu0 %v3698
    %v3700 = vand.u32 %v1534, 4294901760
    %3701 = vmatpush2.msra.mxu0 %v3700
    %v3702 = vand.u32 %v1530, 4294901760
    %3703 = vmatprep.subr.mxu0 %v3702
    %v3704 = vand.u32 %v1529, 4294901760
    %3705 = vmatpush2.msra.mxu0 %v3704
    %v3706 = vand.u32 %v1525, 4294901760
    %3707 = vmatprep.subr.mxu0 %v3706
    %v3708 = vand.u32 %v1524, 4294901760
    %3709 = vmatpush2.msra.mxu0 %v3708
    %v3710 = vand.u32 %v1520, 4294901760
    %3711 = vmatprep.subr.mxu0 %v3710
    %v3712 = vand.u32 %v1519, 4294901760
    %3713 = vmatpush2.msra.mxu0 %v3712
    %v3714 = vand.u32 %v1515, 4294901760
    %3715 = vmatprep.subr.mxu0 %v3714
    %v3716 = vand.u32 %v1514, 4294901760
    %3717 = vmatpush2.msra.mxu0 %v3716
    %v3718 = vand.u32 %v1510, 4294901760
    %3719 = vmatprep.subr.mxu0 %v3718
    %v3720 = vand.u32 %v1509, 4294901760
    %3721 = vmatpush2.msra.mxu0 %v3720
    %v3722 = vand.u32 %v1505, 4294901760
    %3723 = vmatprep.subr.mxu0 %v3722
    %v3724 = vand.u32 %v1504, 4294901760
    %3725 = vmatpush2.msra.mxu0 %v3724
    %v3726 = vand.u32 %v1500, 4294901760
    %3727 = vmatprep.subr.mxu0 %v3726
    %v3728 = vand.u32 %v1499, 4294901760
    %3729 = vmatpush2.msra.mxu0 %v3728
    %v3730 = vand.u32 %v1495, 4294901760
    %3731 = vmatprep.subr.mxu0 %v3730
    %v3732 = vand.u32 %v1494, 4294901760
    %3733 = vmatpush2.msra.mxu0 %v3732
    %v3734 = vand.u32 %v1490, 4294901760
    %3735 = vmatprep.subr.mxu0 %v3734
    %v3736 = vand.u32 %v1489, 4294901760
    %3737 = vmatpush2.msra.mxu0 %v3736
    %v3738 = vand.u32 %v1485, 4294901760
    %3739 = vmatprep.subr.mxu0 %v3738
    %v3740 = vand.u32 %v1484, 4294901760
    %3741 = vmatpush2.msra.mxu0 %v3740
    %v3742 = vand.u32 %v1401, 4294901760
    %v3743 = vsub.f32 %v1401, %v3742
    %v3744 = vand.u32 %v3743, 4294901760
    %3745 = vmatprep.mubr.f32.mxu0 %v3744
    %v3746 = vand.u32 %v1400, 4294901760
    %v3747 = vsub.f32 %v1400, %v3746
    %v3748 = vand.u32 %v3747, 4294901760
    %3749 = vmatmul.mubr.f32.gmra.mxu0 %v3748
    %v3750 = vpop.f32.mrf.mxu0
    %v3751 = vadd.f32 %v3610, %v3750
    %v3752 = vpop.f32.mrf.mxu0
    %v3753 = vadd.f32 %v3612, %v3752
    %3754 = vdwg.mxu0
    %v3755 = vand.u32 %v1480, 4294901760
    %v3756 = vsub.f32 %v1480, %v3755
    %v3757 = vand.u32 %v3756, 4294901760
    %3758 = vmatprep.subr.mxu0 %v3757
    %v3759 = vand.u32 %v1479, 4294901760
    %v3760 = vsub.f32 %v1479, %v3759
    %v3761 = vand.u32 %v3760, 4294901760
    %3762 = vmatpush1.msra.mxu0 %v3761
    %v3763 = vand.u32 %v1475, 4294901760
    %v3764 = vsub.f32 %v1475, %v3763
    %v3765 = vand.u32 %v3764, 4294901760
    %3766 = vmatprep.subr.mxu0 %v3765
    %v3767 = vand.u32 %v1474, 4294901760
    %v3768 = vsub.f32 %v1474, %v3767
    %v3769 = vand.u32 %v3768, 4294901760
    %3770 = vmatpush1.msra.mxu0 %v3769
    %v3771 = vand.u32 %v1470, 4294901760
    %v3772 = vsub.f32 %v1470, %v3771
    %v3773 = vand.u32 %v3772, 4294901760
    %3774 = vmatprep.subr.mxu0 %v3773
    %v3775 = vand.u32 %v1469, 4294901760
    %v3776 = vsub.f32 %v1469, %v3775
    %v3777 = vand.u32 %v3776, 4294901760
    %3778 = vmatpush1.msra.mxu0 %v3777
    %v3779 = vand.u32 %v1465, 4294901760
    %v3780 = vsub.f32 %v1465, %v3779
    %v3781 = vand.u32 %v3780, 4294901760
    %3782 = vmatprep.subr.mxu0 %v3781
    %v3783 = vand.u32 %v1464, 4294901760
    %v3784 = vsub.f32 %v1464, %v3783
    %v3785 = vand.u32 %v3784, 4294901760
    %3786 = vmatpush1.msra.mxu0 %v3785
    %v3787 = vand.u32 %v1460, 4294901760
    %v3788 = vsub.f32 %v1460, %v3787
    %v3789 = vand.u32 %v3788, 4294901760
    %3790 = vmatprep.subr.mxu0 %v3789
    %v3791 = vand.u32 %v1459, 4294901760
    %v3792 = vsub.f32 %v1459, %v3791
    %v3793 = vand.u32 %v3792, 4294901760
    %3794 = vmatpush1.msra.mxu0 %v3793
    %v3795 = vand.u32 %v1455, 4294901760
    %v3796 = vsub.f32 %v1455, %v3795
    %v3797 = vand.u32 %v3796, 4294901760
    %3798 = vmatprep.subr.mxu0 %v3797
    %v3799 = vand.u32 %v1454, 4294901760
    %v3800 = vsub.f32 %v1454, %v3799
    %v3801 = vand.u32 %v3800, 4294901760
    %3802 = vmatpush1.msra.mxu0 %v3801
    %v3803 = vand.u32 %v1450, 4294901760
    %v3804 = vsub.f32 %v1450, %v3803
    %v3805 = vand.u32 %v3804, 4294901760
    %3806 = vmatprep.subr.mxu0 %v3805
    %v3807 = vand.u32 %v1449, 4294901760
    %v3808 = vsub.f32 %v1449, %v3807
    %v3809 = vand.u32 %v3808, 4294901760
    %3810 = vmatpush1.msra.mxu0 %v3809
    %v3811 = vand.u32 %v1445, 4294901760
    %v3812 = vsub.f32 %v1445, %v3811
    %v3813 = vand.u32 %v3812, 4294901760
    %3814 = vmatprep.subr.mxu0 %v3813
    %v3815 = vand.u32 %v1444, 4294901760
    %v3816 = vsub.f32 %v1444, %v3815
    %v3817 = vand.u32 %v3816, 4294901760
    %3818 = vmatpush1.msra.mxu0 %v3817
    %v3819 = vand.u32 %v1440, 4294901760
    %v3820 = vsub.f32 %v1440, %v3819
    %v3821 = vand.u32 %v3820, 4294901760
    %3822 = vmatprep.subr.mxu0 %v3821
    %v3823 = vand.u32 %v1439, 4294901760
    %v3824 = vsub.f32 %v1439, %v3823
    %v3825 = vand.u32 %v3824, 4294901760
    %3826 = vmatpush1.msra.mxu0 %v3825
    %v3827 = vand.u32 %v1435, 4294901760
    %v3828 = vsub.f32 %v1435, %v3827
    %v3829 = vand.u32 %v3828, 4294901760
    %3830 = vmatprep.subr.mxu0 %v3829
    %v3831 = vand.u32 %v1434, 4294901760
    %v3832 = vsub.f32 %v1434, %v3831
    %v3833 = vand.u32 %v3832, 4294901760
    %3834 = vmatpush1.msra.mxu0 %v3833
    %v3835 = vand.u32 %v1430, 4294901760
    %v3836 = vsub.f32 %v1430, %v3835
    %v3837 = vand.u32 %v3836, 4294901760
    %3838 = vmatprep.subr.mxu0 %v3837
    %v3839 = vand.u32 %v1429, 4294901760
    %v3840 = vsub.f32 %v1429, %v3839
    %v3841 = vand.u32 %v3840, 4294901760
    %3842 = vmatpush1.msra.mxu0 %v3841
    %v3843 = vand.u32 %v1425, 4294901760
    %v3844 = vsub.f32 %v1425, %v3843
    %v3845 = vand.u32 %v3844, 4294901760
    %3846 = vmatprep.subr.mxu0 %v3845
    %v3847 = vand.u32 %v1424, 4294901760
    %v3848 = vsub.f32 %v1424, %v3847
    %v3849 = vand.u32 %v3848, 4294901760
    %3850 = vmatpush1.msra.mxu0 %v3849
    %v3851 = vand.u32 %v1420, 4294901760
    %v3852 = vsub.f32 %v1420, %v3851
    %v3853 = vand.u32 %v3852, 4294901760
    %3854 = vmatprep.subr.mxu0 %v3853
    %v3855 = vand.u32 %v1419, 4294901760
    %v3856 = vsub.f32 %v1419, %v3855
    %v3857 = vand.u32 %v3856, 4294901760
    %3858 = vmatpush1.msra.mxu0 %v3857
    %v3859 = vand.u32 %v1415, 4294901760
    %v3860 = vsub.f32 %v1415, %v3859
    %v3861 = vand.u32 %v3860, 4294901760
    %3862 = vmatprep.subr.mxu0 %v3861
    %v3863 = vand.u32 %v1414, 4294901760
    %v3864 = vsub.f32 %v1414, %v3863
    %v3865 = vand.u32 %v3864, 4294901760
    %3866 = vmatpush1.msra.mxu0 %v3865
    %v3867 = vand.u32 %v1410, 4294901760
    %v3868 = vsub.f32 %v1410, %v3867
    %v3869 = vand.u32 %v3868, 4294901760
    %3870 = vmatprep.subr.mxu0 %v3869
    %v3871 = vand.u32 %v1409, 4294901760
    %v3872 = vsub.f32 %v1409, %v3871
    %v3873 = vand.u32 %v3872, 4294901760
    %3874 = vmatpush1.msra.mxu0 %v3873
    %v3875 = vand.u32 %v1405, 4294901760
    %v3876 = vsub.f32 %v1405, %v3875
    %v3877 = vand.u32 %v3876, 4294901760
    %3878 = vmatprep.subr.mxu0 %v3877
    %v3879 = vand.u32 %v1404, 4294901760
    %v3880 = vsub.f32 %v1404, %v3879
    %v3881 = vand.u32 %v3880, 4294901760
    %3882 = vmatpush1.msra.mxu0 %v3881
    %v3883 = vand.u32 %v1560, 4294901760
    %v3884 = vsub.f32 %v1560, %v3883
    %v3885 = vand.u32 %v3884, 4294901760
    %3886 = vmatprep.subr.mxu0 %v3885
    %v3887 = vand.u32 %v1559, 4294901760
    %v3888 = vsub.f32 %v1559, %v3887
    %v3889 = vand.u32 %v3888, 4294901760
    %3890 = vmatpush2.msra.mxu0 %v3889
    %v3891 = vand.u32 %v1555, 4294901760
    %v3892 = vsub.f32 %v1555, %v3891
    %v3893 = vand.u32 %v3892, 4294901760
    %3894 = vmatprep.subr.mxu0 %v3893
    %v3895 = vand.u32 %v1554, 4294901760
    %v3896 = vsub.f32 %v1554, %v3895
    %v3897 = vand.u32 %v3896, 4294901760
    %3898 = vmatpush2.msra.mxu0 %v3897
    %v3899 = vand.u32 %v1550, 4294901760
    %v3900 = vsub.f32 %v1550, %v3899
    %v3901 = vand.u32 %v3900, 4294901760
    %3902 = vmatprep.subr.mxu0 %v3901
    %v3903 = vand.u32 %v1549, 4294901760
    %v3904 = vsub.f32 %v1549, %v3903
    %v3905 = vand.u32 %v3904, 4294901760
    %3906 = vmatpush2.msra.mxu0 %v3905
    %v3907 = vand.u32 %v1545, 4294901760
    %v3908 = vsub.f32 %v1545, %v3907
    %v3909 = vand.u32 %v3908, 4294901760
    %3910 = vmatprep.subr.mxu0 %v3909
    %v3911 = vand.u32 %v1544, 4294901760
    %v3912 = vsub.f32 %v1544, %v3911
    %v3913 = vand.u32 %v3912, 4294901760
    %3914 = vmatpush2.msra.mxu0 %v3913
    %v3915 = vand.u32 %v1540, 4294901760
    %v3916 = vsub.f32 %v1540, %v3915
    %v3917 = vand.u32 %v3916, 4294901760
    %3918 = vmatprep.subr.mxu0 %v3917
    %v3919 = vand.u32 %v1539, 4294901760
    %v3920 = vsub.f32 %v1539, %v3919
    %v3921 = vand.u32 %v3920, 4294901760
    %3922 = vmatpush2.msra.mxu0 %v3921
    %v3923 = vand.u32 %v1535, 4294901760
    %v3924 = vsub.f32 %v1535, %v3923
    %v3925 = vand.u32 %v3924, 4294901760
    %3926 = vmatprep.subr.mxu0 %v3925
    %v3927 = vand.u32 %v1534, 4294901760
    %v3928 = vsub.f32 %v1534, %v3927
    %v3929 = vand.u32 %v3928, 4294901760
    %3930 = vmatpush2.msra.mxu0 %v3929
    %v3931 = vand.u32 %v1530, 4294901760
    %v3932 = vsub.f32 %v1530, %v3931
    %v3933 = vand.u32 %v3932, 4294901760
    %3934 = vmatprep.subr.mxu0 %v3933
    %v3935 = vand.u32 %v1529, 4294901760
    %v3936 = vsub.f32 %v1529, %v3935
    %v3937 = vand.u32 %v3936, 4294901760
    %3938 = vmatpush2.msra.mxu0 %v3937
    %v3939 = vand.u32 %v1525, 4294901760
    %v3940 = vsub.f32 %v1525, %v3939
    %v3941 = vand.u32 %v3940, 4294901760
    %3942 = vmatprep.subr.mxu0 %v3941
    %v3943 = vand.u32 %v1524, 4294901760
    %v3944 = vsub.f32 %v1524, %v3943
    %v3945 = vand.u32 %v3944, 4294901760
    %3946 = vmatpush2.msra.mxu0 %v3945
    %v3947 = vand.u32 %v1520, 4294901760
    %v3948 = vsub.f32 %v1520, %v3947
    %v3949 = vand.u32 %v3948, 4294901760
    %3950 = vmatprep.subr.mxu0 %v3949
    %v3951 = vand.u32 %v1519, 4294901760
    %v3952 = vsub.f32 %v1519, %v3951
    %v3953 = vand.u32 %v3952, 4294901760
    %3954 = vmatpush2.msra.mxu0 %v3953
    %v3955 = vand.u32 %v1515, 4294901760
    %v3956 = vsub.f32 %v1515, %v3955
    %v3957 = vand.u32 %v3956, 4294901760
    %3958 = vmatprep.subr.mxu0 %v3957
    %v3959 = vand.u32 %v1514, 4294901760
    %v3960 = vsub.f32 %v1514, %v3959
    %v3961 = vand.u32 %v3960, 4294901760
    %3962 = vmatpush2.msra.mxu0 %v3961
    %v3963 = vand.u32 %v1510, 4294901760
    %v3964 = vsub.f32 %v1510, %v3963
    %v3965 = vand.u32 %v3964, 4294901760
    %3966 = vmatprep.subr.mxu0 %v3965
    %v3967 = vand.u32 %v1509, 4294901760
    %v3968 = vsub.f32 %v1509, %v3967
    %v3969 = vand.u32 %v3968, 4294901760
    %3970 = vmatpush2.msra.mxu0 %v3969
    %v3971 = vand.u32 %v1505, 4294901760
    %v3972 = vsub.f32 %v1505, %v3971
    %v3973 = vand.u32 %v3972, 4294901760
    %3974 = vmatprep.subr.mxu0 %v3973
    %v3975 = vand.u32 %v1504, 4294901760
    %v3976 = vsub.f32 %v1504, %v3975
    %v3977 = vand.u32 %v3976, 4294901760
    %3978 = vmatpush2.msra.mxu0 %v3977
    %v3979 = vand.u32 %v1500, 4294901760
    %v3980 = vsub.f32 %v1500, %v3979
    %v3981 = vand.u32 %v3980, 4294901760
    %3982 = vmatprep.subr.mxu0 %v3981
    %v3983 = vand.u32 %v1499, 4294901760
    %v3984 = vsub.f32 %v1499, %v3983
    %v3985 = vand.u32 %v3984, 4294901760
    %3986 = vmatpush2.msra.mxu0 %v3985
    %v3987 = vand.u32 %v1495, 4294901760
    %v3988 = vsub.f32 %v1495, %v3987
    %v3989 = vand.u32 %v3988, 4294901760
    %3990 = vmatprep.subr.mxu0 %v3989
    %v3991 = vand.u32 %v1494, 4294901760
    %v3992 = vsub.f32 %v1494, %v3991
    %v3993 = vand.u32 %v3992, 4294901760
    %3994 = vmatpush2.msra.mxu0 %v3993
    %v3995 = vand.u32 %v1490, 4294901760
    %v3996 = vsub.f32 %v1490, %v3995
    %v3997 = vand.u32 %v3996, 4294901760
    %3998 = vmatprep.subr.mxu0 %v3997
    %v3999 = vand.u32 %v1489, 4294901760
    %v4000 = vsub.f32 %v1489, %v3999
    %v4001 = vand.u32 %v4000, 4294901760
    %4002 = vmatpush2.msra.mxu0 %v4001
    %v4003 = vand.u32 %v1485, 4294901760
    %v4004 = vsub.f32 %v1485, %v4003
    %v4005 = vand.u32 %v4004, 4294901760
    %4006 = vmatprep.subr.mxu0 %v4005
    %v4007 = vand.u32 %v1484, 4294901760
    %v4008 = vsub.f32 %v1484, %v4007
    %v4009 = vand.u32 %v4008, 4294901760
    %4010 = vmatpush2.msra.mxu0 %v4009
    %v4011 = vand.u32 %v1401, 4294901760
    %4012 = vmatprep.mubr.f32.mxu0 %v4011
    %v4013 = vand.u32 %v1400, 4294901760
    %4014 = vmatmul.mubr.f32.gmra.mxu0 %v4013
    %v4015 = vpop.f32.mrf.mxu0
    %v4016 = vadd.f32 %v3751, %v4015
    %v4017 = vpop.f32.mrf.mxu0
    %v4018 = vadd.f32 %v3753, %v4017
    %4019 = vdwg.mxu0
    %v4020 = vand.u32 %v1480, 4294901760
    %4021 = vmatprep.subr.mxu0 %v4020
    %v4022 = vand.u32 %v1479, 4294901760
    %4023 = vmatpush1.msra.mxu0 %v4022
    %v4024 = vand.u32 %v1475, 4294901760
    %4025 = vmatprep.subr.mxu0 %v4024
    %v4026 = vand.u32 %v1474, 4294901760
    %4027 = vmatpush1.msra.mxu0 %v4026
    %v4028 = vand.u32 %v1470, 4294901760
    %4029 = vmatprep.subr.mxu0 %v4028
    %v4030 = vand.u32 %v1469, 4294901760
    %4031 = vmatpush1.msra.mxu0 %v4030
    %v4032 = vand.u32 %v1465, 4294901760
    %4033 = vmatprep.subr.mxu0 %v4032
    %v4034 = vand.u32 %v1464, 4294901760
    %4035 = vmatpush1.msra.mxu0 %v4034
    %v4036 = vand.u32 %v1460, 4294901760
    %4037 = vmatprep.subr.mxu0 %v4036
    %v4038 = vand.u32 %v1459, 4294901760
    %4039 = vmatpush1.msra.mxu0 %v4038
    %v4040 = vand.u32 %v1455, 4294901760
    %4041 = vmatprep.subr.mxu0 %v4040
    %v4042 = vand.u32 %v1454, 4294901760
    %4043 = vmatpush1.msra.mxu0 %v4042
    %v4044 = vand.u32 %v1450, 4294901760
    %4045 = vmatprep.subr.mxu0 %v4044
    %v4046 = vand.u32 %v1449, 4294901760
    %4047 = vmatpush1.msra.mxu0 %v4046
    %v4048 = vand.u32 %v1445, 4294901760
    %4049 = vmatprep.subr.mxu0 %v4048
    %v4050 = vand.u32 %v1444, 4294901760
    %4051 = vmatpush1.msra.mxu0 %v4050
    %v4052 = vand.u32 %v1440, 4294901760
    %4053 = vmatprep.subr.mxu0 %v4052
    %v4054 = vand.u32 %v1439, 4294901760
    %4055 = vmatpush1.msra.mxu0 %v4054
    %v4056 = vand.u32 %v1435, 4294901760
    %4057 = vmatprep.subr.mxu0 %v4056
    %v4058 = vand.u32 %v1434, 4294901760
    %4059 = vmatpush1.msra.mxu0 %v4058
    %v4060 = vand.u32 %v1430, 4294901760
    %4061 = vmatprep.subr.mxu0 %v4060
    %v4062 = vand.u32 %v1429, 4294901760
    %4063 = vmatpush1.msra.mxu0 %v4062
    %v4064 = vand.u32 %v1425, 4294901760
    %4065 = vmatprep.subr.mxu0 %v4064
    %v4066 = vand.u32 %v1424, 4294901760
    %4067 = vmatpush1.msra.mxu0 %v4066
    %v4068 = vand.u32 %v1420, 4294901760
    %4069 = vmatprep.subr.mxu0 %v4068
    %v4070 = vand.u32 %v1419, 4294901760
    %4071 = vmatpush1.msra.mxu0 %v4070
    %v4072 = vand.u32 %v1415, 4294901760
    %4073 = vmatprep.subr.mxu0 %v4072
    %v4074 = vand.u32 %v1414, 4294901760
    %4075 = vmatpush1.msra.mxu0 %v4074
    %v4076 = vand.u32 %v1410, 4294901760
    %4077 = vmatprep.subr.mxu0 %v4076
    %v4078 = vand.u32 %v1409, 4294901760
    %4079 = vmatpush1.msra.mxu0 %v4078
    %v4080 = vand.u32 %v1405, 4294901760
    %4081 = vmatprep.subr.mxu0 %v4080
    %v4082 = vand.u32 %v1404, 4294901760
    %4083 = vmatpush1.msra.mxu0 %v4082
    %v4084 = vand.u32 %v1560, 4294901760
    %4085 = vmatprep.subr.mxu0 %v4084
    %v4086 = vand.u32 %v1559, 4294901760
    %4087 = vmatpush2.msra.mxu0 %v4086
    %v4088 = vand.u32 %v1555, 4294901760
    %4089 = vmatprep.subr.mxu0 %v4088
    %v4090 = vand.u32 %v1554, 4294901760
    %4091 = vmatpush2.msra.mxu0 %v4090
    %v4092 = vand.u32 %v1550, 4294901760
    %4093 = vmatprep.subr.mxu0 %v4092
    %v4094 = vand.u32 %v1549, 4294901760
    %4095 = vmatpush2.msra.mxu0 %v4094
    %v4096 = vand.u32 %v1545, 4294901760
    %4097 = vmatprep.subr.mxu0 %v4096
    %v4098 = vand.u32 %v1544, 4294901760
    %4099 = vmatpush2.msra.mxu0 %v4098
    %v4100 = vand.u32 %v1540, 4294901760
    %4101 = vmatprep.subr.mxu0 %v4100
    %v4102 = vand.u32 %v1539, 4294901760
    %4103 = vmatpush2.msra.mxu0 %v4102
    %v4104 = vand.u32 %v1535, 4294901760
    %4105 = vmatprep.subr.mxu0 %v4104
    %v4106 = vand.u32 %v1534, 4294901760
    %4107 = vmatpush2.msra.mxu0 %v4106
    %v4108 = vand.u32 %v1530, 4294901760
    %4109 = vmatprep.subr.mxu0 %v4108
    %v4110 = vand.u32 %v1529, 4294901760
    %4111 = vmatpush2.msra.mxu0 %v4110
    %v4112 = vand.u32 %v1525, 4294901760
    %4113 = vmatprep.subr.mxu0 %v4112
    %v4114 = vand.u32 %v1524, 4294901760
    %4115 = vmatpush2.msra.mxu0 %v4114
    %v4116 = vand.u32 %v1520, 4294901760
    %4117 = vmatprep.subr.mxu0 %v4116
    %v4118 = vand.u32 %v1519, 4294901760
    %4119 = vmatpush2.msra.mxu0 %v4118
    %v4120 = vand.u32 %v1515, 4294901760
    %4121 = vmatprep.subr.mxu0 %v4120
    %v4122 = vand.u32 %v1514, 4294901760
    %4123 = vmatpush2.msra.mxu0 %v4122
    %v4124 = vand.u32 %v1510, 4294901760
    %4125 = vmatprep.subr.mxu0 %v4124
    %v4126 = vand.u32 %v1509, 4294901760
    %4127 = vmatpush2.msra.mxu0 %v4126
    %v4128 = vand.u32 %v1505, 4294901760
    %4129 = vmatprep.subr.mxu0 %v4128
    %v4130 = vand.u32 %v1504, 4294901760
    %4131 = vmatpush2.msra.mxu0 %v4130
    %v4132 = vand.u32 %v1500, 4294901760
    %4133 = vmatprep.subr.mxu0 %v4132
    %v4134 = vand.u32 %v1499, 4294901760
    %4135 = vmatpush2.msra.mxu0 %v4134
    %v4136 = vand.u32 %v1495, 4294901760
    %4137 = vmatprep.subr.mxu0 %v4136
    %v4138 = vand.u32 %v1494, 4294901760
    %4139 = vmatpush2.msra.mxu0 %v4138
    %v4140 = vand.u32 %v1490, 4294901760
    %4141 = vmatprep.subr.mxu0 %v4140
    %v4142 = vand.u32 %v1489, 4294901760
    %4143 = vmatpush2.msra.mxu0 %v4142
    %v4144 = vand.u32 %v1485, 4294901760
    %4145 = vmatprep.subr.mxu0 %v4144
    %v4146 = vand.u32 %v1484, 4294901760
    %4147 = vmatpush2.msra.mxu0 %v4146
    %v4148 = vand.u32 %v1401, 4294901760
    %4149 = vmatprep.mubr.f32.mxu0 %v4148
    %v4150 = vand.u32 %v1400, 4294901760
    %4151 = vmatmul.mubr.f32.gmra.mxu0 %v4150
    %v4152 = vpop.f32.mrf.mxu0
    %v4153 = vadd.f32 %v4016, %v4152
    %v4154 = vpop.f32.mrf.mxu0
    %v4155 = vadd.f32 %v4018, %v4154
    %4156 = vdwg.mxu0
    %4157 = vmatprep.subr.mxu0 0.0
    %v4158 = vand.u32 %v1481, 4294901760
    %4159 = vmatpush1.msra.mxu0 %v4158
    %4160 = vmatprep.subr.mxu0 0.0
    %v4161 = vand.u32 %v1476, 4294901760
    %4162 = vmatpush1.msra.mxu0 %v4161
    %4163 = vmatprep.subr.mxu0 0.0
    %v4164 = vand.u32 %v1471, 4294901760
    %4165 = vmatpush1.msra.mxu0 %v4164
    %4166 = vmatprep.subr.mxu0 0.0
    %v4167 = vand.u32 %v1466, 4294901760
    %4168 = vmatpush1.msra.mxu0 %v4167
    %4169 = vmatprep.subr.mxu0 0.0
    %v4170 = vand.u32 %v1461, 4294901760
    %4171 = vmatpush1.msra.mxu0 %v4170
    %4172 = vmatprep.subr.mxu0 0.0
    %v4173 = vand.u32 %v1456, 4294901760
    %4174 = vmatpush1.msra.mxu0 %v4173
    %4175 = vmatprep.subr.mxu0 0.0
    %v4176 = vand.u32 %v1451, 4294901760
    %4177 = vmatpush1.msra.mxu0 %v4176
    %4178 = vmatprep.subr.mxu0 0.0
    %v4179 = vand.u32 %v1446, 4294901760
    %4180 = vmatpush1.msra.mxu0 %v4179
    %4181 = vmatprep.subr.mxu0 0.0
    %v4182 = vand.u32 %v1441, 4294901760
    %4183 = vmatpush1.msra.mxu0 %v4182
    %4184 = vmatprep.subr.mxu0 0.0
    %v4185 = vand.u32 %v1436, 4294901760
    %4186 = vmatpush1.msra.mxu0 %v4185
    %4187 = vmatprep.subr.mxu0 0.0
    %v4188 = vand.u32 %v1431, 4294901760
    %4189 = vmatpush1.msra.mxu0 %v4188
    %4190 = vmatprep.subr.mxu0 0.0
    %v4191 = vand.u32 %v1426, 4294901760
    %4192 = vmatpush1.msra.mxu0 %v4191
    %4193 = vmatprep.subr.mxu0 0.0
    %v4194 = vand.u32 %v1421, 4294901760
    %4195 = vmatpush1.msra.mxu0 %v4194
    %4196 = vmatprep.subr.mxu0 0.0
    %v4197 = vand.u32 %v1416, 4294901760
    %4198 = vmatpush1.msra.mxu0 %v4197
    %4199 = vmatprep.subr.mxu0 0.0
    %v4200 = vand.u32 %v1411, 4294901760
    %4201 = vmatpush1.msra.mxu0 %v4200
    %4202 = vmatprep.subr.mxu0 0.0
    %v4203 = vand.u32 %v1406, 4294901760
    %4204 = vmatpush1.msra.mxu0 %v4203
    %4205 = vmatprep.subr.mxu0 0.0
    %v4206 = vand.u32 %v1561, 4294901760
    %4207 = vmatpush2.msra.mxu0 %v4206
    %4208 = vmatprep.subr.mxu0 0.0
    %v4209 = vand.u32 %v1556, 4294901760
    %4210 = vmatpush2.msra.mxu0 %v4209
    %4211 = vmatprep.subr.mxu0 0.0
    %v4212 = vand.u32 %v1551, 4294901760
    %4213 = vmatpush2.msra.mxu0 %v4212
    %4214 = vmatprep.subr.mxu0 0.0
    %v4215 = vand.u32 %v1546, 4294901760
    %4216 = vmatpush2.msra.mxu0 %v4215
    %4217 = vmatprep.subr.mxu0 0.0
    %v4218 = vand.u32 %v1541, 4294901760
    %4219 = vmatpush2.msra.mxu0 %v4218
    %4220 = vmatprep.subr.mxu0 0.0
    %v4221 = vand.u32 %v1536, 4294901760
    %4222 = vmatpush2.msra.mxu0 %v4221
    %4223 = vmatprep.subr.mxu0 0.0
    %v4224 = vand.u32 %v1531, 4294901760
    %4225 = vmatpush2.msra.mxu0 %v4224
    %4226 = vmatprep.subr.mxu0 0.0
    %v4227 = vand.u32 %v1526, 4294901760
    %4228 = vmatpush2.msra.mxu0 %v4227
    %4229 = vmatprep.subr.mxu0 0.0
    %v4230 = vand.u32 %v1521, 4294901760
    %4231 = vmatpush2.msra.mxu0 %v4230
    %4232 = vmatprep.subr.mxu0 0.0
    %v4233 = vand.u32 %v1516, 4294901760
    %4234 = vmatpush2.msra.mxu0 %v4233
    %4235 = vmatprep.subr.mxu0 0.0
    %v4236 = vand.u32 %v1511, 4294901760
    %4237 = vmatpush2.msra.mxu0 %v4236
    %4238 = vmatprep.subr.mxu0 0.0
    %v4239 = vand.u32 %v1506, 4294901760
    %4240 = vmatpush2.msra.mxu0 %v4239
    %4241 = vmatprep.subr.mxu0 0.0
    %v4242 = vand.u32 %v1501, 4294901760
    %4243 = vmatpush2.msra.mxu0 %v4242
    %4244 = vmatprep.subr.mxu0 0.0
    %v4245 = vand.u32 %v1496, 4294901760
    %4246 = vmatpush2.msra.mxu0 %v4245
    %4247 = vmatprep.subr.mxu0 0.0
    %v4248 = vand.u32 %v1491, 4294901760
    %4249 = vmatpush2.msra.mxu0 %v4248
    %4250 = vmatprep.subr.mxu0 0.0
    %v4251 = vand.u32 %v1486, 4294901760
    %4252 = vmatpush2.msra.mxu0 %v4251
    %v4253 = vand.u32 %v1401, 4294901760
    %v4254 = vsub.f32 %v1401, %v4253
    %v4255 = vand.u32 %v4254, 4294901760
    %v4256 = vsub.f32 %v4254, %v4255
    %v4257 = vand.u32 %v4256, 4294901760
    %4258 = vmatprep.mubr.f32.mxu0 %v4257
    %v4259 = vand.u32 %v1400, 4294901760
    %v4260 = vsub.f32 %v1400, %v4259
    %v4261 = vand.u32 %v4260, 4294901760
    %v4262 = vsub.f32 %v4260, %v4261
    %v4263 = vand.u32 %v4262, 4294901760
    %4264 = vmatmul.mubr.f32.gmra.mxu0 %v4263
    %v4265 = vpop.f32.mrf.mxu0
    %v4266 = vadd.f32 %v1583, %v4265
    %v4267 = vpop.f32.mrf.mxu0
    %4268 = vdwg.mxu0
    %4269 = vmatprep.subr.mxu0 0.0
    %v4270 = vand.u32 %v1481, 4294901760
    %v4271 = vsub.f32 %v1481, %v4270
    %v4272 = vand.u32 %v4271, 4294901760
    %v4273 = vsub.f32 %v4271, %v4272
    %v4274 = vand.u32 %v4273, 4294901760
    %4275 = vmatpush1.msra.mxu0 %v4274
    %4276 = vmatprep.subr.mxu0 0.0
    %v4277 = vand.u32 %v1476, 4294901760
    %v4278 = vsub.f32 %v1476, %v4277
    %v4279 = vand.u32 %v4278, 4294901760
    %v4280 = vsub.f32 %v4278, %v4279
    %v4281 = vand.u32 %v4280, 4294901760
    %4282 = vmatpush1.msra.mxu0 %v4281
    %4283 = vmatprep.subr.mxu0 0.0
    %v4284 = vand.u32 %v1471, 4294901760
    %v4285 = vsub.f32 %v1471, %v4284
    %v4286 = vand.u32 %v4285, 4294901760
    %v4287 = vsub.f32 %v4285, %v4286
    %v4288 = vand.u32 %v4287, 4294901760
    %4289 = vmatpush1.msra.mxu0 %v4288
    %4290 = vmatprep.subr.mxu0 0.0
    %v4291 = vand.u32 %v1466, 4294901760
    %v4292 = vsub.f32 %v1466, %v4291
    %v4293 = vand.u32 %v4292, 4294901760
    %v4294 = vsub.f32 %v4292, %v4293
    %v4295 = vand.u32 %v4294, 4294901760
    %4296 = vmatpush1.msra.mxu0 %v4295
    %4297 = vmatprep.subr.mxu0 0.0
    %v4298 = vand.u32 %v1461, 4294901760
    %v4299 = vsub.f32 %v1461, %v4298
    %v4300 = vand.u32 %v4299, 4294901760
    %v4301 = vsub.f32 %v4299, %v4300
    %v4302 = vand.u32 %v4301, 4294901760
    %4303 = vmatpush1.msra.mxu0 %v4302
    %4304 = vmatprep.subr.mxu0 0.0
    %v4305 = vand.u32 %v1456, 4294901760
    %v4306 = vsub.f32 %v1456, %v4305
    %v4307 = vand.u32 %v4306, 4294901760
    %v4308 = vsub.f32 %v4306, %v4307
    %v4309 = vand.u32 %v4308, 4294901760
    %4310 = vmatpush1.msra.mxu0 %v4309
    %4311 = vmatprep.subr.mxu0 0.0
    %v4312 = vand.u32 %v1451, 4294901760
    %v4313 = vsub.f32 %v1451, %v4312
    %v4314 = vand.u32 %v4313, 4294901760
    %v4315 = vsub.f32 %v4313, %v4314
    %v4316 = vand.u32 %v4315, 4294901760
    %4317 = vmatpush1.msra.mxu0 %v4316
    %4318 = vmatprep.subr.mxu0 0.0
    %v4319 = vand.u32 %v1446, 4294901760
    %v4320 = vsub.f32 %v1446, %v4319
    %v4321 = vand.u32 %v4320, 4294901760
    %v4322 = vsub.f32 %v4320, %v4321
    %v4323 = vand.u32 %v4322, 4294901760
    %4324 = vmatpush1.msra.mxu0 %v4323
    %4325 = vmatprep.subr.mxu0 0.0
    %v4326 = vand.u32 %v1441, 4294901760
    %v4327 = vsub.f32 %v1441, %v4326
    %v4328 = vand.u32 %v4327, 4294901760
    %v4329 = vsub.f32 %v4327, %v4328
    %v4330 = vand.u32 %v4329, 4294901760
    %4331 = vmatpush1.msra.mxu0 %v4330
    %4332 = vmatprep.subr.mxu0 0.0
    %v4333 = vand.u32 %v1436, 4294901760
    %v4334 = vsub.f32 %v1436, %v4333
    %v4335 = vand.u32 %v4334, 4294901760
    %v4336 = vsub.f32 %v4334, %v4335
    %v4337 = vand.u32 %v4336, 4294901760
    %4338 = vmatpush1.msra.mxu0 %v4337
    %4339 = vmatprep.subr.mxu0 0.0
    %v4340 = vand.u32 %v1431, 4294901760
    %v4341 = vsub.f32 %v1431, %v4340
    %v4342 = vand.u32 %v4341, 4294901760
    %v4343 = vsub.f32 %v4341, %v4342
    %v4344 = vand.u32 %v4343, 4294901760
    %4345 = vmatpush1.msra.mxu0 %v4344
    %4346 = vmatprep.subr.mxu0 0.0
    %v4347 = vand.u32 %v1426, 4294901760
    %v4348 = vsub.f32 %v1426, %v4347
    %v4349 = vand.u32 %v4348, 4294901760
    %v4350 = vsub.f32 %v4348, %v4349
    %v4351 = vand.u32 %v4350, 4294901760
    %4352 = vmatpush1.msra.mxu0 %v4351
    %4353 = vmatprep.subr.mxu0 0.0
    %v4354 = vand.u32 %v1421, 4294901760
    %v4355 = vsub.f32 %v1421, %v4354
    %v4356 = vand.u32 %v4355, 4294901760
    %v4357 = vsub.f32 %v4355, %v4356
    %v4358 = vand.u32 %v4357, 4294901760
    %4359 = vmatpush1.msra.mxu0 %v4358
    %4360 = vmatprep.subr.mxu0 0.0
    %v4361 = vand.u32 %v1416, 4294901760
    %v4362 = vsub.f32 %v1416, %v4361
    %v4363 = vand.u32 %v4362, 4294901760
    %v4364 = vsub.f32 %v4362, %v4363
    %v4365 = vand.u32 %v4364, 4294901760
    %4366 = vmatpush1.msra.mxu0 %v4365
    %4367 = vmatprep.subr.mxu0 0.0
    %v4368 = vand.u32 %v1411, 4294901760
    %v4369 = vsub.f32 %v1411, %v4368
    %v4370 = vand.u32 %v4369, 4294901760
    %v4371 = vsub.f32 %v4369, %v4370
    %v4372 = vand.u32 %v4371, 4294901760
    %4373 = vmatpush1.msra.mxu0 %v4372
    %4374 = vmatprep.subr.mxu0 0.0
    %v4375 = vand.u32 %v1406, 4294901760
    %v4376 = vsub.f32 %v1406, %v4375
    %v4377 = vand.u32 %v4376, 4294901760
    %v4378 = vsub.f32 %v4376, %v4377
    %v4379 = vand.u32 %v4378, 4294901760
    %4380 = vmatpush1.msra.mxu0 %v4379
    %4381 = vmatprep.subr.mxu0 0.0
    %v4382 = vand.u32 %v1561, 4294901760
    %v4383 = vsub.f32 %v1561, %v4382
    %v4384 = vand.u32 %v4383, 4294901760
    %v4385 = vsub.f32 %v4383, %v4384
    %v4386 = vand.u32 %v4385, 4294901760
    %4387 = vmatpush2.msra.mxu0 %v4386
    %4388 = vmatprep.subr.mxu0 0.0
    %v4389 = vand.u32 %v1556, 4294901760
    %v4390 = vsub.f32 %v1556, %v4389
    %v4391 = vand.u32 %v4390, 4294901760
    %v4392 = vsub.f32 %v4390, %v4391
    %v4393 = vand.u32 %v4392, 4294901760
    %4394 = vmatpush2.msra.mxu0 %v4393
    %4395 = vmatprep.subr.mxu0 0.0
    %v4396 = vand.u32 %v1551, 4294901760
    %v4397 = vsub.f32 %v1551, %v4396
    %v4398 = vand.u32 %v4397, 4294901760
    %v4399 = vsub.f32 %v4397, %v4398
    %v4400 = vand.u32 %v4399, 4294901760
    %4401 = vmatpush2.msra.mxu0 %v4400
    %4402 = vmatprep.subr.mxu0 0.0
    %v4403 = vand.u32 %v1546, 4294901760
    %v4404 = vsub.f32 %v1546, %v4403
    %v4405 = vand.u32 %v4404, 4294901760
    %v4406 = vsub.f32 %v4404, %v4405
    %v4407 = vand.u32 %v4406, 4294901760
    %4408 = vmatpush2.msra.mxu0 %v4407
    %4409 = vmatprep.subr.mxu0 0.0
    %v4410 = vand.u32 %v1541, 4294901760
    %v4411 = vsub.f32 %v1541, %v4410
    %v4412 = vand.u32 %v4411, 4294901760
    %v4413 = vsub.f32 %v4411, %v4412
    %v4414 = vand.u32 %v4413, 4294901760
    %4415 = vmatpush2.msra.mxu0 %v4414
    %4416 = vmatprep.subr.mxu0 0.0
    %v4417 = vand.u32 %v1536, 4294901760
    %v4418 = vsub.f32 %v1536, %v4417
    %v4419 = vand.u32 %v4418, 4294901760
    %v4420 = vsub.f32 %v4418, %v4419
    %v4421 = vand.u32 %v4420, 4294901760
    %4422 = vmatpush2.msra.mxu0 %v4421
    %4423 = vmatprep.subr.mxu0 0.0
    %v4424 = vand.u32 %v1531, 4294901760
    %v4425 = vsub.f32 %v1531, %v4424
    %v4426 = vand.u32 %v4425, 4294901760
    %v4427 = vsub.f32 %v4425, %v4426
    %v4428 = vand.u32 %v4427, 4294901760
    %4429 = vmatpush2.msra.mxu0 %v4428
    %4430 = vmatprep.subr.mxu0 0.0
    %v4431 = vand.u32 %v1526, 4294901760
    %v4432 = vsub.f32 %v1526, %v4431
    %v4433 = vand.u32 %v4432, 4294901760
    %v4434 = vsub.f32 %v4432, %v4433
    %v4435 = vand.u32 %v4434, 4294901760
    %4436 = vmatpush2.msra.mxu0 %v4435
    %4437 = vmatprep.subr.mxu0 0.0
    %v4438 = vand.u32 %v1521, 4294901760
    %v4439 = vsub.f32 %v1521, %v4438
    %v4440 = vand.u32 %v4439, 4294901760
    %v4441 = vsub.f32 %v4439, %v4440
    %v4442 = vand.u32 %v4441, 4294901760
    %4443 = vmatpush2.msra.mxu0 %v4442
    %4444 = vmatprep.subr.mxu0 0.0
    %v4445 = vand.u32 %v1516, 4294901760
    %v4446 = vsub.f32 %v1516, %v4445
    %v4447 = vand.u32 %v4446, 4294901760
    %v4448 = vsub.f32 %v4446, %v4447
    %v4449 = vand.u32 %v4448, 4294901760
    %4450 = vmatpush2.msra.mxu0 %v4449
    %4451 = vmatprep.subr.mxu0 0.0
    %v4452 = vand.u32 %v1511, 4294901760
    %v4453 = vsub.f32 %v1511, %v4452
    %v4454 = vand.u32 %v4453, 4294901760
    %v4455 = vsub.f32 %v4453, %v4454
    %v4456 = vand.u32 %v4455, 4294901760
    %4457 = vmatpush2.msra.mxu0 %v4456
    %4458 = vmatprep.subr.mxu0 0.0
    %v4459 = vand.u32 %v1506, 4294901760
    %v4460 = vsub.f32 %v1506, %v4459
    %v4461 = vand.u32 %v4460, 4294901760
    %v4462 = vsub.f32 %v4460, %v4461
    %v4463 = vand.u32 %v4462, 4294901760
    %4464 = vmatpush2.msra.mxu0 %v4463
    %4465 = vmatprep.subr.mxu0 0.0
    %v4466 = vand.u32 %v1501, 4294901760
    %v4467 = vsub.f32 %v1501, %v4466
    %v4468 = vand.u32 %v4467, 4294901760
    %v4469 = vsub.f32 %v4467, %v4468
    %v4470 = vand.u32 %v4469, 4294901760
    %4471 = vmatpush2.msra.mxu0 %v4470
    %4472 = vmatprep.subr.mxu0 0.0
    %v4473 = vand.u32 %v1496, 4294901760
    %v4474 = vsub.f32 %v1496, %v4473
    %v4475 = vand.u32 %v4474, 4294901760
    %v4476 = vsub.f32 %v4474, %v4475
    %v4477 = vand.u32 %v4476, 4294901760
    %4478 = vmatpush2.msra.mxu0 %v4477
    %4479 = vmatprep.subr.mxu0 0.0
    %v4480 = vand.u32 %v1491, 4294901760
    %v4481 = vsub.f32 %v1491, %v4480
    %v4482 = vand.u32 %v4481, 4294901760
    %v4483 = vsub.f32 %v4481, %v4482
    %v4484 = vand.u32 %v4483, 4294901760
    %4485 = vmatpush2.msra.mxu0 %v4484
    %4486 = vmatprep.subr.mxu0 0.0
    %v4487 = vand.u32 %v1486, 4294901760
    %v4488 = vsub.f32 %v1486, %v4487
    %v4489 = vand.u32 %v4488, 4294901760
    %v4490 = vsub.f32 %v4488, %v4489
    %v4491 = vand.u32 %v4490, 4294901760
    %4492 = vmatpush2.msra.mxu0 %v4491
    %v4493 = vand.u32 %v1401, 4294901760
    %4494 = vmatprep.mubr.f32.mxu0 %v4493
    %v4495 = vand.u32 %v1400, 4294901760
    %4496 = vmatmul.mubr.f32.gmra.mxu0 %v4495
    %v4497 = vpop.f32.mrf.mxu0
    %v4498 = vadd.f32 %v4266, %v4497
    %v4499 = vpop.f32.mrf.mxu0
    %4500 = vdwg.mxu0
    %4501 = vmatprep.subr.mxu0 0.0
    %v4502 = vand.u32 %v1481, 4294901760
    %v4503 = vsub.f32 %v1481, %v4502
    %4504 = vmatpush1.msra.mxu0 %v4503
    %4505 = vmatprep.subr.mxu0 0.0
    %v4506 = vand.u32 %v1476, 4294901760
    %v4507 = vsub.f32 %v1476, %v4506
    %4508 = vmatpush1.msra.mxu0 %v4507
    %4509 = vmatprep.subr.mxu0 0.0
    %v4510 = vand.u32 %v1471, 4294901760
    %v4511 = vsub.f32 %v1471, %v4510
    %4512 = vmatpush1.msra.mxu0 %v4511
    %4513 = vmatprep.subr.mxu0 0.0
    %v4514 = vand.u32 %v1466, 4294901760
    %v4515 = vsub.f32 %v1466, %v4514
    %4516 = vmatpush1.msra.mxu0 %v4515
    %4517 = vmatprep.subr.mxu0 0.0
    %v4518 = vand.u32 %v1461, 4294901760
    %v4519 = vsub.f32 %v1461, %v4518
    %4520 = vmatpush1.msra.mxu0 %v4519
    %4521 = vmatprep.subr.mxu0 0.0
    %v4522 = vand.u32 %v1456, 4294901760
    %v4523 = vsub.f32 %v1456, %v4522
    %4524 = vmatpush1.msra.mxu0 %v4523
    %4525 = vmatprep.subr.mxu0 0.0
    %v4526 = vand.u32 %v1451, 4294901760
    %v4527 = vsub.f32 %v1451, %v4526
    %4528 = vmatpush1.msra.mxu0 %v4527
    %4529 = vmatprep.subr.mxu0 0.0
    %v4530 = vand.u32 %v1446, 4294901760
    %v4531 = vsub.f32 %v1446, %v4530
    %4532 = vmatpush1.msra.mxu0 %v4531
    %4533 = vmatprep.subr.mxu0 0.0
    %v4534 = vand.u32 %v1441, 4294901760
    %v4535 = vsub.f32 %v1441, %v4534
    %4536 = vmatpush1.msra.mxu0 %v4535
    %4537 = vmatprep.subr.mxu0 0.0
    %v4538 = vand.u32 %v1436, 4294901760
    %v4539 = vsub.f32 %v1436, %v4538
    %4540 = vmatpush1.msra.mxu0 %v4539
    %4541 = vmatprep.subr.mxu0 0.0
    %v4542 = vand.u32 %v1431, 4294901760
    %v4543 = vsub.f32 %v1431, %v4542
    %4544 = vmatpush1.msra.mxu0 %v4543
    %4545 = vmatprep.subr.mxu0 0.0
    %v4546 = vand.u32 %v1426, 4294901760
    %v4547 = vsub.f32 %v1426, %v4546
    %4548 = vmatpush1.msra.mxu0 %v4547
    %4549 = vmatprep.subr.mxu0 0.0
    %v4550 = vand.u32 %v1421, 4294901760
    %v4551 = vsub.f32 %v1421, %v4550
    %4552 = vmatpush1.msra.mxu0 %v4551
    %4553 = vmatprep.subr.mxu0 0.0
    %v4554 = vand.u32 %v1416, 4294901760
    %v4555 = vsub.f32 %v1416, %v4554
    %4556 = vmatpush1.msra.mxu0 %v4555
    %4557 = vmatprep.subr.mxu0 0.0
    %v4558 = vand.u32 %v1411, 4294901760
    %v4559 = vsub.f32 %v1411, %v4558
    %4560 = vmatpush1.msra.mxu0 %v4559
    %4561 = vmatprep.subr.mxu0 0.0
    %v4562 = vand.u32 %v1406, 4294901760
    %v4563 = vsub.f32 %v1406, %v4562
    %4564 = vmatpush1.msra.mxu0 %v4563
    %4565 = vmatprep.subr.mxu0 0.0
    %v4566 = vand.u32 %v1561, 4294901760
    %v4567 = vsub.f32 %v1561, %v4566
    %4568 = vmatpush2.msra.mxu0 %v4567
    %4569 = vmatprep.subr.mxu0 0.0
    %v4570 = vand.u32 %v1556, 4294901760
    %v4571 = vsub.f32 %v1556, %v4570
    %4572 = vmatpush2.msra.mxu0 %v4571
    %4573 = vmatprep.subr.mxu0 0.0
    %v4574 = vand.u32 %v1551, 4294901760
    %v4575 = vsub.f32 %v1551, %v4574
    %4576 = vmatpush2.msra.mxu0 %v4575
    %4577 = vmatprep.subr.mxu0 0.0
    %v4578 = vand.u32 %v1546, 4294901760
    %v4579 = vsub.f32 %v1546, %v4578
    %4580 = vmatpush2.msra.mxu0 %v4579
    %4581 = vmatprep.subr.mxu0 0.0
    %v4582 = vand.u32 %v1541, 4294901760
    %v4583 = vsub.f32 %v1541, %v4582
    %4584 = vmatpush2.msra.mxu0 %v4583
    %4585 = vmatprep.subr.mxu0 0.0
    %v4586 = vand.u32 %v1536, 4294901760
    %v4587 = vsub.f32 %v1536, %v4586
    %4588 = vmatpush2.msra.mxu0 %v4587
    %4589 = vmatprep.subr.mxu0 0.0
    %v4590 = vand.u32 %v1531, 4294901760
    %v4591 = vsub.f32 %v1531, %v4590
    %4592 = vmatpush2.msra.mxu0 %v4591
    %4593 = vmatprep.subr.mxu0 0.0
    %v4594 = vand.u32 %v1526, 4294901760
    %v4595 = vsub.f32 %v1526, %v4594
    %4596 = vmatpush2.msra.mxu0 %v4595
    %4597 = vmatprep.subr.mxu0 0.0
    %v4598 = vand.u32 %v1521, 4294901760
    %v4599 = vsub.f32 %v1521, %v4598
    %4600 = vmatpush2.msra.mxu0 %v4599
    %4601 = vmatprep.subr.mxu0 0.0
    %v4602 = vand.u32 %v1516, 4294901760
    %v4603 = vsub.f32 %v1516, %v4602
    %4604 = vmatpush2.msra.mxu0 %v4603
    %4605 = vmatprep.subr.mxu0 0.0
    %v4606 = vand.u32 %v1511, 4294901760
    %v4607 = vsub.f32 %v1511, %v4606
    %4608 = vmatpush2.msra.mxu0 %v4607
    %4609 = vmatprep.subr.mxu0 0.0
    %v4610 = vand.u32 %v1506, 4294901760
    %v4611 = vsub.f32 %v1506, %v4610
    %4612 = vmatpush2.msra.mxu0 %v4611
    %4613 = vmatprep.subr.mxu0 0.0
    %v4614 = vand.u32 %v1501, 4294901760
    %v4615 = vsub.f32 %v1501, %v4614
    %4616 = vmatpush2.msra.mxu0 %v4615
    %4617 = vmatprep.subr.mxu0 0.0
    %v4618 = vand.u32 %v1496, 4294901760
    %v4619 = vsub.f32 %v1496, %v4618
    %4620 = vmatpush2.msra.mxu0 %v4619
    %4621 = vmatprep.subr.mxu0 0.0
    %v4622 = vand.u32 %v1491, 4294901760
    %v4623 = vsub.f32 %v1491, %v4622
    %4624 = vmatpush2.msra.mxu0 %v4623
    %4625 = vmatprep.subr.mxu0 0.0
    %v4626 = vand.u32 %v1486, 4294901760
    %v4627 = vsub.f32 %v1486, %v4626
    %4628 = vmatpush2.msra.mxu0 %v4627
    %v4629 = vand.u32 %v1401, 4294901760
    %v4630 = vsub.f32 %v1401, %v4629
    %4631 = vmatprep.mubr.f32.mxu0 %v4630
    %v4632 = vand.u32 %v1400, 4294901760
    %v4633 = vsub.f32 %v1400, %v4632
    %4634 = vmatmul.mubr.f32.gmra.mxu0 %v4633
    %v4635 = vpop.f32.mrf.mxu0
    %v4636 = vadd.f32 %v4498, %v4635
    %v4637 = vpop.f32.mrf.mxu0
    %4638 = vdwg.mxu0
    %4639 = vmatprep.subr.mxu0 0.0
    %v4640 = vand.u32 %v1481, 4294901760
    %4641 = vmatpush1.msra.mxu0 %v4640
    %4642 = vmatprep.subr.mxu0 0.0
    %v4643 = vand.u32 %v1476, 4294901760
    %4644 = vmatpush1.msra.mxu0 %v4643
    %4645 = vmatprep.subr.mxu0 0.0
    %v4646 = vand.u32 %v1471, 4294901760
    %4647 = vmatpush1.msra.mxu0 %v4646
    %4648 = vmatprep.subr.mxu0 0.0
    %v4649 = vand.u32 %v1466, 4294901760
    %4650 = vmatpush1.msra.mxu0 %v4649
    %4651 = vmatprep.subr.mxu0 0.0
    %v4652 = vand.u32 %v1461, 4294901760
    %4653 = vmatpush1.msra.mxu0 %v4652
    %4654 = vmatprep.subr.mxu0 0.0
    %v4655 = vand.u32 %v1456, 4294901760
    %4656 = vmatpush1.msra.mxu0 %v4655
    %4657 = vmatprep.subr.mxu0 0.0
    %v4658 = vand.u32 %v1451, 4294901760
    %4659 = vmatpush1.msra.mxu0 %v4658
    %4660 = vmatprep.subr.mxu0 0.0
    %v4661 = vand.u32 %v1446, 4294901760
    %4662 = vmatpush1.msra.mxu0 %v4661
    %4663 = vmatprep.subr.mxu0 0.0
    %v4664 = vand.u32 %v1441, 4294901760
    %4665 = vmatpush1.msra.mxu0 %v4664
    %4666 = vmatprep.subr.mxu0 0.0
    %v4667 = vand.u32 %v1436, 4294901760
    %4668 = vmatpush1.msra.mxu0 %v4667
    %4669 = vmatprep.subr.mxu0 0.0
    %v4670 = vand.u32 %v1431, 4294901760
    %4671 = vmatpush1.msra.mxu0 %v4670
    %4672 = vmatprep.subr.mxu0 0.0
    %v4673 = vand.u32 %v1426, 4294901760
    %4674 = vmatpush1.msra.mxu0 %v4673
    %4675 = vmatprep.subr.mxu0 0.0
    %v4676 = vand.u32 %v1421, 4294901760
    %4677 = vmatpush1.msra.mxu0 %v4676
    %4678 = vmatprep.subr.mxu0 0.0
    %v4679 = vand.u32 %v1416, 4294901760
    %4680 = vmatpush1.msra.mxu0 %v4679
    %4681 = vmatprep.subr.mxu0 0.0
    %v4682 = vand.u32 %v1411, 4294901760
    %4683 = vmatpush1.msra.mxu0 %v4682
    %4684 = vmatprep.subr.mxu0 0.0
    %v4685 = vand.u32 %v1406, 4294901760
    %4686 = vmatpush1.msra.mxu0 %v4685
    %4687 = vmatprep.subr.mxu0 0.0
    %v4688 = vand.u32 %v1561, 4294901760
    %4689 = vmatpush2.msra.mxu0 %v4688
    %4690 = vmatprep.subr.mxu0 0.0
    %v4691 = vand.u32 %v1556, 4294901760
    %4692 = vmatpush2.msra.mxu0 %v4691
    %4693 = vmatprep.subr.mxu0 0.0
    %v4694 = vand.u32 %v1551, 4294901760
    %4695 = vmatpush2.msra.mxu0 %v4694
    %4696 = vmatprep.subr.mxu0 0.0
    %v4697 = vand.u32 %v1546, 4294901760
    %4698 = vmatpush2.msra.mxu0 %v4697
    %4699 = vmatprep.subr.mxu0 0.0
    %v4700 = vand.u32 %v1541, 4294901760
    %4701 = vmatpush2.msra.mxu0 %v4700
    %4702 = vmatprep.subr.mxu0 0.0
    %v4703 = vand.u32 %v1536, 4294901760
    %4704 = vmatpush2.msra.mxu0 %v4703
    %4705 = vmatprep.subr.mxu0 0.0
    %v4706 = vand.u32 %v1531, 4294901760
    %4707 = vmatpush2.msra.mxu0 %v4706
    %4708 = vmatprep.subr.mxu0 0.0
    %v4709 = vand.u32 %v1526, 4294901760
    %4710 = vmatpush2.msra.mxu0 %v4709
    %4711 = vmatprep.subr.mxu0 0.0
    %v4712 = vand.u32 %v1521, 4294901760
    %4713 = vmatpush2.msra.mxu0 %v4712
    %4714 = vmatprep.subr.mxu0 0.0
    %v4715 = vand.u32 %v1516, 4294901760
    %4716 = vmatpush2.msra.mxu0 %v4715
    %4717 = vmatprep.subr.mxu0 0.0
    %v4718 = vand.u32 %v1511, 4294901760
    %4719 = vmatpush2.msra.mxu0 %v4718
    %4720 = vmatprep.subr.mxu0 0.0
    %v4721 = vand.u32 %v1506, 4294901760
    %4722 = vmatpush2.msra.mxu0 %v4721
    %4723 = vmatprep.subr.mxu0 0.0
    %v4724 = vand.u32 %v1501, 4294901760
    %4725 = vmatpush2.msra.mxu0 %v4724
    %4726 = vmatprep.subr.mxu0 0.0
    %v4727 = vand.u32 %v1496, 4294901760
    %4728 = vmatpush2.msra.mxu0 %v4727
    %4729 = vmatprep.subr.mxu0 0.0
    %v4730 = vand.u32 %v1491, 4294901760
    %4731 = vmatpush2.msra.mxu0 %v4730
    %4732 = vmatprep.subr.mxu0 0.0
    %v4733 = vand.u32 %v1486, 4294901760
    %4734 = vmatpush2.msra.mxu0 %v4733
    %v4735 = vand.u32 %v1401, 4294901760
    %v4736 = vsub.f32 %v1401, %v4735
    %v4737 = vand.u32 %v4736, 4294901760
    %4738 = vmatprep.mubr.f32.mxu0 %v4737
    %v4739 = vand.u32 %v1400, 4294901760
    %v4740 = vsub.f32 %v1400, %v4739
    %v4741 = vand.u32 %v4740, 4294901760
    %4742 = vmatmul.mubr.f32.gmra.mxu0 %v4741
    %v4743 = vpop.f32.mrf.mxu0
    %v4744 = vadd.f32 %v4636, %v4743
    %v4745 = vpop.f32.mrf.mxu0
    %4746 = vdwg.mxu0
    %4747 = vmatprep.subr.mxu0 0.0
    %v4748 = vand.u32 %v1481, 4294901760
    %v4749 = vsub.f32 %v1481, %v4748
    %v4750 = vand.u32 %v4749, 4294901760
    %4751 = vmatpush1.msra.mxu0 %v4750
    %4752 = vmatprep.subr.mxu0 0.0
    %v4753 = vand.u32 %v1476, 4294901760
    %v4754 = vsub.f32 %v1476, %v4753
    %v4755 = vand.u32 %v4754, 4294901760
    %4756 = vmatpush1.msra.mxu0 %v4755
    %4757 = vmatprep.subr.mxu0 0.0
    %v4758 = vand.u32 %v1471, 4294901760
    %v4759 = vsub.f32 %v1471, %v4758
    %v4760 = vand.u32 %v4759, 4294901760
    %4761 = vmatpush1.msra.mxu0 %v4760
    %4762 = vmatprep.subr.mxu0 0.0
    %v4763 = vand.u32 %v1466, 4294901760
    %v4764 = vsub.f32 %v1466, %v4763
    %v4765 = vand.u32 %v4764, 4294901760
    %4766 = vmatpush1.msra.mxu0 %v4765
    %4767 = vmatprep.subr.mxu0 0.0
    %v4768 = vand.u32 %v1461, 4294901760
    %v4769 = vsub.f32 %v1461, %v4768
    %v4770 = vand.u32 %v4769, 4294901760
    %4771 = vmatpush1.msra.mxu0 %v4770
    %4772 = vmatprep.subr.mxu0 0.0
    %v4773 = vand.u32 %v1456, 4294901760
    %v4774 = vsub.f32 %v1456, %v4773
    %v4775 = vand.u32 %v4774, 4294901760
    %4776 = vmatpush1.msra.mxu0 %v4775
    %4777 = vmatprep.subr.mxu0 0.0
    %v4778 = vand.u32 %v1451, 4294901760
    %v4779 = vsub.f32 %v1451, %v4778
    %v4780 = vand.u32 %v4779, 4294901760
    %4781 = vmatpush1.msra.mxu0 %v4780
    %4782 = vmatprep.subr.mxu0 0.0
    %v4783 = vand.u32 %v1446, 4294901760
    %v4784 = vsub.f32 %v1446, %v4783
    %v4785 = vand.u32 %v4784, 4294901760
    %4786 = vmatpush1.msra.mxu0 %v4785
    %4787 = vmatprep.subr.mxu0 0.0
    %v4788 = vand.u32 %v1441, 4294901760
    %v4789 = vsub.f32 %v1441, %v4788
    %v4790 = vand.u32 %v4789, 4294901760
    %4791 = vmatpush1.msra.mxu0 %v4790
    %4792 = vmatprep.subr.mxu0 0.0
    %v4793 = vand.u32 %v1436, 4294901760
    %v4794 = vsub.f32 %v1436, %v4793
    %v4795 = vand.u32 %v4794, 4294901760
    %4796 = vmatpush1.msra.mxu0 %v4795
    %4797 = vmatprep.subr.mxu0 0.0
    %v4798 = vand.u32 %v1431, 4294901760
    %v4799 = vsub.f32 %v1431, %v4798
    %v4800 = vand.u32 %v4799, 4294901760
    %4801 = vmatpush1.msra.mxu0 %v4800
    %4802 = vmatprep.subr.mxu0 0.0
    %v4803 = vand.u32 %v1426, 4294901760
    %v4804 = vsub.f32 %v1426, %v4803
    %v4805 = vand.u32 %v4804, 4294901760
    %4806 = vmatpush1.msra.mxu0 %v4805
    %4807 = vmatprep.subr.mxu0 0.0
    %v4808 = vand.u32 %v1421, 4294901760
    %v4809 = vsub.f32 %v1421, %v4808
    %v4810 = vand.u32 %v4809, 4294901760
    %4811 = vmatpush1.msra.mxu0 %v4810
    %4812 = vmatprep.subr.mxu0 0.0
    %v4813 = vand.u32 %v1416, 4294901760
    %v4814 = vsub.f32 %v1416, %v4813
    %v4815 = vand.u32 %v4814, 4294901760
    %4816 = vmatpush1.msra.mxu0 %v4815
    %4817 = vmatprep.subr.mxu0 0.0
    %v4818 = vand.u32 %v1411, 4294901760
    %v4819 = vsub.f32 %v1411, %v4818
    %v4820 = vand.u32 %v4819, 4294901760
    %4821 = vmatpush1.msra.mxu0 %v4820
    %4822 = vmatprep.subr.mxu0 0.0
    %v4823 = vand.u32 %v1406, 4294901760
    %v4824 = vsub.f32 %v1406, %v4823
    %v4825 = vand.u32 %v4824, 4294901760
    %4826 = vmatpush1.msra.mxu0 %v4825
    %4827 = vmatprep.subr.mxu0 0.0
    %v4828 = vand.u32 %v1561, 4294901760
    %v4829 = vsub.f32 %v1561, %v4828
    %v4830 = vand.u32 %v4829, 4294901760
    %4831 = vmatpush2.msra.mxu0 %v4830
    %4832 = vmatprep.subr.mxu0 0.0
    %v4833 = vand.u32 %v1556, 4294901760
    %v4834 = vsub.f32 %v1556, %v4833
    %v4835 = vand.u32 %v4834, 4294901760
    %4836 = vmatpush2.msra.mxu0 %v4835
    %4837 = vmatprep.subr.mxu0 0.0
    %v4838 = vand.u32 %v1551, 4294901760
    %v4839 = vsub.f32 %v1551, %v4838
    %v4840 = vand.u32 %v4839, 4294901760
    %4841 = vmatpush2.msra.mxu0 %v4840
    %4842 = vmatprep.subr.mxu0 0.0
    %v4843 = vand.u32 %v1546, 4294901760
    %v4844 = vsub.f32 %v1546, %v4843
    %v4845 = vand.u32 %v4844, 4294901760
    %4846 = vmatpush2.msra.mxu0 %v4845
    %4847 = vmatprep.subr.mxu0 0.0
    %v4848 = vand.u32 %v1541, 4294901760
    %v4849 = vsub.f32 %v1541, %v4848
    %v4850 = vand.u32 %v4849, 4294901760
    %4851 = vmatpush2.msra.mxu0 %v4850
    %4852 = vmatprep.subr.mxu0 0.0
    %v4853 = vand.u32 %v1536, 4294901760
    %v4854 = vsub.f32 %v1536, %v4853
    %v4855 = vand.u32 %v4854, 4294901760
    %4856 = vmatpush2.msra.mxu0 %v4855
    %4857 = vmatprep.subr.mxu0 0.0
    %v4858 = vand.u32 %v1531, 4294901760
    %v4859 = vsub.f32 %v1531, %v4858
    %v4860 = vand.u32 %v4859, 4294901760
    %4861 = vmatpush2.msra.mxu0 %v4860
    %4862 = vmatprep.subr.mxu0 0.0
    %v4863 = vand.u32 %v1526, 4294901760
    %v4864 = vsub.f32 %v1526, %v4863
    %v4865 = vand.u32 %v4864, 4294901760
    %4866 = vmatpush2.msra.mxu0 %v4865
    %4867 = vmatprep.subr.mxu0 0.0
    %v4868 = vand.u32 %v1521, 4294901760
    %v4869 = vsub.f32 %v1521, %v4868
    %v4870 = vand.u32 %v4869, 4294901760
    %4871 = vmatpush2.msra.mxu0 %v4870
    %4872 = vmatprep.subr.mxu0 0.0
    %v4873 = vand.u32 %v1516, 4294901760
    %v4874 = vsub.f32 %v1516, %v4873
    %v4875 = vand.u32 %v4874, 4294901760
    %4876 = vmatpush2.msra.mxu0 %v4875
    %4877 = vmatprep.subr.mxu0 0.0
    %v4878 = vand.u32 %v1511, 4294901760
    %v4879 = vsub.f32 %v1511, %v4878
    %v4880 = vand.u32 %v4879, 4294901760
    %4881 = vmatpush2.msra.mxu0 %v4880
    %4882 = vmatprep.subr.mxu0 0.0
    %v4883 = vand.u32 %v1506, 4294901760
    %v4884 = vsub.f32 %v1506, %v4883
    %v4885 = vand.u32 %v4884, 4294901760
    %4886 = vmatpush2.msra.mxu0 %v4885
    %4887 = vmatprep.subr.mxu0 0.0
    %v4888 = vand.u32 %v1501, 4294901760
    %v4889 = vsub.f32 %v1501, %v4888
    %v4890 = vand.u32 %v4889, 4294901760
    %4891 = vmatpush2.msra.mxu0 %v4890
    %4892 = vmatprep.subr.mxu0 0.0
    %v4893 = vand.u32 %v1496, 4294901760
    %v4894 = vsub.f32 %v1496, %v4893
    %v4895 = vand.u32 %v4894, 4294901760
    %4896 = vmatpush2.msra.mxu0 %v4895
    %4897 = vmatprep.subr.mxu0 0.0
    %v4898 = vand.u32 %v1491, 4294901760
    %v4899 = vsub.f32 %v1491, %v4898
    %v4900 = vand.u32 %v4899, 4294901760
    %4901 = vmatpush2.msra.mxu0 %v4900
    %4902 = vmatprep.subr.mxu0 0.0
    %v4903 = vand.u32 %v1486, 4294901760
    %v4904 = vsub.f32 %v1486, %v4903
    %v4905 = vand.u32 %v4904, 4294901760
    %4906 = vmatpush2.msra.mxu0 %v4905
    %v4907 = vand.u32 %v1401, 4294901760
    %4908 = vmatprep.mubr.f32.mxu0 %v4907
    %v4909 = vand.u32 %v1400, 4294901760
    %4910 = vmatmul.mubr.f32.gmra.mxu0 %v4909
    %v4911 = vpop.f32.mrf.mxu0
    %v4912 = vadd.f32 %v4744, %v4911
    %v4913 = vpop.f32.mrf.mxu0
    %4914 = vdwg.mxu0
    %4915 = vmatprep.subr.mxu0 0.0
    %v4916 = vand.u32 %v1481, 4294901760
    %4917 = vmatpush1.msra.mxu0 %v4916
    %4918 = vmatprep.subr.mxu0 0.0
    %v4919 = vand.u32 %v1476, 4294901760
    %4920 = vmatpush1.msra.mxu0 %v4919
    %4921 = vmatprep.subr.mxu0 0.0
    %v4922 = vand.u32 %v1471, 4294901760
    %4923 = vmatpush1.msra.mxu0 %v4922
    %4924 = vmatprep.subr.mxu0 0.0
    %v4925 = vand.u32 %v1466, 4294901760
    %4926 = vmatpush1.msra.mxu0 %v4925
    %4927 = vmatprep.subr.mxu0 0.0
    %v4928 = vand.u32 %v1461, 4294901760
    %4929 = vmatpush1.msra.mxu0 %v4928
    %4930 = vmatprep.subr.mxu0 0.0
    %v4931 = vand.u32 %v1456, 4294901760
    %4932 = vmatpush1.msra.mxu0 %v4931
    %4933 = vmatprep.subr.mxu0 0.0
    %v4934 = vand.u32 %v1451, 4294901760
    %4935 = vmatpush1.msra.mxu0 %v4934
    %4936 = vmatprep.subr.mxu0 0.0
    %v4937 = vand.u32 %v1446, 4294901760
    %4938 = vmatpush1.msra.mxu0 %v4937
    %4939 = vmatprep.subr.mxu0 0.0
    %v4940 = vand.u32 %v1441, 4294901760
    %4941 = vmatpush1.msra.mxu0 %v4940
    %4942 = vmatprep.subr.mxu0 0.0
    %v4943 = vand.u32 %v1436, 4294901760
    %4944 = vmatpush1.msra.mxu0 %v4943
    %4945 = vmatprep.subr.mxu0 0.0
    %v4946 = vand.u32 %v1431, 4294901760
    %4947 = vmatpush1.msra.mxu0 %v4946
    %4948 = vmatprep.subr.mxu0 0.0
    %v4949 = vand.u32 %v1426, 4294901760
    %4950 = vmatpush1.msra.mxu0 %v4949
    %4951 = vmatprep.subr.mxu0 0.0
    %v4952 = vand.u32 %v1421, 4294901760
    %4953 = vmatpush1.msra.mxu0 %v4952
    %4954 = vmatprep.subr.mxu0 0.0
    %v4955 = vand.u32 %v1416, 4294901760
    %4956 = vmatpush1.msra.mxu0 %v4955
    %4957 = vmatprep.subr.mxu0 0.0
    %v4958 = vand.u32 %v1411, 4294901760
    %4959 = vmatpush1.msra.mxu0 %v4958
    %4960 = vmatprep.subr.mxu0 0.0
    %v4961 = vand.u32 %v1406, 4294901760
    %4962 = vmatpush1.msra.mxu0 %v4961
    %4963 = vmatprep.subr.mxu0 0.0
    %v4964 = vand.u32 %v1561, 4294901760
    %4965 = vmatpush2.msra.mxu0 %v4964
    %4966 = vmatprep.subr.mxu0 0.0
    %v4967 = vand.u32 %v1556, 4294901760
    %4968 = vmatpush2.msra.mxu0 %v4967
    %4969 = vmatprep.subr.mxu0 0.0
    %v4970 = vand.u32 %v1551, 4294901760
    %4971 = vmatpush2.msra.mxu0 %v4970
    %4972 = vmatprep.subr.mxu0 0.0
    %v4973 = vand.u32 %v1546, 4294901760
    %4974 = vmatpush2.msra.mxu0 %v4973
    %4975 = vmatprep.subr.mxu0 0.0
    %v4976 = vand.u32 %v1541, 4294901760
    %4977 = vmatpush2.msra.mxu0 %v4976
    %4978 = vmatprep.subr.mxu0 0.0
    %v4979 = vand.u32 %v1536, 4294901760
    %4980 = vmatpush2.msra.mxu0 %v4979
    %4981 = vmatprep.subr.mxu0 0.0
    %v4982 = vand.u32 %v1531, 4294901760
    %4983 = vmatpush2.msra.mxu0 %v4982
    %4984 = vmatprep.subr.mxu0 0.0
    %v4985 = vand.u32 %v1526, 4294901760
    %4986 = vmatpush2.msra.mxu0 %v4985
    %4987 = vmatprep.subr.mxu0 0.0
    %v4988 = vand.u32 %v1521, 4294901760
    %4989 = vmatpush2.msra.mxu0 %v4988
    %4990 = vmatprep.subr.mxu0 0.0
    %v4991 = vand.u32 %v1516, 4294901760
    %4992 = vmatpush2.msra.mxu0 %v4991
    %4993 = vmatprep.subr.mxu0 0.0
    %v4994 = vand.u32 %v1511, 4294901760
    %4995 = vmatpush2.msra.mxu0 %v4994
    %4996 = vmatprep.subr.mxu0 0.0
    %v4997 = vand.u32 %v1506, 4294901760
    %4998 = vmatpush2.msra.mxu0 %v4997
    %4999 = vmatprep.subr.mxu0 0.0
    %v5000 = vand.u32 %v1501, 4294901760
    %5001 = vmatpush2.msra.mxu0 %v5000
    %5002 = vmatprep.subr.mxu0 0.0
    %v5003 = vand.u32 %v1496, 4294901760
    %5004 = vmatpush2.msra.mxu0 %v5003
    %5005 = vmatprep.subr.mxu0 0.0
    %v5006 = vand.u32 %v1491, 4294901760
    %5007 = vmatpush2.msra.mxu0 %v5006
    %5008 = vmatprep.subr.mxu0 0.0
    %v5009 = vand.u32 %v1486, 4294901760
    %5010 = vmatpush2.msra.mxu0 %v5009
    %v5011 = vand.u32 %v1401, 4294901760
    %5012 = vmatprep.mubr.f32.mxu0 %v5011
    %v5013 = vand.u32 %v1400, 4294901760
    %5014 = vmatmul.mubr.f32.gmra.mxu0 %v5013
    %v5015 = vpop.f32.mrf.mxu0
    %v5016 = vadd.f32 %v4912, %v5015
    %v5017 = vpop.f32.mrf.mxu0
    %5018 = vdwg.mxu0
    %v5019 = vtanh.pop %v2869
    %v5020 = vtanh.pop %v2871
    %v5021 = vtanh.pop %v4153
    %v5022 = vtanh.pop %v4155
    %v5023 = vtanh.pop %v5016
    %v5029 = vcombine.low %v5019, %v5020
    %v5030 = vcombine.low %v5021, %v5022
    %v5032 = vunpack.c.l.s4 1983009808
    %v5033 = vunpack.c.0.s8 %v5032
    %v5034 = vlaneseq
    %v5035 = vshrl.u32 %v5034, 7
    %v5036 = vsub.s32 %v5033, %v5035
    %v5037 = vrot.slane %v5029, %v5036
    %v5039 = vunpack.c.l.s4 1983009808
    %v5040 = vunpack.c.0.s8 %v5039
    %v5041 = vlaneseq
    %v5042 = vshrl.u32 %v5041, 7
    %v5043 = vsub.s32 %v5040, %v5042
    %v5044 = vrot.slane %v5030, %v5043
    %v5045 = vcombine.low %v5037, %v5044
    %v5047 = vunpack.c.l.s4 1983009808
    %v5048 = vunpack.c.0.s8 %v5047
    %v5049 = vlaneseq
    %v5050 = vshrl.u32 %v5049, 7
    %v5051 = vsub.s32 %v5048, %v5050
    %v5052 = vrot.slane %v5023, %v5051
    %5055 = vst [vmem:[#allocation2] sm:$0xff] %v5045
    %vm5056 = vcmask 254976
    %5057 = vst.msk [vmem:[#allocation2 + $0x8] sm:$0x3] %vm5056, %v5052
    // Predicated region
    $region30: #{tpu_custom_call.1} parent=1 // pred_check
      _
    $region31: #{tpu_custom_call.1} parent=1 // pred_check_branch
      %5059 = sbr.rel (0) target = $region33
    $region32: #{tpu_custom_call.1} parent=1 // pred_region
      %s5061 = ssub.s32 160, 160
      %5062 = vsyncadd [#allocation3], %s5061
      %s5064 = sshll.u32 [#allocation2], 4
      %s5065 = int_to_ptr.vmem [resolvable:$true] %s5064
      %5067 = dma.vmem_to_hbm [thread:$0]  %s5065, 160, %s7, [#allocation3]
    $region33: #{tpu_custom_call.1} parent=1 // pred_fallthru
      _
    // Predicated region
    $region34: #{tpu_custom_call.1} parent=1 // pred_check
      _
    $region35: #{tpu_custom_call.1} parent=1 // pred_check_branch
      %5069 = sbr.rel (0) target = $region37
    $region36: #{tpu_custom_call.1} parent=1 // pred_region
      %5070 = dma.done [#allocation3], 160
    $region37: #{tpu_custom_call.1} parent=1 // pred_fallthru
      _
    %5071 = vsyncpa [#allocation3], 1

</llo_original>
